<compile_context>
chip_gen: v7x
topology: tpu7x:2x2x1
jax: 0.10.0
libtpu: 0.0.40
codegen_flags: <defaults>
</compile_context>

<pallas_src>
import functools
import math

import jax
import jax.numpy as jnp
from jax.experimental import pallas as pl
from jax.experimental.pallas import tpu as pltpu


# ----------------------------- helpers -----------------------------

_INV_SQRT2 = 1.0 / math.sqrt(2.0)
_LN_EPS = 1e-5                      # PyTorch LayerNorm default

# MXU-aligned tile candidates (multiples of 256 preferred, 128 fallback,
# full-dim fallback for tiny/awkward dims).
_TN_CANDS = (512, 256, 128)
_TK_CANDS = (512, 256, 128)
_ROW_TILE = 512


def _round_up(x, m):
    return ((x + m - 1) // m) * m


def _pick(dim, candidates):
    for c in candidates:
        if dim % c == 0:
            return c
    return dim                      # tiny / awkward dim -> single full block


def _row_tile(m, target=_ROW_TILE):
    """Row (M) tile size; partial last block handled via pl.cdiv grids."""
    return target if m > target else m


def _gelu(x):
    # exact (erf-based) GELU, matching nn.GELU() default
    return 0.5 * x * (1.0 + jax.lax.erf(x * _INV_SQRT2))


# ----------------------------- Pallas kernels -----------------------------

def _make_mm_kernel(*, activation, has_bias, has_residual):
    """K-tiled matmul kernel: x @ w [+ b] [gelu] [+ residual], fp32 acc."""

    def kernel(*refs):
        refs = list(refs)
        x_ref = refs.pop(0)
        w_ref = refs.pop(0)
        b_ref = refs.pop(0) if has_bias else None
        r_ref = refs.pop(0) if has_residual else None
        o_ref = refs.pop(0)
        acc_ref = refs.pop(0)

        k = pl.program_id(2)

        @pl.when(k == 0)
        def _():
            acc_ref[...] = jnp.zeros_like(acc_ref)

        # bf16 x bf16 -> fp32 on the MXU
        acc_ref[...] += jnp.dot(x_ref[...], w_ref[...],
                                preferred_element_type=jnp.float32)

        @pl.when(k == pl.num_programs(2) - 1)
        def _():
            y = acc_ref[...]
            if has_bias:
                y = y + b_ref[...].astype(jnp.float32)
            if activation == "gelu":
                y = _gelu(y)
            if has_residual:
                y = y + r_ref[...].astype(jnp.float32)
            o_ref[...] = y.astype(o_ref.dtype)

    return kernel


def _make_ln_mm_kernel(*, activation, has_bias):
    """Fused LayerNorm(x) @ w [+ b] [gelu]; LN hoisted out of the j loop into
    a bf16 VMEM scratch (K kept un-tiled so LN sees the full feature dim)."""

    def kernel(x_ref, g_ref, beta_ref, w_ref, *rest):
        rest = list(rest)
        b_ref = rest.pop(0) if has_bias else None
        o_ref = rest.pop(0)
        xn_ref = rest.pop(0)

        j = pl.program_id(1)

        @pl.when(j == 0)
        def _():
            x = x_ref[...].astype(jnp.float32)
            mu = jnp.mean(x, axis=-1, keepdims=True)
            var = jnp.mean(jnp.square(x - mu), axis=-1, keepdims=True)
            xn = (x - mu) * jax.lax.rsqrt(var + _LN_EPS)
            xn = (xn * g_ref[...].astype(jnp.float32)
                  + beta_ref[...].astype(jnp.float32))
            xn_ref[...] = xn.astype(xn_ref.dtype)     # bf16 for the MXU

        y = jnp.dot(xn_ref[...], w_ref[...], preferred_element_type=jnp.float32)
        if has_bias:
            y = y + b_ref[...].astype(jnp.float32)
        if activation == "gelu":
            y = _gelu(y)
        o_ref[...] = y.astype(o_ref.dtype)

    return kernel


def _layernorm_kernel(x_ref, g_ref, b_ref, o_ref):
    x = x_ref[...].astype(jnp.float32)
    mu = jnp.mean(x, axis=-1, keepdims=True)
    var = jnp.mean(jnp.square(x - mu), axis=-1, keepdims=True)
    y = (x - mu) * jax.lax.rsqrt(var + _LN_EPS)
    o_ref[...] = (y * g_ref[...].astype(jnp.float32)
                  + b_ref[...].astype(jnp.float32)).astype(o_ref.dtype)


def _flash_attn_kernel(q_ref, kv_ref, o_ref, m_ref, l_ref, acc_ref,
                       *, num_heads, head_dim, scale):
    """Flash-style attention: online softmax over KV tiles (grid axis 2),
    heads looped in-kernel with per-head writes into the fp32 accumulator.
    Attention probabilities are never materialized (with_attention=False)."""
    ki = pl.program_id(2)

    @pl.when(ki == 0)
    def _():
        m_ref[...] = jnp.full(m_ref.shape, -jnp.inf, m_ref.dtype)
        l_ref[...] = jnp.zeros(l_ref.shape, l_ref.dtype)
        acc_ref[...] = jnp.zeros(acc_ref.shape, acc_ref.dtype)

    q = q_ref[0]                          # (tq, D)   bf16
    kv = kv_ref[0]                        # (tkv, 2D) bf16
    d = num_heads * head_dim
    dn = (((1,), (1,)), ((), ()))         # contract last dims -> q @ k^T

    for h in range(num_heads):
        sl = slice(h * head_dim, (h + 1) * head_dim)
        qh = q[:, sl]
        kh = kv[:, sl]
        vh = kv[:, d + h * head_dim: d + (h + 1) * head_dim]

        s = jax.lax.dot_general(qh, kh, dn,
                                preferred_element_type=jnp.float32) * scale
        m_prev = m_ref[h]
        l_prev = l_ref[h]
        m_new = jnp.maximum(m_prev, jnp.max(s, axis=-1, keepdims=True))
        alpha = jnp.exp(m_prev - m_new)
        p = jnp.exp(s - m_new)
        l_ref[h] = alpha * l_prev + jnp.sum(p, axis=-1, keepdims=True)
        acc_ref[:, sl] = alpha * acc_ref[:, sl] + jnp.dot(
            p.astype(kv.dtype), vh, preferred_element_type=jnp.float32)
        m_ref[h] = m_new

    @pl.when(ki == pl.num_programs(2) - 1)
    def _():
        for h in range(num_heads):
            sl = slice(h * head_dim, (h + 1) * head_dim)
            o_ref[0, :, sl] = (acc_ref[:, sl] / l_ref[h]).astype(o_ref.dtype)


# ----------------------------- kernel wrappers -----------------------------

def matmul(x2, w, b=None, *, residual=None, activation=None, out_dtype=None):
    """Tiled (M, K) @ (K, N) [+ b] [gelu] [+ residual] with fp32 accumulation."""
    m, k_dim = x2.shape
    _, n_out = w.shape
    out_dtype = x2.dtype if out_dtype is None else out_dtype
    tm = _row_tile(m)
    tn = _pick(n_out, _TN_CANDS)
    tk = _pick(k_dim, _TK_CANDS)

    in_specs = [
        pl.BlockSpec((tm, tk), lambda i, j, k: (i, k)),
        pl.BlockSpec((tk, tn), lambda i, j, k: (k, j)),
    ]
    inputs = [x2, w]
    if b is not None:
        in_specs.append(pl.BlockSpec((1, tn), lambda i, j, k: (0, j)))
        inputs.append(b.reshape(1, n_out))
    if residual is not None:
        # index independent of k -> DMA'd once per output tile (revisit cache)
        in_specs.append(pl.BlockSpec((tm, tn), lambda i, j, k: (i, j)))
        inputs.append(residual)

    kernel = _make_mm_kernel(activation=activation, has_bias=b is not None,
                             has_residual=residual is not None)
    return pl.pallas_call(
        kernel,
        grid=(pl.cdiv(m, tm), n_out // tn, k_dim // tk),
        in_specs=in_specs,
        out_specs=pl.BlockSpec((tm, tn), lambda i, j, k: (i, j)),
        out_shape=jax.ShapeDtypeStruct((m, n_out), out_dtype),
        scratch_shapes=[pltpu.VMEM((tm, tn), jnp.float32)],
        compiler_params=pltpu.CompilerParams(
            dimension_semantics=("parallel", "parallel", "arbitrary")),
    )(*inputs)


def ln_matmul(x2, g, beta, w, b=None, *, activation=None, out_dtype=None):
    """Fused LayerNorm + matmul [+ bias] [gelu]; normalized rows cached in a
    bf16 VMEM scratch and reused across output-column tiles."""
    m, k_dim = x2.shape
    _, n_out = w.shape
    out_dtype = x2.dtype if out_dtype is None else out_dtype
    tm = _row_tile(m)
    tn = _pick(n_out, _TN_CANDS)

    in_specs = [
        pl.BlockSpec((tm, k_dim), lambda i, j: (i, 0)),
        pl.BlockSpec((1, k_dim), lambda i, j: (0, 0)),
        pl.BlockSpec((1, k_dim), lambda i, j: (0, 0)),
        pl.BlockSpec((k_dim, tn), lambda i, j: (0, j)),
    ]
    inputs = [x2, g.reshape(1, k_dim), beta.reshape(1, k_dim), w]
    if b is not None:
        in_specs.append(pl.BlockSpec((1, tn), lambda i, j: (0, j)))
        inputs.append(b.reshape(1, n_out))

    kernel = _make_ln_mm_kernel(activation=activation, has_bias=b is not None)
    return pl.pallas_call(
        kernel,
        grid=(pl.cdiv(m, tm), n_out // tn),
        in_specs=in_specs,
        out_specs=pl.BlockSpec((tm, tn), lambda i, j: (i, j)),
        out_shape=jax.ShapeDtypeStruct((m, n_out), out_dtype),
        scratch_shapes=[pltpu.VMEM((tm, k_dim), jnp.bfloat16)],
        # j kept "arbitrary" so the j==0 LN hoist always runs first per row tile
        compiler_params=pltpu.CompilerParams(
            dimension_semantics=("parallel", "arbitrary")),
    )(*inputs)


def layernorm(x2, g, b):
    """Row-tiled LayerNorm over (M, D)."""
    m, d = x2.shape
    tm = _row_tile(m)
    return pl.pallas_call(
        _layernorm_kernel,
        grid=(pl.cdiv(m, tm),),
        in_specs=[pl.BlockSpec((tm, d), lambda i: (i, 0)),
                  pl.BlockSpec((1, d), lambda i: (0, 0)),
                  pl.BlockSpec((1, d), lambda i: (0, 0))],
        out_specs=pl.BlockSpec((tm, d), lambda i: (i, 0)),
        out_shape=jax.ShapeDtypeStruct((m, d), x2.dtype),
        compiler_params=pltpu.CompilerParams(dimension_semantics=("parallel",)),
    )(x2, g.reshape(1, d), b.reshape(1, d))


def attention(q, kv, num_heads):
    """q: (B, N, D), kv: (B, N, 2D) packed [k | v]; returns context (B, N, D)."""
    b, n, d = q.shape
    dh = d // num_heads
    tq = _row_tile(n, target=256)
    tkv = _pick(n, (512, 256, 128))
    # TODO(synk): add an explicit key-padding mask so tkv need not divide N at
    # production sequence lengths (currently falls back to a single full-N KV
    # block when no aligned divisor exists).
    kern = functools.partial(_flash_attn_kernel, num_heads=num_heads,
                             head_dim=dh, scale=1.0 / math.sqrt(dh))
    return pl.pallas_call(
        kern,
        grid=(b, pl.cdiv(n, tq), n // tkv),
        in_specs=[pl.BlockSpec((1, tq, d), lambda bi, qi, ki: (bi, qi, 0)),
                  pl.BlockSpec((1, tkv, 2 * d), lambda bi, qi, ki: (bi, ki, 0))],
        out_specs=pl.BlockSpec((1, tq, d), lambda bi, qi, ki: (bi, qi, 0)),
        out_shape=jax.ShapeDtypeStruct((b, n, d), q.dtype),
        scratch_shapes=[pltpu.VMEM((num_heads, tq, 1), jnp.float32),   # running max
                        pltpu.VMEM((num_heads, tq, 1), jnp.float32),   # running sum
                        pltpu.VMEM((tq, d), jnp.float32)],             # output acc
        compiler_params=pltpu.CompilerParams(
            dimension_semantics=("parallel", "parallel", "arbitrary")),
    )(q, kv)


# ----------------------------- model pieces -----------------------------

def transformer_block(x2, p, cfg, b, n):
    d = cfg["hidden"]
    h = cfg["num_heads"]

    # --- attention sub-block (pre-LN); LN1 fused into Q / KV matmuls, no qkv bias ---
    q = ln_matmul(x2, p["ln1_g"], p["ln1_b"], p["q_w"])              # (B*N, D)
    kv = ln_matmul(x2, p["ln1_g"], p["ln1_b"], p["kv_w"])            # (B*N, 2D)
    o = attention(q.reshape(b, n, d), kv.reshape(b, n, 2 * d), h)
    x2 = matmul(o.reshape(b * n, d), p["proj_w"], p["proj_b"],
                residual=x2)                                         # proj + residual

    # --- MLP sub-block (pre-LN); LN2 + fc1 + GELU fused, fc2 + residual fused ---
    hid = ln_matmul(x2, p["ln2_g"], p["ln2_b"], p["fc1_w"], p["fc1_b"],
                    activation="gelu")
    x2 = matmul(hid, p["fc2_w"], p["fc2_b"], residual=x2)
    return x2


def vivit_backbone(params, x, cfg):
    """VisionTransformerWithoutHead equivalent.  Attention weights are not
    materialized: ViViT.forward with with_attention=False discards them."""
    b, c, t, h_img, w_img = x.shape
    pt, ph, pw = cfg["patch_size"]
    d = cfg["hidden"]
    tn, hn, wn = t // pt, h_img // ph, w_img // pw

    # Tubelet embedding (Conv3d, kernel==stride) as bf16 im2col + Pallas matmul.
    xb = x.astype(jnp.bfloat16)
    xr = xb.reshape(b, c, tn, pt, hn, ph, wn, pw)
    xr = xr.transpose(0, 2, 4, 6, 1, 3, 5, 7)          # (B, Tn, Hn, Wn, C, pt, ph, pw)
    cols = xr.reshape(b * tn * hn * wn, c * pt * ph * pw)
    tok = matmul(cols, params["patch_embed_w"], params["patch_embed_b"])
    tok = tok.reshape(b, tn * hn * wn, d)

    # Prepend cls token(s), add positional embedding (dropout p=0 -> no-op).
    cls = jnp.broadcast_to(params["cls_token"], (b, cfg["num_cls_tokens"], d))
    seq = jnp.concatenate([cls, tok], axis=1) + params["pos_embed"]

    b_, n_, _ = seq.shape
    x2 = seq.reshape(b_ * n_, d)
    for blk in params["blocks"]:
        x2 = transformer_block(x2, blk, cfg, b_, n_)

    x2 = layernorm(x2, params["final_ln_g"], params["final_ln_b"])
    return x2.reshape(b_, n_, d)


def vivit_forward(params, x, cfg):
    """ViViT.forward with logit_mode='default', with_attention=False."""
    seq = vivit_backbone(params, x, cfg)
    cls_tok = seq[:, : cfg["num_cls_tokens"], :].reshape(-1, cfg["hidden"])
    # cls_head = LayerNorm + Linear, fused in one kernel; weight columns are
    # padded to a 128-lane-dense tile and sliced back afterwards.
    y = ln_matmul(cls_tok, params["cls_head_ln_g"], params["cls_head_ln_b"],
                  params["cls_head_w"], params["cls_head_b"],
                  out_dtype=jnp.float32)
    y = y[:, : cfg["num_out_frames"]]
    logits = y.reshape(x.shape[0], cfg["num_cls_tokens"],
                       cfg["num_out_frames"])[:, 0]   # squeeze(1)
    return logits


# ----------------------------- parameters -----------------------------

def init_params(key, cfg):
    """PyTorch-layout fp32 parameters (packed qkv weight, Conv3d weight, ...)."""
    c = cfg["in_channels"]
    d = cfg["hidden"]
    inter = cfg["intermediate"]
    pt, ph, pw = cfg["patch_size"]
    num_patches = ((cfg["num_in_frames"] // pt) * (cfg["image_size"] // ph)
                   * (cfg["image_size"] // pw))
    n = num_patches + cfg["num_cls_tokens"]

    def nrm(k, shape, scale=0.02):
        return (scale * jax.random.normal(k, shape)).astype(jnp.float32)

    keys = iter(jax.random.split(key, 8 + 8 * cfg["num_blocks"]))
    p = {
        "patch_embed_w": nrm(next(keys), (d, c, pt, ph, pw)),
        "patch_embed_b": jnp.zeros((d,), jnp.float32),
        "cls_token": nrm(next(keys), (1, cfg["num_cls_tokens"], d)),
        "pos_embed": nrm(next(keys), (1, n, d)),
        "final_ln_g": jnp.ones((d,), jnp.float32),
        "final_ln_b": jnp.zeros((d,), jnp.float32),
        "cls_head_ln_g": jnp.ones((d,), jnp.float32),
        "cls_head_ln_b": jnp.zeros((d,), jnp.float32),
        "cls_head_w": nrm(next(keys), (d, cfg["num_out_frames"])),
        "cls_head_b": jnp.zeros((cfg["num_out_frames"],), jnp.float32),
        # patch_head params exist in __init__ but are unused for logit_mode='default'
        "patch_head_ln_g": jnp.ones((num_patches,), jnp.float32),
        "patch_head_ln_b": jnp.zeros((num_patches,), jnp.float32),
        "patch_head_w": nrm(next(keys), (num_patches, cfg["num_out_frames"])),
        "patch_head_b": jnp.zeros((cfg["num_out_frames"],), jnp.float32),
        "blocks": [],
    }
    for _ in range(cfg["num_blocks"]):
        p["blocks"].append({
            "ln1_g": jnp.ones((d,), jnp.float32),
            "ln1_b": jnp.zeros((d,), jnp.float32),
            "qkv_w": nrm(next(keys), (d, 3 * d)),      # qkv_bias=False -> no bias param
            "proj_w": nrm(next(keys), (d, d)),
            "proj_b": jnp.zeros((d,), jnp.float32),
            "ln2_g": jnp.ones((d,), jnp.float32),
            "ln2_b": jnp.zeros((d,), jnp.float32),
            "fc1_w": nrm(next(keys), (d, inter)),
            "fc1_b": jnp.zeros((inter,), jnp.float32),
            "fc2_w": nrm(next(keys), (inter, d)),
            "fc2_b": jnp.zeros((d,), jnp.float32),
        })
    return p


def prepare_params(p, cfg):
    """Kernel layout: bf16 weights/embeddings (MXU-native), fp32 LN/bias params,
    packed qkv split into q / kv, lane-padded cls-head, flattened Conv3d weight."""
    bf = jnp.bfloat16
    d = cfg["hidden"]
    c = cfg["in_channels"]
    pt, ph, pw = cfg["patch_size"]

    n_out = cfg["num_out_frames"]
    n_pad = _round_up(n_out, 128)
    cls_w = jnp.zeros((d, n_pad), jnp.float32).at[:, :n_out].set(p["cls_head_w"])
    cls_b = jnp.zeros((n_pad,), jnp.float32).at[:n_out].set(p["cls_head_b"])

    out = {
        "patch_embed_w": p["patch_embed_w"].reshape(d, c * pt * ph * pw).T.astype(bf),
        "patch_embed_b": p["patch_embed_b"],
        "cls_token": p["cls_token"].astype(bf),
        "pos_embed": p["pos_embed"].astype(bf),
        "final_ln_g": p["final_ln_g"],
        "final_ln_b": p["final_ln_b"],
        "cls_head_ln_g": p["cls_head_ln_g"],
        "cls_head_ln_b": p["cls_head_ln_b"],
        "cls_head_w": cls_w.astype(bf),
        "cls_head_b": cls_b,
        "blocks": [],
    }
    for blk in p["blocks"]:
        out["blocks"].append({
            "ln1_g": blk["ln1_g"], "ln1_b": blk["ln1_b"],
            "q_w": blk["qkv_w"][:, :d].astype(bf),
            "kv_w": blk["qkv_w"][:, d:].astype(bf),
            "proj_w": blk["proj_w"].astype(bf),
            "proj_b": blk["proj_b"],
            "ln2_g": blk["ln2_g"], "ln2_b": blk["ln2_b"],
            "fc1_w": blk["fc1_w"].astype(bf),
            "fc1_b": blk["fc1_b"],
            "fc2_w": blk["fc2_w"].astype(bf),
            "fc2_b": blk["fc2_b"],
        })
    return out


# ----------------------------- main -----------------------------

if __name__ == "__main__":
    cfg = dict(
        image_size=16,
        num_in_frames=4,
        num_out_frames=4,
        patch_size=(2, 8, 8),
        in_channels=3,
        num_cls_tokens=1,
        hidden=32,
        num_blocks=2,
        num_heads=4,
        intermediate=64,
    )

    root = jax.random.PRNGKey(0)
    k_param, k_x = jax.random.split(root)
    params = prepare_params(init_params(k_param, cfg), cfg)

    # input layout: NCTHW, as for nn.Conv3d tubelet embedding
    x = jax.random.normal(k_x, (2, cfg["in_channels"], cfg["num_in_frames"],
                                cfg["image_size"], cfg["image_size"]),
                          dtype=jnp.float32)

    logits = jax.jit(functools.partial(vivit_forward, cfg=cfg))(params, x)
    jax.block_until_ready(logits)
    assert logits.shape == (2, cfg["num_out_frames"])
    print("KERNEL_OK")
</pallas_src>

<mosaic_0001>
module attributes {stable_mosaic.version = 11 : i64} {
  func.func @kernel(%arg0: i32, %arg1: i32, %arg2: i32, %arg3: memref<16x128xbf16, #tpu.memory_space<vmem>>, %arg4: memref<128x32xbf16, #tpu.memory_space<vmem>>, %arg5: memref<1x32xf32, #tpu.memory_space<vmem>>, %arg6: memref<16x32xbf16, #tpu.memory_space<vmem>>, %arg7: memref<16x32xf32, #tpu.memory_space<vmem>>) attributes {dimension_semantics = [#tpu.dimension_semantics<parallel>, #tpu.dimension_semantics<parallel>, #tpu.dimension_semantics<arbitrary>], iteration_bounds = array<i64: 1, 1, 3>, scalar_prefetch = 0 : i64, scratch_operands = 1 : i64, tpu.core_type = #tpu.core_type<tc>, window_params = [{transform_indices = @transform_0, window_bounds = array<i64: 16, 128>}, {transform_indices = @transform_1, window_bounds = array<i64: 128, 32>}, {transform_indices = @transform_2, window_bounds = array<i64: 1, 32>}, {transform_indices = @transform_3, window_bounds = array<i64: 16, 32>}]} {
    %c0_i32 = arith.constant 0 : i32
    %0 = arith.cmpi eq, %arg2, %c0_i32 : i32
    %1 = arith.extui %0 : i1 to i32
    %c0_i32_0 = arith.constant 0 : i32
    %2 = arith.cmpi ne, %1, %c0_i32_0 : i32
    scf.if %2 {
      %cst_9 = arith.constant 0.000000e+00 : f32
      %12 = vector.broadcast %cst_9 : f32 to vector<16x32xf32>
      %c0_10 = arith.constant 0 : index
      %c0_11 = arith.constant 0 : index
      %13 = vector.load %arg7[%c0_10, %c0_11] : memref<16x32xf32, #tpu.memory_space<vmem>>, vector<16x32xf32>
      tpu.vector_store %arg7[%c0_10, %c0_11], %12 {strides = array<i32>} : memref<16x32xf32, #tpu.memory_space<vmem>>, vector<16x32xf32>,
    } else {
    }
    %c0 = arith.constant 0 : index
    %c0_1 = arith.constant 0 : index
    %3 = vector.load %arg7[%c0, %c0_1] : memref<16x32xf32, #tpu.memory_space<vmem>>, vector<16x32xf32>
    %c0_2 = arith.constant 0 : index
    %c0_3 = arith.constant 0 : index
    %4 = vector.load %arg3[%c0_2, %c0_3] : memref<16x128xbf16, #tpu.memory_space<vmem>>, vector<16x128xbf16>
    %c0_4 = arith.constant 0 : index
    %c0_5 = arith.constant 0 : index
    %5 = vector.load %arg4[%c0_4, %c0_5] : memref<128x32xbf16, #tpu.memory_space<vmem>>, vector<128x32xbf16>
    %cst = arith.constant dense<0.000000e+00> : vector<16x32xf32>
    %6 = tpu.matmul %4, %5, %cst {dimension_numbers = #tpu.dot_dimension_numbers<[1], [0], [0], [1], [0, 0, 1, 1], [], []>} : vector<16x128xbf16>, vector<128x32xbf16>, vector<16x32xf32> -> vector<16x32xf32>
    %7 = arith.addf %3, %6 : vector<16x32xf32>
    %c0_6 = arith.constant 0 : index
    %c0_7 = arith.constant 0 : index
    %8 = vector.load %arg7[%c0_6, %c0_7] : memref<16x32xf32, #tpu.memory_space<vmem>>, vector<16x32xf32>
    tpu.vector_store %arg7[%c0_6, %c0_7], %7 {strides = array<i32>} : memref<16x32xf32, #tpu.memory_space<vmem>>, vector<16x32xf32>,
    %c2_i32 = arith.constant 2 : i32
    %9 = arith.cmpi eq, %arg2, %c2_i32 : i32
    %10 = arith.extui %9 : i1 to i32
    %c0_i32_8 = arith.constant 0 : i32
    %11 = arith.cmpi ne, %10, %c0_i32_8 : i32
    scf.if %11 {
      %c0_9 = arith.constant 0 : index
      %c0_10 = arith.constant 0 : index
      %12 = vector.load %arg7[%c0_9, %c0_10] : memref<16x32xf32, #tpu.memory_space<vmem>>, vector<16x32xf32>
      %c0_11 = arith.constant 0 : index
      %c0_12 = arith.constant 0 : index
      %13 = vector.load %arg5[%c0_11, %c0_12] : memref<1x32xf32, #tpu.memory_space<vmem>>, vector<1x32xf32>
      %14 = vector.broadcast %13 : vector<1x32xf32> to vector<16x32xf32>
      %15 = arith.addf %12, %14 : vector<16x32xf32>
      %16 = arith.truncf %15 : vector<16x32xf32> to vector<16x32xbf16>
      %c0_13 = arith.constant 0 : index
      %c0_14 = arith.constant 0 : index
      %17 = vector.load %arg6[%c0_13, %c0_14] : memref<16x32xbf16, #tpu.memory_space<vmem>>, vector<16x32xbf16>
      tpu.vector_store %arg6[%c0_13, %c0_14], %16 {strides = array<i32>} : memref<16x32xbf16, #tpu.memory_space<vmem>>, vector<16x32xbf16>,
    } else {
    }
    return
  }
  func.func @transform_0(%arg0: i32, %arg1: i32, %arg2: i32) -> (i32, i32) {
    %c0_i32 = arith.constant 0 : i32
    return %arg0, %arg2 : i32, i32
  }
  func.func @transform_1(%arg0: i32, %arg1: i32, %arg2: i32) -> (i32, i32) {
    %c0_i32 = arith.constant 0 : i32
    return %arg2, %arg1 : i32, i32
  }
  func.func @transform_2(%arg0: i32, %arg1: i32, %arg2: i32) -> (i32, i32) {
    %c0_i32 = arith.constant 0 : i32
    %c0_i32_0 = arith.constant 0 : i32
    return %c0_i32, %arg1 : i32, i32
  }
  func.func @transform_3(%arg0: i32, %arg1: i32, %arg2: i32) -> (i32, i32) {
    %c0_i32 = arith.constant 0 : i32
    return %arg0, %arg1 : i32, i32
  }
}

module attributes {stable_mosaic.version = 11 : i64} {
  func.func @kernel(%arg0: i32, %arg1: i32, %arg2: memref<18x32xbf16, #tpu.memory_space<vmem>>, %arg3: memref<1x32xf32, #tpu.memory_space<vmem>>, %arg4: memref<1x32xf32, #tpu.memory_space<vmem>>, %arg5: memref<32x64xbf16, #tpu.memory_space<vmem>>, %arg6: memref<18x64xbf16, #tpu.memory_space<vmem>>, %arg7: memref<18x32xbf16, #tpu.memory_space<vmem>>) attributes {dimension_semantics = [#tpu.dimension_semantics<parallel>, #tpu.dimension_semantics<arbitrary>], iteration_bounds = array<i64: 1, 1>, scalar_prefetch = 0 : i64, scratch_operands = 1 : i64, tpu.core_type = #tpu.core_type<tc>, window_params = [{transform_indices = @transform_0, window_bounds = array<i64: 18, 32>}, {pipeline_mode = #tpu.pipeline_mode<synchronous>, transform_indices = @transform_1, window_bounds = array<i64: 1, 32>}, {pipeline_mode = #tpu.pipeline_mode<synchronous>, transform_indices = @transform_2, window_bounds = array<i64: 1, 32>}, {transform_indices = @transform_3, window_bounds = array<i64: 32, 64>}, {transform_indices = @transform_4, window_bounds = array<i64: 18, 64>}]} {
    %c0_i32 = arith.constant 0 : i32
    %0 = arith.cmpi eq, %arg1, %c0_i32 : i32
    %1 = arith.extui %0 : i1 to i32
    %c0_i32_0 = arith.constant 0 : i32
    %2 = arith.cmpi ne, %1, %c0_i32_0 : i32
    scf.if %2 {
      %c0_6 = arith.constant 0 : index
      %c0_7 = arith.constant 0 : index
      %8 = vector.load %arg2[%c0_6, %c0_7] : memref<18x32xbf16, #tpu.memory_space<vmem>>, vector<18x32xbf16>
      %9 = arith.extf %8 : vector<18x32xbf16> to vector<18x32xf32>
      %cst_8 = arith.constant dense<0.000000e+00> : vector<18xf32>
      %10 = vector.multi_reduction <add>, %9, %cst_8 [1] : vector<18x32xf32> to vector<18xf32>
      %11 = vector.shape_cast %10 : vector<18xf32> to vector<18x1xf32>
      %cst_9 = arith.constant 3.200000e+01 : f32
      %12 = vector.broadcast %cst_9 : f32 to vector<18x1xf32>
      %13 = arith.divf %11, %12 : vector<18x1xf32>
      %14 = vector.broadcast %13 : vector<18x1xf32> to vector<18x32xf32>
      %15 = arith.subf %9, %14 : vector<18x32xf32>
      %16 = arith.mulf %15, %15 : vector<18x32xf32>
      %cst_10 = arith.constant dense<0.000000e+00> : vector<18xf32>
      %17 = vector.multi_reduction <add>, %16, %cst_10 [1] : vector<18x32xf32> to vector<18xf32>
      %18 = vector.shape_cast %17 : vector<18xf32> to vector<18x1xf32>
      %cst_11 = arith.constant 3.200000e+01 : f32
      %19 = vector.broadcast %cst_11 : f32 to vector<18x1xf32>
      %20 = arith.divf %18, %19 : vector<18x1xf32>
      %21 = vector.broadcast %13 : vector<18x1xf32> to vector<18x32xf32>
      %22 = arith.subf %9, %21 : vector<18x32xf32>
      %cst_12 = arith.constant 9.99999974E-6 : f32
      %23 = vector.broadcast %cst_12 : f32 to vector<18x1xf32>
      %24 = arith.addf %20, %23 : vector<18x1xf32>
      %25 = math.rsqrt %24 : vector<18x1xf32>
      %26 = vector.broadcast %25 : vector<18x1xf32> to vector<18x32xf32>
      %27 = arith.mulf %22, %26 : vector<18x32xf32>
      %c0_13 = arith.constant 0 : index
      %c0_14 = arith.constant 0 : index
      %28 = vector.load %arg3[%c0_13, %c0_14] : memref<1x32xf32, #tpu.memory_space<vmem>>, vector<1x32xf32>
      %29 = vector.broadcast %28 : vector<1x32xf32> to vector<18x32xf32>
      %30 = arith.mulf %27, %29 : vector<18x32xf32>
      %c0_15 = arith.constant 0 : index
      %c0_16 = arith.constant 0 : index
      %31 = vector.load %arg4[%c0_15, %c0_16] : memref<1x32xf32, #tpu.memory_space<vmem>>, vector<1x32xf32>
      %32 = vector.broadcast %31 : vector<1x32xf32> to vector<18x32xf32>
      %33 = arith.addf %30, %32 : vector<18x32xf32>
      %34 = arith.truncf %33 : vector<18x32xf32> to vector<18x32xbf16>
      %c0_17 = arith.constant 0 : index
      %c0_18 = arith.constant 0 : index
      %35 = vector.load %arg7[%c0_17, %c0_18] : memref<18x32xbf16, #tpu.memory_space<vmem>>, vector<18x32xbf16>
      tpu.vector_store %arg7[%c0_17, %c0_18], %34 {strides = array<i32>} : memref<18x32xbf16, #tpu.memory_space<vmem>>, vector<18x32xbf16>,
    } else {
    }
    %c0 = arith.constant 0 : index
    %c0_1 = arith.constant 0 : index
    %3 = vector.load %arg7[%c0, %c0_1] : memref<18x32xbf16, #tpu.memory_space<vmem>>, vector<18x32xbf16>
    %c0_2 = arith.constant 0 : index
    %c0_3 = arith.constant 0 : index
    %4 = vector.load %arg5[%c0_2, %c0_3] : memref<32x64xbf16, #tpu.memory_space<vmem>>, vector<32x64xbf16>
    %cst = arith.constant dense<0.000000e+00> : vector<18x64xf32>
    %5 = tpu.matmul %3, %4, %cst {dimension_numbers = #tpu.dot_dimension_numbers<[1], [0], [0], [1], [0, 0, 1, 1], [], []>} : vector<18x32xbf16>, vector<32x64xbf16>, vector<18x64xf32> -> vector<18x64xf32>
    %6 = arith.truncf %5 : vector<18x64xf32> to vector<18x64xbf16>
    %c0_4 = arith.constant 0 : index
    %c0_5 = arith.constant 0 : index
    %7 = vector.load %arg6[%c0_4, %c0_5] : memref<18x64xbf16, #tpu.memory_space<vmem>>, vector<18x64xbf16>
    tpu.vector_store %arg6[%c0_4, %c0_5], %6 {strides = array<i32>} : memref<18x64xbf16, #tpu.memory_space<vmem>>, vector<18x64xbf16>,
    return
  }
  func.func @transform_0(%arg0: i32, %arg1: i32) -> (i32, i32) {
    %c0_i32 = arith.constant 0 : i32
    %c0_i32_0 = arith.constant 0 : i32
    return %arg0, %c0_i32 : i32, i32
  }
  func.func @transform_1(%arg0: i32, %arg1: i32) -> (i32, i32) {
    %c0_i32 = arith.constant 0 : i32
    %c0_i32_0 = arith.constant 0 : i32
    %c0_i32_1 = arith.constant 0 : i32
    return %c0_i32, %c0_i32_0 : i32, i32
  }
  func.func @transform_2(%arg0: i32, %arg1: i32) -> (i32, i32) {
    %c0_i32 = arith.constant 0 : i32
    %c0_i32_0 = arith.constant 0 : i32
    %c0_i32_1 = arith.constant 0 : i32
    return %c0_i32, %c0_i32_0 : i32, i32
  }
  func.func @transform_3(%arg0: i32, %arg1: i32) -> (i32, i32) {
    %c0_i32 = arith.constant 0 : i32
    %c0_i32_0 = arith.constant 0 : i32
    return %c0_i32, %arg1 : i32, i32
  }
  func.func @transform_4(%arg0: i32, %arg1: i32) -> (i32, i32) {
    %c0_i32 = arith.constant 0 : i32
    return %arg0, %arg1 : i32, i32
  }
}

module attributes {stable_mosaic.version = 11 : i64} {
  func.func @kernel(%arg0: i32, %arg1: i32, %arg2: memref<18x32xbf16, #tpu.memory_space<vmem>>, %arg3: memref<1x32xf32, #tpu.memory_space<vmem>>, %arg4: memref<1x32xf32, #tpu.memory_space<vmem>>, %arg5: memref<32x32xbf16, #tpu.memory_space<vmem>>, %arg6: memref<18x32xbf16, #tpu.memory_space<vmem>>, %arg7: memref<18x32xbf16, #tpu.memory_space<vmem>>) attributes {dimension_semantics = [#tpu.dimension_semantics<parallel>, #tpu.dimension_semantics<arbitrary>], iteration_bounds = array<i64: 1, 1>, scalar_prefetch = 0 : i64, scratch_operands = 1 : i64, tpu.core_type = #tpu.core_type<tc>, window_params = [{transform_indices = @transform_0, window_bounds = array<i64: 18, 32>}, {pipeline_mode = #tpu.pipeline_mode<synchronous>, transform_indices = @transform_1, window_bounds = array<i64: 1, 32>}, {pipeline_mode = #tpu.pipeline_mode<synchronous>, transform_indices = @transform_2, window_bounds = array<i64: 1, 32>}, {transform_indices = @transform_3, window_bounds = array<i64: 32, 32>}, {transform_indices = @transform_4, window_bounds = array<i64: 18, 32>}]} {
    %c0_i32 = arith.constant 0 : i32
    %0 = arith.cmpi eq, %arg1, %c0_i32 : i32
    %1 = arith.extui %0 : i1 to i32
    %c0_i32_0 = arith.constant 0 : i32
    %2 = arith.cmpi ne, %1, %c0_i32_0 : i32
    scf.if %2 {
      %c0_6 = arith.constant 0 : index
      %c0_7 = arith.constant 0 : index
      %8 = vector.load %arg2[%c0_6, %c0_7] : memref<18x32xbf16, #tpu.memory_space<vmem>>, vector<18x32xbf16>
      %9 = arith.extf %8 : vector<18x32xbf16> to vector<18x32xf32>
      %cst_8 = arith.constant dense<0.000000e+00> : vector<18xf32>
      %10 = vector.multi_reduction <add>, %9, %cst_8 [1] : vector<18x32xf32> to vector<18xf32>
      %11 = vector.shape_cast %10 : vector<18xf32> to vector<18x1xf32>
      %cst_9 = arith.constant 3.200000e+01 : f32
      %12 = vector.broadcast %cst_9 : f32 to vector<18x1xf32>
      %13 = arith.divf %11, %12 : vector<18x1xf32>
      %14 = vector.broadcast %13 : vector<18x1xf32> to vector<18x32xf32>
      %15 = arith.subf %9, %14 : vector<18x32xf32>
      %16 = arith.mulf %15, %15 : vector<18x32xf32>
      %cst_10 = arith.constant dense<0.000000e+00> : vector<18xf32>
      %17 = vector.multi_reduction <add>, %16, %cst_10 [1] : vector<18x32xf32> to vector<18xf32>
      %18 = vector.shape_cast %17 : vector<18xf32> to vector<18x1xf32>
      %cst_11 = arith.constant 3.200000e+01 : f32
      %19 = vector.broadcast %cst_11 : f32 to vector<18x1xf32>
      %20 = arith.divf %18, %19 : vector<18x1xf32>
      %21 = vector.broadcast %13 : vector<18x1xf32> to vector<18x32xf32>
      %22 = arith.subf %9, %21 : vector<18x32xf32>
      %cst_12 = arith.constant 9.99999974E-6 : f32
      %23 = vector.broadcast %cst_12 : f32 to vector<18x1xf32>
      %24 = arith.addf %20, %23 : vector<18x1xf32>
      %25 = math.rsqrt %24 : vector<18x1xf32>
      %26 = vector.broadcast %25 : vector<18x1xf32> to vector<18x32xf32>
      %27 = arith.mulf %22, %26 : vector<18x32xf32>
      %c0_13 = arith.constant 0 : index
      %c0_14 = arith.constant 0 : index
      %28 = vector.load %arg3[%c0_13, %c0_14] : memref<1x32xf32, #tpu.memory_space<vmem>>, vector<1x32xf32>
      %29 = vector.broadcast %28 : vector<1x32xf32> to vector<18x32xf32>
      %30 = arith.mulf %27, %29 : vector<18x32xf32>
      %c0_15 = arith.constant 0 : index
      %c0_16 = arith.constant 0 : index
      %31 = vector.load %arg4[%c0_15, %c0_16] : memref<1x32xf32, #tpu.memory_space<vmem>>, vector<1x32xf32>
      %32 = vector.broadcast %31 : vector<1x32xf32> to vector<18x32xf32>
      %33 = arith.addf %30, %32 : vector<18x32xf32>
      %34 = arith.truncf %33 : vector<18x32xf32> to vector<18x32xbf16>
      %c0_17 = arith.constant 0 : index
      %c0_18 = arith.constant 0 : index
      %35 = vector.load %arg7[%c0_17, %c0_18] : memref<18x32xbf16, #tpu.memory_space<vmem>>, vector<18x32xbf16>
      tpu.vector_store %arg7[%c0_17, %c0_18], %34 {strides = array<i32>} : memref<18x32xbf16, #tpu.memory_space<vmem>>, vector<18x32xbf16>,
    } else {
    }
    %c0 = arith.constant 0 : index
    %c0_1 = arith.constant 0 : index
    %3 = vector.load %arg7[%c0, %c0_1] : memref<18x32xbf16, #tpu.memory_space<vmem>>, vector<18x32xbf16>
    %c0_2 = arith.constant 0 : index
    %c0_3 = arith.constant 0 : index
    %4 = vector.load %arg5[%c0_2, %c0_3] : memref<32x32xbf16, #tpu.memory_space<vmem>>, vector<32x32xbf16>
    %cst = arith.constant dense<0.000000e+00> : vector<18x32xf32>
    %5 = tpu.matmul %3, %4, %cst {dimension_numbers = #tpu.dot_dimension_numbers<[1], [0], [0], [1], [0, 0, 1, 1], [], []>} : vector<18x32xbf16>, vector<32x32xbf16>, vector<18x32xf32> -> vector<18x32xf32>
    %6 = arith.truncf %5 : vector<18x32xf32> to vector<18x32xbf16>
    %c0_4 = arith.constant 0 : index
    %c0_5 = arith.constant 0 : index
    %7 = vector.load %arg6[%c0_4, %c0_5] : memref<18x32xbf16, #tpu.memory_space<vmem>>, vector<18x32xbf16>
    tpu.vector_store %arg6[%c0_4, %c0_5], %6 {strides = array<i32>} : memref<18x32xbf16, #tpu.memory_space<vmem>>, vector<18x32xbf16>,
    return
  }
  func.func @transform_0(%arg0: i32, %arg1: i32) -> (i32, i32) {
    %c0_i32 = arith.constant 0 : i32
    %c0_i32_0 = arith.constant 0 : i32
    return %arg0, %c0_i32 : i32, i32
  }
  func.func @transform_1(%arg0: i32, %arg1: i32) -> (i32, i32) {
    %c0_i32 = arith.constant 0 : i32
    %c0_i32_0 = arith.constant 0 : i32
    %c0_i32_1 = arith.constant 0 : i32
    return %c0_i32, %c0_i32_0 : i32, i32
  }
  func.func @transform_2(%arg0: i32, %arg1: i32) -> (i32, i32) {
    %c0_i32 = arith.constant 0 : i32
    %c0_i32_0 = arith.constant 0 : i32
    %c0_i32_1 = arith.constant 0 : i32
    return %c0_i32, %c0_i32_0 : i32, i32
  }
  func.func @transform_3(%arg0: i32, %arg1: i32) -> (i32, i32) {
    %c0_i32 = arith.constant 0 : i32
    %c0_i32_0 = arith.constant 0 : i32
    return %c0_i32, %arg1 : i32, i32
  }
  func.func @transform_4(%arg0: i32, %arg1: i32) -> (i32, i32) {
    %c0_i32 = arith.constant 0 : i32
    return %arg0, %arg1 : i32, i32
  }
}

module attributes {stable_mosaic.version = 11 : i64} {
  func.func @_flash_attn_kernel(%arg0: i32, %arg1: i32, %arg2: i32, %arg3: memref<1x9x32xbf16, #tpu.memory_space<vmem>>, %arg4: memref<1x9x64xbf16, #tpu.memory_space<vmem>>, %arg5: memref<1x9x32xbf16, #tpu.memory_space<vmem>>, %arg6: memref<4x9x1xf32, #tpu.memory_space<vmem>>, %arg7: memref<4x9x1xf32, #tpu.memory_space<vmem>>, %arg8: memref<9x32xf32, #tpu.memory_space<vmem>>) attributes {dimension_semantics = [#tpu.dimension_semantics<parallel>, #tpu.dimension_semantics<parallel>, #tpu.dimension_semantics<arbitrary>], iteration_bounds = array<i64: 2, 1, 1>, scalar_prefetch = 0 : i64, scratch_operands = 3 : i64, tpu.core_type = #tpu.core_type<tc>, window_params = [{transform_indices = @transform_0, window_bounds = array<i64: 1, 9, 32>}, {transform_indices = @transform_1, window_bounds = array<i64: 1, 9, 64>}, {transform_indices = @transform_2, window_bounds = array<i64: 1, 9, 32>}]} {
    %c0_i32 = arith.constant 0 : i32
    %0 = arith.cmpi eq, %arg2, %c0_i32 : i32
    %1 = arith.extui %0 : i1 to i32
    %c0_i32_0 = arith.constant 0 : i32
    %2 = arith.cmpi ne, %1, %c0_i32_0 : i32
    scf.if %2 {
      %cst_85 = arith.constant 0xFF800000 : f32
      %150 = vector.broadcast %cst_85 : f32 to vector<4x9x1xf32>
      %c0_86 = arith.constant 0 : index
      %c0_87 = arith.constant 0 : index
      %c0_88 = arith.constant 0 : index
      %151 = vector.load %arg6[%c0_86, %c0_87, %c0_88] : memref<4x9x1xf32, #tpu.memory_space<vmem>>, vector<4x9x1xf32>
      tpu.vector_store %arg6[%c0_86, %c0_87, %c0_88], %150 {strides = array<i32>} : memref<4x9x1xf32, #tpu.memory_space<vmem>>, vector<4x9x1xf32>,
      %cst_89 = arith.constant 0.000000e+00 : f32
      %152 = vector.broadcast %cst_89 : f32 to vector<4x9x1xf32>
      %c0_90 = arith.constant 0 : index
      %c0_91 = arith.constant 0 : index
      %c0_92 = arith.constant 0 : index
      %153 = vector.load %arg7[%c0_90, %c0_91, %c0_92] : memref<4x9x1xf32, #tpu.memory_space<vmem>>, vector<4x9x1xf32>
      tpu.vector_store %arg7[%c0_90, %c0_91, %c0_92], %152 {strides = array<i32>} : memref<4x9x1xf32, #tpu.memory_space<vmem>>, vector<4x9x1xf32>,
      %cst_93 = arith.constant 0.000000e+00 : f32
      %154 = vector.broadcast %cst_93 : f32 to vector<9x32xf32>
      %c0_94 = arith.constant 0 : index
      %c0_95 = arith.constant 0 : index
      %155 = vector.load %arg8[%c0_94, %c0_95] : memref<9x32xf32, #tpu.memory_space<vmem>>, vector<9x32xf32>
      tpu.vector_store %arg8[%c0_94, %c0_95], %154 {strides = array<i32>} : memref<9x32xf32, #tpu.memory_space<vmem>>, vector<9x32xf32>,
    } else {
    }
    %c0 = arith.constant 0 : index
    %c0_1 = arith.constant 0 : index
    %c0_2 = arith.constant 0 : index
    %3 = vector.load %arg3[%c0, %c0_1, %c0_2] : memref<1x9x32xbf16, #tpu.memory_space<vmem>>, vector<1x9x32xbf16>
    %4 = vector.shape_cast %3 : vector<1x9x32xbf16> to vector<9x32xbf16>
    %c0_3 = arith.constant 0 : index
    %c0_4 = arith.constant 0 : index
    %c0_5 = arith.constant 0 : index
    %5 = vector.load %arg4[%c0_3, %c0_4, %c0_5] : memref<1x9x64xbf16, #tpu.memory_space<vmem>>, vector<1x9x64xbf16>
    %6 = vector.shape_cast %5 : vector<1x9x64xbf16> to vector<9x64xbf16>
    %7 = vector.extract_strided_slice %4 {offsets = [0, 0], sizes = [9, 8], strides = [1, 1]} : vector<9x32xbf16> to vector<9x8xbf16>
    %8 = vector.extract_strided_slice %6 {offsets = [0, 0], sizes = [9, 8], strides = [1, 1]} : vector<9x64xbf16> to vector<9x8xbf16>
    %9 = vector.extract_strided_slice %6 {offsets = [0, 32], sizes = [9, 8], strides = [1, 1]} : vector<9x64xbf16> to vector<9x8xbf16>
    %cst = arith.constant dense<0.000000e+00> : vector<9x9xf32>
    %10 = tpu.matmul %7, %8, %cst {dimension_numbers = #tpu.dot_dimension_numbers<[1], [1], [0], [0], [0, 0, 1, 0], [], []>} : vector<9x8xbf16>, vector<9x8xbf16>, vector<9x9xf32> -> vector<9x9xf32>
    %cst_6 = arith.constant 0.353553385 : f32
    %11 = vector.broadcast %cst_6 : f32 to vector<9x9xf32>
    %12 = arith.mulf %10, %11 : vector<9x9xf32>
    %c0_7 = arith.constant 0 : index
    %c0_8 = arith.constant 0 : index
    %c0_9 = arith.constant 0 : index
    %13 = vector.load %arg6[%c0_7, %c0_8, %c0_9] : memref<4x9x1xf32, #tpu.memory_space<vmem>>, vector<1x9x1xf32>
    %14 = vector.shape_cast %13 : vector<1x9x1xf32> to vector<9x1xf32>
    %c0_10 = arith.constant 0 : index
    %c0_11 = arith.constant 0 : index
    %c0_12 = arith.constant 0 : index
    %15 = vector.load %arg7[%c0_10, %c0_11, %c0_12] : memref<4x9x1xf32, #tpu.memory_space<vmem>>, vector<1x9x1xf32>
    %16 = vector.shape_cast %15 : vector<1x9x1xf32> to vector<9x1xf32>
    %cst_13 = arith.constant dense<0xFF800000> : vector<9xf32>
    %17 = vector.multi_reduction <maximumf>, %12, %cst_13 [1] : vector<9x9xf32> to vector<9xf32>
    %18 = vector.shape_cast %17 : vector<9xf32> to vector<9x1xf32>
    %19 = arith.maximumf %14, %18 : vector<9x1xf32>
    %20 = arith.subf %14, %19 : vector<9x1xf32>
    %21 = math.exp %20 : vector<9x1xf32>
    %22 = vector.broadcast %19 : vector<9x1xf32> to vector<9x9xf32>
    %23 = arith.subf %12, %22 : vector<9x9xf32>
    %24 = math.exp %23 : vector<9x9xf32>
    %25 = arith.mulf %21, %16 : vector<9x1xf32>
    %cst_14 = arith.constant dense<0.000000e+00> : vector<9xf32>
    %26 = vector.multi_reduction <add>, %24, %cst_14 [1] : vector<9x9xf32> to vector<9xf32>
    %27 = vector.shape_cast %26 : vector<9xf32> to vector<9x1xf32>
    %28 = arith.addf %25, %27 : vector<9x1xf32>
    %c0_15 = arith.constant 0 : index
    %c0_16 = arith.constant 0 : index
    %c0_17 = arith.constant 0 : index
    %29 = vector.load %arg7[%c0_15, %c0_16, %c0_17] : memref<4x9x1xf32, #tpu.memory_space<vmem>>, vector<1x9x1xf32>
    %30 = vector.shape_cast %29 : vector<1x9x1xf32> to vector<9x1xf32>
    %31 = vector.shape_cast %28 : vector<9x1xf32> to vector<1x9x1xf32>
    tpu.vector_store %arg7[%c0_15, %c0_16, %c0_17], %31 {strides = array<i32>} : memref<4x9x1xf32, #tpu.memory_space<vmem>>, vector<1x9x1xf32>,
    %c0_18 = arith.constant 0 : index
    %c0_19 = arith.constant 0 : index
    %32 = vector.load %arg8[%c0_18, %c0_19] : memref<9x32xf32, #tpu.memory_space<vmem>>, vector<9x8xf32>
    %33 = vector.broadcast %21 : vector<9x1xf32> to vector<9x8xf32>
    %34 = arith.mulf %33, %32 : vector<9x8xf32>
    %35 = arith.truncf %24 : vector<9x9xf32> to vector<9x9xbf16>
    %cst_20 = arith.constant dense<0.000000e+00> : vector<9x8xf32>
    %36 = tpu.matmul %35, %9, %cst_20 {dimension_numbers = #tpu.dot_dimension_numbers<[1], [0], [0], [1], [0, 0, 1, 1], [], []>} : vector<9x9xbf16>, vector<9x8xbf16>, vector<9x8xf32> -> vector<9x8xf32>
    %37 = arith.addf %34, %36 : vector<9x8xf32>
    %c0_21 = arith.constant 0 : index
    %c0_22 = arith.constant 0 : index
    %38 = vector.load %arg8[%c0_21, %c0_22] : memref<9x32xf32, #tpu.memory_space<vmem>>, vector<9x8xf32>
    tpu.vector_store %arg8[%c0_21, %c0_22], %37 {strides = array<i32>} : memref<9x32xf32, #tpu.memory_space<vmem>>, vector<9x8xf32>,
    %c0_23 = arith.constant 0 : index
    %c0_24 = arith.constant 0 : index
    %c0_25 = arith.constant 0 : index
    %39 = vector.load %arg6[%c0_23, %c0_24, %c0_25] : memref<4x9x1xf32, #tpu.memory_space<vmem>>, vector<1x9x1xf32>
    %40 = vector.shape_cast %39 : vector<1x9x1xf32> to vector<9x1xf32>
    %41 = vector.shape_cast %19 : vector<9x1xf32> to vector<1x9x1xf32>
    tpu.vector_store %arg6[%c0_23, %c0_24, %c0_25], %41 {strides = array<i32>} : memref<4x9x1xf32, #tpu.memory_space<vmem>>, vector<1x9x1xf32>,
    %42 = vector.extract_strided_slice %4 {offsets = [0, 8], sizes = [9, 8], strides = [1, 1]} : vector<9x32xbf16> to vector<9x8xbf16>
    %43 = vector.extract_strided_slice %6 {offsets = [0, 8], sizes = [9, 8], strides = [1, 1]} : vector<9x64xbf16> to vector<9x8xbf16>
    %44 = vector.extract_strided_slice %6 {offsets = [0, 40], sizes = [9, 8], strides = [1, 1]} : vector<9x64xbf16> to vector<9x8xbf16>
    %cst_26 = arith.constant dense<0.000000e+00> : vector<9x9xf32>
    %45 = tpu.matmul %42, %43, %cst_26 {dimension_numbers = #tpu.dot_dimension_numbers<[1], [1], [0], [0], [0, 0, 1, 0], [], []>} : vector<9x8xbf16>, vector<9x8xbf16>, vector<9x9xf32> -> vector<9x9xf32>
    %cst_27 = arith.constant 0.353553385 : f32
    %46 = vector.broadcast %cst_27 : f32 to vector<9x9xf32>
    %47 = arith.mulf %45, %46 : vector<9x9xf32>
    %c1 = arith.constant 1 : index
    %c0_28 = arith.constant 0 : index
    %c0_29 = arith.constant 0 : index
    %48 = vector.load %arg6[%c1, %c0_28, %c0_29] : memref<4x9x1xf32, #tpu.memory_space<vmem>>, vector<1x9x1xf32>
    %49 = vector.shape_cast %48 : vector<1x9x1xf32> to vector<9x1xf32>
    %c1_30 = arith.constant 1 : index
    %c0_31 = arith.constant 0 : index
    %c0_32 = arith.constant 0 : index
    %50 = vector.load %arg7[%c1_30, %c0_31, %c0_32] : memref<4x9x1xf32, #tpu.memory_space<vmem>>, vector<1x9x1xf32>
    %51 = vector.shape_cast %50 : vector<1x9x1xf32> to vector<9x1xf32>
    %cst_33 = arith.constant dense<0xFF800000> : vector<9xf32>
    %52 = vector.multi_reduction <maximumf>, %47, %cst_33 [1] : vector<9x9xf32> to vector<9xf32>
    %53 = vector.shape_cast %52 : vector<9xf32> to vector<9x1xf32>
    %54 = arith.maximumf %49, %53 : vector<9x1xf32>
    %55 = arith.subf %49, %54 : vector<9x1xf32>
    %56 = math.exp %55 : vector<9x1xf32>
    %57 = vector.broadcast %54 : vector<9x1xf32> to vector<9x9xf32>
    %58 = arith.subf %47, %57 : vector<9x9xf32>
    %59 = math.exp %58 : vector<9x9xf32>
    %60 = arith.mulf %56, %51 : vector<9x1xf32>
    %cst_34 = arith.constant dense<0.000000e+00> : vector<9xf32>
    %61 = vector.multi_reduction <add>, %59, %cst_34 [1] : vector<9x9xf32> to vector<9xf32>
    %62 = vector.shape_cast %61 : vector<9xf32> to vector<9x1xf32>
    %63 = arith.addf %60, %62 : vector<9x1xf32>
    %c1_35 = arith.constant 1 : index
    %c0_36 = arith.constant 0 : index
    %c0_37 = arith.constant 0 : index
    %64 = vector.load %arg7[%c1_35, %c0_36, %c0_37] : memref<4x9x1xf32, #tpu.memory_space<vmem>>, vector<1x9x1xf32>
    %65 = vector.shape_cast %64 : vector<1x9x1xf32> to vector<9x1xf32>
    %66 = vector.shape_cast %63 : vector<9x1xf32> to vector<1x9x1xf32>
    tpu.vector_store %arg7[%c1_35, %c0_36, %c0_37], %66 {strides = array<i32>} : memref<4x9x1xf32, #tpu.memory_space<vmem>>, vector<1x9x1xf32>,
    %c0_38 = arith.constant 0 : index
    %c8 = arith.constant 8 : index
    %67 = vector.load %arg8[%c0_38, %c8] : memref<9x32xf32, #tpu.memory_space<vmem>>, vector<9x8xf32>
    %68 = vector.broadcast %56 : vector<9x1xf32> to vector<9x8xf32>
    %69 = arith.mulf %68, %67 : vector<9x8xf32>
    %70 = arith.truncf %59 : vector<9x9xf32> to vector<9x9xbf16>
    %cst_39 = arith.constant dense<0.000000e+00> : vector<9x8xf32>
    %71 = tpu.matmul %70, %44, %cst_39 {dimension_numbers = #tpu.dot_dimension_numbers<[1], [0], [0], [1], [0, 0, 1, 1], [], []>} : vector<9x9xbf16>, vector<9x8xbf16>, vector<9x8xf32> -> vector<9x8xf32>
    %72 = arith.addf %69, %71 : vector<9x8xf32>
    %c0_40 = arith.constant 0 : index
    %c8_41 = arith.constant 8 : index
    %73 = vector.load %arg8[%c0_40, %c8_41] : memref<9x32xf32, #tpu.memory_space<vmem>>, vector<9x8xf32>
    tpu.vector_store %arg8[%c0_40, %c8_41], %72 {strides = array<i32>} : memref<9x32xf32, #tpu.memory_space<vmem>>, vector<9x8xf32>,
    %c1_42 = arith.constant 1 : index
    %c0_43 = arith.constant 0 : index
    %c0_44 = arith.constant 0 : index
    %74 = vector.load %arg6[%c1_42, %c0_43, %c0_44] : memref<4x9x1xf32, #tpu.memory_space<vmem>>, vector<1x9x1xf32>
    %75 = vector.shape_cast %74 : vector<1x9x1xf32> to vector<9x1xf32>
    %76 = vector.shape_cast %54 : vector<9x1xf32> to vector<1x9x1xf32>
    tpu.vector_store %arg6[%c1_42, %c0_43, %c0_44], %76 {strides = array<i32>} : memref<4x9x1xf32, #tpu.memory_space<vmem>>, vector<1x9x1xf32>,
    %77 = vector.extract_strided_slice %4 {offsets = [0, 16], sizes = [9, 8], strides = [1, 1]} : vector<9x32xbf16> to vector<9x8xbf16>
    %78 = vector.extract_strided_slice %6 {offsets = [0, 16], sizes = [9, 8], strides = [1, 1]} : vector<9x64xbf16> to vector<9x8xbf16>
    %79 = vector.extract_strided_slice %6 {offsets = [0, 48], sizes = [9, 8], strides = [1, 1]} : vector<9x64xbf16> to vector<9x8xbf16>
    %cst_45 = arith.constant dense<0.000000e+00> : vector<9x9xf32>
    %80 = tpu.matmul %77, %78, %cst_45 {dimension_numbers = #tpu.dot_dimension_numbers<[1], [1], [0], [0], [0, 0, 1, 0], [], []>} : vector<9x8xbf16>, vector<9x8xbf16>, vector<9x9xf32> -> vector<9x9xf32>
    %cst_46 = arith.constant 0.353553385 : f32
    %81 = vector.broadcast %cst_46 : f32 to vector<9x9xf32>
    %82 = arith.mulf %80, %81 : vector<9x9xf32>
    %c2 = arith.constant 2 : index
    %c0_47 = arith.constant 0 : index
    %c0_48 = arith.constant 0 : index
    %83 = vector.load %arg6[%c2, %c0_47, %c0_48] : memref<4x9x1xf32, #tpu.memory_space<vmem>>, vector<1x9x1xf32>
    %84 = vector.shape_cast %83 : vector<1x9x1xf32> to vector<9x1xf32>
    %c2_49 = arith.constant 2 : index
    %c0_50 = arith.constant 0 : index
    %c0_51 = arith.constant 0 : index
    %85 = vector.load %arg7[%c2_49, %c0_50, %c0_51] : memref<4x9x1xf32, #tpu.memory_space<vmem>>, vector<1x9x1xf32>
    %86 = vector.shape_cast %85 : vector<1x9x1xf32> to vector<9x1xf32>
    %cst_52 = arith.constant dense<0xFF800000> : vector<9xf32>
    %87 = vector.multi_reduction <maximumf>, %82, %cst_52 [1] : vector<9x9xf32> to vector<9xf32>
    %88 = vector.shape_cast %87 : vector<9xf32> to vector<9x1xf32>
    %89 = arith.maximumf %84, %88 : vector<9x1xf32>
    %90 = arith.subf %84, %89 : vector<9x1xf32>
    %91 = math.exp %90 : vector<9x1xf32>
    %92 = vector.broadcast %89 : vector<9x1xf32> to vector<9x9xf32>
    %93 = arith.subf %82, %92 : vector<9x9xf32>
    %94 = math.exp %93 : vector<9x9xf32>
    %95 = arith.mulf %91, %86 : vector<9x1xf32>
    %cst_53 = arith.constant dense<0.000000e+00> : vector<9xf32>
    %96 = vector.multi_reduction <add>, %94, %cst_53 [1] : vector<9x9xf32> to vector<9xf32>
    %97 = vector.shape_cast %96 : vector<9xf32> to vector<9x1xf32>
    %98 = arith.addf %95, %97 : vector<9x1xf32>
    %c2_54 = arith.constant 2 : index
    %c0_55 = arith.constant 0 : index
    %c0_56 = arith.constant 0 : index
    %99 = vector.load %arg7[%c2_54, %c0_55, %c0_56] : memref<4x9x1xf32, #tpu.memory_space<vmem>>, vector<1x9x1xf32>
    %100 = vector.shape_cast %99 : vector<1x9x1xf32> to vector<9x1xf32>
    %101 = vector.shape_cast %98 : vector<9x1xf32> to vector<1x9x1xf32>
    tpu.vector_store %arg7[%c2_54, %c0_55, %c0_56], %101 {strides = array<i32>} : memref<4x9x1xf32, #tpu.memory_space<vmem>>, vector<1x9x1xf32>,
    %c0_57 = arith.constant 0 : index
    %c16 = arith.constant 16 : index
    %102 = vector.load %arg8[%c0_57, %c16] : memref<9x32xf32, #tpu.memory_space<vmem>>, vector<9x8xf32>
    %103 = vector.broadcast %91 : vector<9x1xf32> to vector<9x8xf32>
    %104 = arith.mulf %103, %102 : vector<9x8xf32>
    %105 = arith.truncf %94 : vector<9x9xf32> to vector<9x9xbf16>
    %cst_58 = arith.constant dense<0.000000e+00> : vector<9x8xf32>
    %106 = tpu.matmul %105, %79, %cst_58 {dimension_numbers = #tpu.dot_dimension_numbers<[1], [0], [0], [1], [0, 0, 1, 1], [], []>} : vector<9x9xbf16>, vector<9x8xbf16>, vector<9x8xf32> -> vector<9x8xf32>
    %107 = arith.addf %104, %106 : vector<9x8xf32>
    %c0_59 = arith.constant 0 : index
    %c16_60 = arith.constant 16 : index
    %108 = vector.load %arg8[%c0_59, %c16_60] : memref<9x32xf32, #tpu.memory_space<vmem>>, vector<9x8xf32>
    tpu.vector_store %arg8[%c0_59, %c16_60], %107 {strides = array<i32>} : memref<9x32xf32, #tpu.memory_space<vmem>>, vector<9x8xf32>,
    %c2_61 = arith.constant 2 : index
    %c0_62 = arith.constant 0 : index
    %c0_63 = arith.constant 0 : index
    %109 = vector.load %arg6[%c2_61, %c0_62, %c0_63] : memref<4x9x1xf32, #tpu.memory_space<vmem>>, vector<1x9x1xf32>
    %110 = vector.shape_cast %109 : vector<1x9x1xf32> to vector<9x1xf32>
    %111 = vector.shape_cast %89 : vector<9x1xf32> to vector<1x9x1xf32>
    tpu.vector_store %arg6[%c2_61, %c0_62, %c0_63], %111 {strides = array<i32>} : memref<4x9x1xf32, #tpu.memory_space<vmem>>, vector<1x9x1xf32>,
    %112 = vector.extract_strided_slice %4 {offsets = [0, 24], sizes = [9, 8], strides = [1, 1]} : vector<9x32xbf16> to vector<9x8xbf16>
    %113 = vector.extract_strided_slice %6 {offsets = [0, 24], sizes = [9, 8], strides = [1, 1]} : vector<9x64xbf16> to vector<9x8xbf16>
    %114 = vector.extract_strided_slice %6 {offsets = [0, 56], sizes = [9, 8], strides = [1, 1]} : vector<9x64xbf16> to vector<9x8xbf16>
    %cst_64 = arith.constant dense<0.000000e+00> : vector<9x9xf32>
    %115 = tpu.matmul %112, %113, %cst_64 {dimension_numbers = #tpu.dot_dimension_numbers<[1], [1], [0], [0], [0, 0, 1, 0], [], []>} : vector<9x8xbf16>, vector<9x8xbf16>, vector<9x9xf32> -> vector<9x9xf32>
    %cst_65 = arith.constant 0.353553385 : f32
    %116 = vector.broadcast %cst_65 : f32 to vector<9x9xf32>
    %117 = arith.mulf %115, %116 : vector<9x9xf32>
    %c3 = arith.constant 3 : index
    %c0_66 = arith.constant 0 : index
    %c0_67 = arith.constant 0 : index
    %118 = vector.load %arg6[%c3, %c0_66, %c0_67] : memref<4x9x1xf32, #tpu.memory_space<vmem>>, vector<1x9x1xf32>
    %119 = vector.shape_cast %118 : vector<1x9x1xf32> to vector<9x1xf32>
    %c3_68 = arith.constant 3 : index
    %c0_69 = arith.constant 0 : index
    %c0_70 = arith.constant 0 : index
    %120 = vector.load %arg7[%c3_68, %c0_69, %c0_70] : memref<4x9x1xf32, #tpu.memory_space<vmem>>, vector<1x9x1xf32>
    %121 = vector.shape_cast %120 : vector<1x9x1xf32> to vector<9x1xf32>
    %cst_71 = arith.constant dense<0xFF800000> : vector<9xf32>
    %122 = vector.multi_reduction <maximumf>, %117, %cst_71 [1] : vector<9x9xf32> to vector<9xf32>
    %123 = vector.shape_cast %122 : vector<9xf32> to vector<9x1xf32>
    %124 = arith.maximumf %119, %123 : vector<9x1xf32>
    %125 = arith.subf %119, %124 : vector<9x1xf32>
    %126 = math.exp %125 : vector<9x1xf32>
    %127 = vector.broadcast %124 : vector<9x1xf32> to vector<9x9xf32>
    %128 = arith.subf %117, %127 : vector<9x9xf32>
    %129 = math.exp %128 : vector<9x9xf32>
    %130 = arith.mulf %126, %121 : vector<9x1xf32>
    %cst_72 = arith.constant dense<0.000000e+00> : vector<9xf32>
    %131 = vector.multi_reduction <add>, %129, %cst_72 [1] : vector<9x9xf32> to vector<9xf32>
    %132 = vector.shape_cast %131 : vector<9xf32> to vector<9x1xf32>
    %133 = arith.addf %130, %132 : vector<9x1xf32>
    %c3_73 = arith.constant 3 : index
    %c0_74 = arith.constant 0 : index
    %c0_75 = arith.constant 0 : index
    %134 = vector.load %arg7[%c3_73, %c0_74, %c0_75] : memref<4x9x1xf32, #tpu.memory_space<vmem>>, vector<1x9x1xf32>
    %135 = vector.shape_cast %134 : vector<1x9x1xf32> to vector<9x1xf32>
    %136 = vector.shape_cast %133 : vector<9x1xf32> to vector<1x9x1xf32>
    tpu.vector_store %arg7[%c3_73, %c0_74, %c0_75], %136 {strides = array<i32>} : memref<4x9x1xf32, #tpu.memory_space<vmem>>, vector<1x9x1xf32>,
    %c0_76 = arith.constant 0 : index
    %c24 = arith.constant 24 : index
    %137 = vector.load %arg8[%c0_76, %c24] : memref<9x32xf32, #tpu.memory_space<vmem>>, vector<9x8xf32>
    %138 = vector.broadcast %126 : vector<9x1xf32> to vector<9x8xf32>
    %139 = arith.mulf %138, %137 : vector<9x8xf32>
    %140 = arith.truncf %129 : vector<9x9xf32> to vector<9x9xbf16>
    %cst_77 = arith.constant dense<0.000000e+00> : vector<9x8xf32>
    %141 = tpu.matmul %140, %114, %cst_77 {dimension_numbers = #tpu.dot_dimension_numbers<[1], [0], [0], [1], [0, 0, 1, 1], [], []>} : vector<9x9xbf16>, vector<9x8xbf16>, vector<9x8xf32> -> vector<9x8xf32>
    %142 = arith.addf %139, %141 : vector<9x8xf32>
    %c0_78 = arith.constant 0 : index
    %c24_79 = arith.constant 24 : index
    %143 = vector.load %arg8[%c0_78, %c24_79] : memref<9x32xf32, #tpu.memory_space<vmem>>, vector<9x8xf32>
    tpu.vector_store %arg8[%c0_78, %c24_79], %142 {strides = array<i32>} : memref<9x32xf32, #tpu.memory_space<vmem>>, vector<9x8xf32>,
    %c3_80 = arith.constant 3 : index
    %c0_81 = arith.constant 0 : index
    %c0_82 = arith.constant 0 : index
    %144 = vector.load %arg6[%c3_80, %c0_81, %c0_82] : memref<4x9x1xf32, #tpu.memory_space<vmem>>, vector<1x9x1xf32>
    %145 = vector.shape_cast %144 : vector<1x9x1xf32> to vector<9x1xf32>
    %146 = vector.shape_cast %124 : vector<9x1xf32> to vector<1x9x1xf32>
    tpu.vector_store %arg6[%c3_80, %c0_81, %c0_82], %146 {strides = array<i32>} : memref<4x9x1xf32, #tpu.memory_space<vmem>>, vector<1x9x1xf32>,
    %c0_i32_83 = arith.constant 0 : i32
    %147 = arith.cmpi eq, %arg2, %c0_i32_83 : i32
    %148 = arith.extui %147 : i1 to i32
    %c0_i32_84 = arith.constant 0 : i32
    %149 = arith.cmpi ne, %148, %c0_i32_84 : i32
    scf.if %149 {
      %c0_85 = arith.constant 0 : index
      %c0_86 = arith.constant 0 : index
      %150 = vector.load %arg8[%c0_85, %c0_86] : memref<9x32xf32, #tpu.memory_space<vmem>>, vector<9x8xf32>
      %c0_87 = arith.constant 0 : index
      %c0_88 = arith.constant 0 : index
      %c0_89 = arith.constant 0 : index
      %151 = vector.load %arg7[%c0_87, %c0_88, %c0_89] : memref<4x9x1xf32, #tpu.memory_space<vmem>>, vector<1x9x1xf32>
      %152 = vector.shape_cast %151 : vector<1x9x1xf32> to vector<9x1xf32>
      %153 = vector.broadcast %152 : vector<9x1xf32> to vector<9x8xf32>
      %154 = arith.divf %150, %153 : vector<9x8xf32>
      %155 = arith.truncf %154 : vector<9x8xf32> to vector<9x8xbf16>
      %c0_90 = arith.constant 0 : index
      %c0_91 = arith.constant 0 : index
      %c0_92 = arith.constant 0 : index
      %156 = vector.load %arg5[%c0_90, %c0_91, %c0_92] : memref<1x9x32xbf16, #tpu.memory_space<vmem>>, vector<1x9x8xbf16>
      %157 = vector.shape_cast %156 : vector<1x9x8xbf16> to vector<9x8xbf16>
      %158 = vector.shape_cast %155 : vector<9x8xbf16> to vector<1x9x8xbf16>
      tpu.vector_store %arg5[%c0_90, %c0_91, %c0_92], %158 {strides = array<i32>} : memref<1x9x32xbf16, #tpu.memory_space<vmem>>, vector<1x9x8xbf16>,
      %c0_93 = arith.constant 0 : index
      %c8_94 = arith.constant 8 : index
      %159 = vector.load %arg8[%c0_93, %c8_94] : memref<9x32xf32, #tpu.memory_space<vmem>>, vector<9x8xf32>
      %c1_95 = arith.constant 1 : index
      %c0_96 = arith.constant 0 : index
      %c0_97 = arith.constant 0 : index
      %160 = vector.load %arg7[%c1_95, %c0_96, %c0_97] : memref<4x9x1xf32, #tpu.memory_space<vmem>>, vector<1x9x1xf32>
      %161 = vector.shape_cast %160 : vector<1x9x1xf32> to vector<9x1xf32>
      %162 = vector.broadcast %161 : vector<9x1xf32> to vector<9x8xf32>
      %163 = arith.divf %159, %162 : vector<9x8xf32>
      %164 = arith.truncf %163 : vector<9x8xf32> to vector<9x8xbf16>
      %c0_98 = arith.constant 0 : index
      %c0_99 = arith.constant 0 : index
      %c8_100 = arith.constant 8 : index
      %165 = vector.load %arg5[%c0_98, %c0_99, %c8_100] : memref<1x9x32xbf16, #tpu.memory_space<vmem>>, vector<1x9x8xbf16>
      %166 = vector.shape_cast %165 : vector<1x9x8xbf16> to vector<9x8xbf16>
      %167 = vector.shape_cast %164 : vector<9x8xbf16> to vector<1x9x8xbf16>
      tpu.vector_store %arg5[%c0_98, %c0_99, %c8_100], %167 {strides = array<i32>} : memref<1x9x32xbf16, #tpu.memory_space<vmem>>, vector<1x9x8xbf16>,
      %c0_101 = arith.constant 0 : index
      %c16_102 = arith.constant 16 : index
      %168 = vector.load %arg8[%c0_101, %c16_102] : memref<9x32xf32, #tpu.memory_space<vmem>>, vector<9x8xf32>
      %c2_103 = arith.constant 2 : index
      %c0_104 = arith.constant 0 : index
      %c0_105 = arith.constant 0 : index
      %169 = vector.load %arg7[%c2_103, %c0_104, %c0_105] : memref<4x9x1xf32, #tpu.memory_space<vmem>>, vector<1x9x1xf32>
      %170 = vector.shape_cast %169 : vector<1x9x1xf32> to vector<9x1xf32>
      %171 = vector.broadcast %170 : vector<9x1xf32> to vector<9x8xf32>
      %172 = arith.divf %168, %171 : vector<9x8xf32>
      %173 = arith.truncf %172 : vector<9x8xf32> to vector<9x8xbf16>
      %c0_106 = arith.constant 0 : index
      %c0_107 = arith.constant 0 : index
      %c16_108 = arith.constant 16 : index
      %174 = vector.load %arg5[%c0_106, %c0_107, %c16_108] : memref<1x9x32xbf16, #tpu.memory_space<vmem>>, vector<1x9x8xbf16>
      %175 = vector.shape_cast %174 : vector<1x9x8xbf16> to vector<9x8xbf16>
      %176 = vector.shape_cast %173 : vector<9x8xbf16> to vector<1x9x8xbf16>
      tpu.vector_store %arg5[%c0_106, %c0_107, %c16_108], %176 {strides = array<i32>} : memref<1x9x32xbf16, #tpu.memory_space<vmem>>, vector<1x9x8xbf16>,
      %c0_109 = arith.constant 0 : index
      %c24_110 = arith.constant 24 : index
      %177 = vector.load %arg8[%c0_109, %c24_110] : memref<9x32xf32, #tpu.memory_space<vmem>>, vector<9x8xf32>
      %c3_111 = arith.constant 3 : index
      %c0_112 = arith.constant 0 : index
      %c0_113 = arith.constant 0 : index
      %178 = vector.load %arg7[%c3_111, %c0_112, %c0_113] : memref<4x9x1xf32, #tpu.memory_space<vmem>>, vector<1x9x1xf32>
      %179 = vector.shape_cast %178 : vector<1x9x1xf32> to vector<9x1xf32>
      %180 = vector.broadcast %179 : vector<9x1xf32> to vector<9x8xf32>
      %181 = arith.divf %177, %180 : vector<9x8xf32>
      %182 = arith.truncf %181 : vector<9x8xf32> to vector<9x8xbf16>
      %c0_114 = arith.constant 0 : index
      %c0_115 = arith.constant 0 : index
      %c24_116 = arith.constant 24 : index
      %183 = vector.load %arg5[%c0_114, %c0_115, %c24_116] : memref<1x9x32xbf16, #tpu.memory_space<vmem>>, vector<1x9x8xbf16>
      %184 = vector.shape_cast %183 : vector<1x9x8xbf16> to vector<9x8xbf16>
      %185 = vector.shape_cast %182 : vector<9x8xbf16> to vector<1x9x8xbf16>
      tpu.vector_store %arg5[%c0_114, %c0_115, %c24_116], %185 {strides = array<i32>} : memref<1x9x32xbf16, #tpu.memory_space<vmem>>, vector<1x9x8xbf16>,
    } else {
    }
    return
  }
  func.func @transform_0(%arg0: i32, %arg1: i32, %arg2: i32) -> (i32, i32, i32) {
    %c0_i32 = arith.constant 0 : i32
    %c0_i32_0 = arith.constant 0 : i32
    return %arg0, %arg1, %c0_i32 : i32, i32, i32
  }
  func.func @transform_1(%arg0: i32, %arg1: i32, %arg2: i32) -> (i32, i32, i32) {
    %c0_i32 = arith.constant 0 : i32
    %c0_i32_0 = arith.constant 0 : i32
    return %arg0, %arg2, %c0_i32 : i32, i32, i32
  }
  func.func @transform_2(%arg0: i32, %arg1: i32, %arg2: i32) -> (i32, i32, i32) {
    %c0_i32 = arith.constant 0 : i32
    %c0_i32_0 = arith.constant 0 : i32
    return %arg0, %arg1, %c0_i32 : i32, i32, i32
  }
}

module attributes {stable_mosaic.version = 11 : i64} {
  func.func @kernel(%arg0: i32, %arg1: i32, %arg2: memref<18x32xbf16, #tpu.memory_space<vmem>>, %arg3: memref<1x32xf32, #tpu.memory_space<vmem>>, %arg4: memref<1x32xf32, #tpu.memory_space<vmem>>, %arg5: memref<32x64xbf16, #tpu.memory_space<vmem>>, %arg6: memref<1x64xf32, #tpu.memory_space<vmem>>, %arg7: memref<18x64xbf16, #tpu.memory_space<vmem>>, %arg8: memref<18x32xbf16, #tpu.memory_space<vmem>>) attributes {dimension_semantics = [#tpu.dimension_semantics<parallel>, #tpu.dimension_semantics<arbitrary>], iteration_bounds = array<i64: 1, 1>, scalar_prefetch = 0 : i64, scratch_operands = 1 : i64, tpu.core_type = #tpu.core_type<tc>, window_params = [{transform_indices = @transform_0, window_bounds = array<i64: 18, 32>}, {pipeline_mode = #tpu.pipeline_mode<synchronous>, transform_indices = @transform_1, window_bounds = array<i64: 1, 32>}, {pipeline_mode = #tpu.pipeline_mode<synchronous>, transform_indices = @transform_2, window_bounds = array<i64: 1, 32>}, {transform_indices = @transform_3, window_bounds = array<i64: 32, 64>}, {transform_indices = @transform_4, window_bounds = array<i64: 1, 64>}, {transform_indices = @transform_5, window_bounds = array<i64: 18, 64>}]} {
    %c0_i32 = arith.constant 0 : i32
    %0 = arith.cmpi eq, %arg1, %c0_i32 : i32
    %1 = arith.extui %0 : i1 to i32
    %c0_i32_0 = arith.constant 0 : i32
    %2 = arith.cmpi ne, %1, %c0_i32_0 : i32
    scf.if %2 {
      %c0_11 = arith.constant 0 : index
      %c0_12 = arith.constant 0 : index
      %19 = vector.load %arg2[%c0_11, %c0_12] : memref<18x32xbf16, #tpu.memory_space<vmem>>, vector<18x32xbf16>
      %20 = arith.extf %19 : vector<18x32xbf16> to vector<18x32xf32>
      %cst_13 = arith.constant dense<0.000000e+00> : vector<18xf32>
      %21 = vector.multi_reduction <add>, %20, %cst_13 [1] : vector<18x32xf32> to vector<18xf32>
      %22 = vector.shape_cast %21 : vector<18xf32> to vector<18x1xf32>
      %cst_14 = arith.constant 3.200000e+01 : f32
      %23 = vector.broadcast %cst_14 : f32 to vector<18x1xf32>
      %24 = arith.divf %22, %23 : vector<18x1xf32>
      %25 = vector.broadcast %24 : vector<18x1xf32> to vector<18x32xf32>
      %26 = arith.subf %20, %25 : vector<18x32xf32>
      %27 = arith.mulf %26, %26 : vector<18x32xf32>
      %cst_15 = arith.constant dense<0.000000e+00> : vector<18xf32>
      %28 = vector.multi_reduction <add>, %27, %cst_15 [1] : vector<18x32xf32> to vector<18xf32>
      %29 = vector.shape_cast %28 : vector<18xf32> to vector<18x1xf32>
      %cst_16 = arith.constant 3.200000e+01 : f32
      %30 = vector.broadcast %cst_16 : f32 to vector<18x1xf32>
      %31 = arith.divf %29, %30 : vector<18x1xf32>
      %32 = vector.broadcast %24 : vector<18x1xf32> to vector<18x32xf32>
      %33 = arith.subf %20, %32 : vector<18x32xf32>
      %cst_17 = arith.constant 9.99999974E-6 : f32
      %34 = vector.broadcast %cst_17 : f32 to vector<18x1xf32>
      %35 = arith.addf %31, %34 : vector<18x1xf32>
      %36 = math.rsqrt %35 : vector<18x1xf32>
      %37 = vector.broadcast %36 : vector<18x1xf32> to vector<18x32xf32>
      %38 = arith.mulf %33, %37 : vector<18x32xf32>
      %c0_18 = arith.constant 0 : index
      %c0_19 = arith.constant 0 : index
      %39 = vector.load %arg3[%c0_18, %c0_19] : memref<1x32xf32, #tpu.memory_space<vmem>>, vector<1x32xf32>
      %40 = vector.broadcast %39 : vector<1x32xf32> to vector<18x32xf32>
      %41 = arith.mulf %38, %40 : vector<18x32xf32>
      %c0_20 = arith.constant 0 : index
      %c0_21 = arith.constant 0 : index
      %42 = vector.load %arg4[%c0_20, %c0_21] : memref<1x32xf32, #tpu.memory_space<vmem>>, vector<1x32xf32>
      %43 = vector.broadcast %42 : vector<1x32xf32> to vector<18x32xf32>
      %44 = arith.addf %41, %43 : vector<18x32xf32>
      %45 = arith.truncf %44 : vector<18x32xf32> to vector<18x32xbf16>
      %c0_22 = arith.constant 0 : index
      %c0_23 = arith.constant 0 : index
      %46 = vector.load %arg8[%c0_22, %c0_23] : memref<18x32xbf16, #tpu.memory_space<vmem>>, vector<18x32xbf16>
      tpu.vector_store %arg8[%c0_22, %c0_23], %45 {strides = array<i32>} : memref<18x32xbf16, #tpu.memory_space<vmem>>, vector<18x32xbf16>,
    } else {
    }
    %c0 = arith.constant 0 : index
    %c0_1 = arith.constant 0 : index
    %3 = vector.load %arg8[%c0, %c0_1] : memref<18x32xbf16, #tpu.memory_space<vmem>>, vector<18x32xbf16>
    %c0_2 = arith.constant 0 : index
    %c0_3 = arith.constant 0 : index
    %4 = vector.load %arg5[%c0_2, %c0_3] : memref<32x64xbf16, #tpu.memory_space<vmem>>, vector<32x64xbf16>
    %cst = arith.constant dense<0.000000e+00> : vector<18x64xf32>
    %5 = tpu.matmul %3, %4, %cst {dimension_numbers = #tpu.dot_dimension_numbers<[1], [0], [0], [1], [0, 0, 1, 1], [], []>} : vector<18x32xbf16>, vector<32x64xbf16>, vector<18x64xf32> -> vector<18x64xf32>
    %c0_4 = arith.constant 0 : index
    %c0_5 = arith.constant 0 : index
    %6 = vector.load %arg6[%c0_4, %c0_5] : memref<1x64xf32, #tpu.memory_space<vmem>>, vector<1x64xf32>
    %7 = vector.broadcast %6 : vector<1x64xf32> to vector<18x64xf32>
    %8 = arith.addf %5, %7 : vector<18x64xf32>
    %cst_6 = arith.constant 5.000000e-01 : f32
    %9 = vector.broadcast %cst_6 : f32 to vector<18x64xf32>
    %10 = arith.mulf %9, %8 : vector<18x64xf32>
    %cst_7 = arith.constant 0.707106769 : f32
    %11 = vector.broadcast %cst_7 : f32 to vector<18x64xf32>
    %12 = arith.mulf %8, %11 : vector<18x64xf32>
    %13 = math.erf %12 : vector<18x64xf32>
    %cst_8 = arith.constant 1.000000e+00 : f32
    %14 = vector.broadcast %cst_8 : f32 to vector<18x64xf32>
    %15 = arith.addf %14, %13 : vector<18x64xf32>
    %16 = arith.mulf %10, %15 : vector<18x64xf32>
    %17 = arith.truncf %16 : vector<18x64xf32> to vector<18x64xbf16>
    %c0_9 = arith.constant 0 : index
    %c0_10 = arith.constant 0 : index
    %18 = vector.load %arg7[%c0_9, %c0_10] : memref<18x64xbf16, #tpu.memory_space<vmem>>, vector<18x64xbf16>
    tpu.vector_store %arg7[%c0_9, %c0_10], %17 {strides = array<i32>} : memref<18x64xbf16, #tpu.memory_space<vmem>>, vector<18x64xbf16>,
    return
  }
  func.func @transform_0(%arg0: i32, %arg1: i32) -> (i32, i32) {
    %c0_i32 = arith.constant 0 : i32
    %c0_i32_0 = arith.constant 0 : i32
    return %arg0, %c0_i32 : i32, i32
  }
  func.func @transform_1(%arg0: i32, %arg1: i32) -> (i32, i32) {
    %c0_i32 = arith.constant 0 : i32
    %c0_i32_0 = arith.constant 0 : i32
    %c0_i32_1 = arith.constant 0 : i32
    return %c0_i32, %c0_i32_0 : i32, i32
  }
  func.func @transform_2(%arg0: i32, %arg1: i32) -> (i32, i32) {
    %c0_i32 = arith.constant 0 : i32
    %c0_i32_0 = arith.constant 0 : i32
    %c0_i32_1 = arith.constant 0 : i32
    return %c0_i32, %c0_i32_0 : i32, i32
  }
  func.func @transform_3(%arg0: i32, %arg1: i32) -> (i32, i32) {
    %c0_i32 = arith.constant 0 : i32
    %c0_i32_0 = arith.constant 0 : i32
    return %c0_i32, %arg1 : i32, i32
  }
  func.func @transform_4(%arg0: i32, %arg1: i32) -> (i32, i32) {
    %c0_i32 = arith.constant 0 : i32
    %c0_i32_0 = arith.constant 0 : i32
    return %c0_i32, %arg1 : i32, i32
  }
  func.func @transform_5(%arg0: i32, %arg1: i32) -> (i32, i32) {
    %c0_i32 = arith.constant 0 : i32
    return %arg0, %arg1 : i32, i32
  }
}

module attributes {stable_mosaic.version = 11 : i64} {
  func.func @kernel(%arg0: i32, %arg1: i32, %arg2: i32, %arg3: memref<18x64xbf16, #tpu.memory_space<vmem>>, %arg4: memref<64x32xbf16, #tpu.memory_space<vmem>>, %arg5: memref<1x32xf32, #tpu.memory_space<vmem>>, %arg6: memref<18x32xbf16, #tpu.memory_space<vmem>>, %arg7: memref<18x32xbf16, #tpu.memory_space<vmem>>, %arg8: memref<18x32xf32, #tpu.memory_space<vmem>>) attributes {dimension_semantics = [#tpu.dimension_semantics<parallel>, #tpu.dimension_semantics<parallel>, #tpu.dimension_semantics<arbitrary>], iteration_bounds = array<i64: 1, 1, 1>, scalar_prefetch = 0 : i64, scratch_operands = 1 : i64, tpu.core_type = #tpu.core_type<tc>, window_params = [{transform_indices = @transform_0, window_bounds = array<i64: 18, 64>}, {transform_indices = @transform_1, window_bounds = array<i64: 64, 32>}, {transform_indices = @transform_2, window_bounds = array<i64: 1, 32>}, {transform_indices = @transform_3, window_bounds = array<i64: 18, 32>}, {transform_indices = @transform_4, window_bounds = array<i64: 18, 32>}]} {
    %c0_i32 = arith.constant 0 : i32
    %0 = arith.cmpi eq, %arg2, %c0_i32 : i32
    %1 = arith.extui %0 : i1 to i32
    %c0_i32_0 = arith.constant 0 : i32
    %2 = arith.cmpi ne, %1, %c0_i32_0 : i32
    scf.if %2 {
      %cst_10 = arith.constant 0.000000e+00 : f32
      %12 = vector.broadcast %cst_10 : f32 to vector<18x32xf32>
      %c0_11 = arith.constant 0 : index
      %c0_12 = arith.constant 0 : index
      %13 = vector.load %arg8[%c0_11, %c0_12] : memref<18x32xf32, #tpu.memory_space<vmem>>, vector<18x32xf32>
      tpu.vector_store %arg8[%c0_11, %c0_12], %12 {strides = array<i32>} : memref<18x32xf32, #tpu.memory_space<vmem>>, vector<18x32xf32>,
    } else {
    }
    %c0 = arith.constant 0 : index
    %c0_1 = arith.constant 0 : index
    %3 = vector.load %arg8[%c0, %c0_1] : memref<18x32xf32, #tpu.memory_space<vmem>>, vector<18x32xf32>
    %c0_2 = arith.constant 0 : index
    %c0_3 = arith.constant 0 : index
    %4 = vector.load %arg3[%c0_2, %c0_3] : memref<18x64xbf16, #tpu.memory_space<vmem>>, vector<18x64xbf16>
    %c0_4 = arith.constant 0 : index
    %c0_5 = arith.constant 0 : index
    %5 = vector.load %arg4[%c0_4, %c0_5] : memref<64x32xbf16, #tpu.memory_space<vmem>>, vector<64x32xbf16>
    %cst = arith.constant dense<0.000000e+00> : vector<18x32xf32>
    %6 = tpu.matmul %4, %5, %cst {dimension_numbers = #tpu.dot_dimension_numbers<[1], [0], [0], [1], [0, 0, 1, 1], [], []>} : vector<18x64xbf16>, vector<64x32xbf16>, vector<18x32xf32> -> vector<18x32xf32>
    %7 = arith.addf %3, %6 : vector<18x32xf32>
    %c0_6 = arith.constant 0 : index
    %c0_7 = arith.constant 0 : index
    %8 = vector.load %arg8[%c0_6, %c0_7] : memref<18x32xf32, #tpu.memory_space<vmem>>, vector<18x32xf32>
    tpu.vector_store %arg8[%c0_6, %c0_7], %7 {strides = array<i32>} : memref<18x32xf32, #tpu.memory_space<vmem>>, vector<18x32xf32>,
    %c0_i32_8 = arith.constant 0 : i32
    %9 = arith.cmpi eq, %arg2, %c0_i32_8 : i32
    %10 = arith.extui %9 : i1 to i32
    %c0_i32_9 = arith.constant 0 : i32
    %11 = arith.cmpi ne, %10, %c0_i32_9 : i32
    scf.if %11 {
      %c0_10 = arith.constant 0 : index
      %c0_11 = arith.constant 0 : index
      %12 = vector.load %arg8[%c0_10, %c0_11] : memref<18x32xf32, #tpu.memory_space<vmem>>, vector<18x32xf32>
      %c0_12 = arith.constant 0 : index
      %c0_13 = arith.constant 0 : index
      %13 = vector.load %arg5[%c0_12, %c0_13] : memref<1x32xf32, #tpu.memory_space<vmem>>, vector<1x32xf32>
      %14 = vector.broadcast %13 : vector<1x32xf32> to vector<18x32xf32>
      %15 = arith.addf %12, %14 : vector<18x32xf32>
      %c0_14 = arith.constant 0 : index
      %c0_15 = arith.constant 0 : index
      %16 = vector.load %arg6[%c0_14, %c0_15] : memref<18x32xbf16, #tpu.memory_space<vmem>>, vector<18x32xbf16>
      %17 = arith.extf %16 : vector<18x32xbf16> to vector<18x32xf32>
      %18 = arith.addf %15, %17 : vector<18x32xf32>
      %19 = arith.truncf %18 : vector<18x32xf32> to vector<18x32xbf16>
      %c0_16 = arith.constant 0 : index
      %c0_17 = arith.constant 0 : index
      %20 = vector.load %arg7[%c0_16, %c0_17] : memref<18x32xbf16, #tpu.memory_space<vmem>>, vector<18x32xbf16>
      tpu.vector_store %arg7[%c0_16, %c0_17], %19 {strides = array<i32>} : memref<18x32xbf16, #tpu.memory_space<vmem>>, vector<18x32xbf16>,
    } else {
    }
    return
  }
  func.func @transform_0(%arg0: i32, %arg1: i32, %arg2: i32) -> (i32, i32) {
    %c0_i32 = arith.constant 0 : i32
    return %arg0, %arg2 : i32, i32
  }
  func.func @transform_1(%arg0: i32, %arg1: i32, %arg2: i32) -> (i32, i32) {
    %c0_i32 = arith.constant 0 : i32
    return %arg2, %arg1 : i32, i32
  }
  func.func @transform_2(%arg0: i32, %arg1: i32, %arg2: i32) -> (i32, i32) {
    %c0_i32 = arith.constant 0 : i32
    %c0_i32_0 = arith.constant 0 : i32
    return %c0_i32, %arg1 : i32, i32
  }
  func.func @transform_3(%arg0: i32, %arg1: i32, %arg2: i32) -> (i32, i32) {
    %c0_i32 = arith.constant 0 : i32
    return %arg0, %arg1 : i32, i32
  }
  func.func @transform_4(%arg0: i32, %arg1: i32, %arg2: i32) -> (i32, i32) {
    %c0_i32 = arith.constant 0 : i32
    return %arg0, %arg1 : i32, i32
  }
}

module attributes {stable_mosaic.version = 11 : i64} {
  func.func @kernel(%arg0: i32, %arg1: i32, %arg2: i32, %arg3: memref<18x32xbf16, #tpu.memory_space<vmem>>, %arg4: memref<32x32xbf16, #tpu.memory_space<vmem>>, %arg5: memref<1x32xf32, #tpu.memory_space<vmem>>, %arg6: memref<18x32xbf16, #tpu.memory_space<vmem>>, %arg7: memref<18x32xbf16, #tpu.memory_space<vmem>>, %arg8: memref<18x32xf32, #tpu.memory_space<vmem>>) attributes {dimension_semantics = [#tpu.dimension_semantics<parallel>, #tpu.dimension_semantics<parallel>, #tpu.dimension_semantics<arbitrary>], iteration_bounds = array<i64: 1, 1, 1>, scalar_prefetch = 0 : i64, scratch_operands = 1 : i64, tpu.core_type = #tpu.core_type<tc>, window_params = [{transform_indices = @transform_0, window_bounds = array<i64: 18, 32>}, {transform_indices = @transform_1, window_bounds = array<i64: 32, 32>}, {transform_indices = @transform_2, window_bounds = array<i64: 1, 32>}, {transform_indices = @transform_3, window_bounds = array<i64: 18, 32>}, {transform_indices = @transform_4, window_bounds = array<i64: 18, 32>}]} {
    %c0_i32 = arith.constant 0 : i32
    %0 = arith.cmpi eq, %arg2, %c0_i32 : i32
    %1 = arith.extui %0 : i1 to i32
    %c0_i32_0 = arith.constant 0 : i32
    %2 = arith.cmpi ne, %1, %c0_i32_0 : i32
    scf.if %2 {
      %cst_10 = arith.constant 0.000000e+00 : f32
      %12 = vector.broadcast %cst_10 : f32 to vector<18x32xf32>
      %c0_11 = arith.constant 0 : index
      %c0_12 = arith.constant 0 : index
      %13 = vector.load %arg8[%c0_11, %c0_12] : memref<18x32xf32, #tpu.memory_space<vmem>>, vector<18x32xf32>
      tpu.vector_store %arg8[%c0_11, %c0_12], %12 {strides = array<i32>} : memref<18x32xf32, #tpu.memory_space<vmem>>, vector<18x32xf32>,
    } else {
    }
    %c0 = arith.constant 0 : index
    %c0_1 = arith.constant 0 : index
    %3 = vector.load %arg8[%c0, %c0_1] : memref<18x32xf32, #tpu.memory_space<vmem>>, vector<18x32xf32>
    %c0_2 = arith.constant 0 : index
    %c0_3 = arith.constant 0 : index
    %4 = vector.load %arg3[%c0_2, %c0_3] : memref<18x32xbf16, #tpu.memory_space<vmem>>, vector<18x32xbf16>
    %c0_4 = arith.constant 0 : index
    %c0_5 = arith.constant 0 : index
    %5 = vector.load %arg4[%c0_4, %c0_5] : memref<32x32xbf16, #tpu.memory_space<vmem>>, vector<32x32xbf16>
    %cst = arith.constant dense<0.000000e+00> : vector<18x32xf32>
    %6 = tpu.matmul %4, %5, %cst {dimension_numbers = #tpu.dot_dimension_numbers<[1], [0], [0], [1], [0, 0, 1, 1], [], []>} : vector<18x32xbf16>, vector<32x32xbf16>, vector<18x32xf32> -> vector<18x32xf32>
    %7 = arith.addf %3, %6 : vector<18x32xf32>
    %c0_6 = arith.constant 0 : index
    %c0_7 = arith.constant 0 : index
    %8 = vector.load %arg8[%c0_6, %c0_7] : memref<18x32xf32, #tpu.memory_space<vmem>>, vector<18x32xf32>
    tpu.vector_store %arg8[%c0_6, %c0_7], %7 {strides = array<i32>} : memref<18x32xf32, #tpu.memory_space<vmem>>, vector<18x32xf32>,
    %c0_i32_8 = arith.constant 0 : i32
    %9 = arith.cmpi eq, %arg2, %c0_i32_8 : i32
    %10 = arith.extui %9 : i1 to i32
    %c0_i32_9 = arith.constant 0 : i32
    %11 = arith.cmpi ne, %10, %c0_i32_9 : i32
    scf.if %11 {
      %c0_10 = arith.constant 0 : index
      %c0_11 = arith.constant 0 : index
      %12 = vector.load %arg8[%c0_10, %c0_11] : memref<18x32xf32, #tpu.memory_space<vmem>>, vector<18x32xf32>
      %c0_12 = arith.constant 0 : index
      %c0_13 = arith.constant 0 : index
      %13 = vector.load %arg5[%c0_12, %c0_13] : memref<1x32xf32, #tpu.memory_space<vmem>>, vector<1x32xf32>
      %14 = vector.broadcast %13 : vector<1x32xf32> to vector<18x32xf32>
      %15 = arith.addf %12, %14 : vector<18x32xf32>
      %c0_14 = arith.constant 0 : index
      %c0_15 = arith.constant 0 : index
      %16 = vector.load %arg6[%c0_14, %c0_15] : memref<18x32xbf16, #tpu.memory_space<vmem>>, vector<18x32xbf16>
      %17 = arith.extf %16 : vector<18x32xbf16> to vector<18x32xf32>
      %18 = arith.addf %15, %17 : vector<18x32xf32>
      %19 = arith.truncf %18 : vector<18x32xf32> to vector<18x32xbf16>
      %c0_16 = arith.constant 0 : index
      %c0_17 = arith.constant 0 : index
      %20 = vector.load %arg7[%c0_16, %c0_17] : memref<18x32xbf16, #tpu.memory_space<vmem>>, vector<18x32xbf16>
      tpu.vector_store %arg7[%c0_16, %c0_17], %19 {strides = array<i32>} : memref<18x32xbf16, #tpu.memory_space<vmem>>, vector<18x32xbf16>,
    } else {
    }
    return
  }
  func.func @transform_0(%arg0: i32, %arg1: i32, %arg2: i32) -> (i32, i32) {
    %c0_i32 = arith.constant 0 : i32
    return %arg0, %arg2 : i32, i32
  }
  func.func @transform_1(%arg0: i32, %arg1: i32, %arg2: i32) -> (i32, i32) {
    %c0_i32 = arith.constant 0 : i32
    return %arg2, %arg1 : i32, i32
  }
  func.func @transform_2(%arg0: i32, %arg1: i32, %arg2: i32) -> (i32, i32) {
    %c0_i32 = arith.constant 0 : i32
    %c0_i32_0 = arith.constant 0 : i32
    return %c0_i32, %arg1 : i32, i32
  }
  func.func @transform_3(%arg0: i32, %arg1: i32, %arg2: i32) -> (i32, i32) {
    %c0_i32 = arith.constant 0 : i32
    return %arg0, %arg1 : i32, i32
  }
  func.func @transform_4(%arg0: i32, %arg1: i32, %arg2: i32) -> (i32, i32) {
    %c0_i32 = arith.constant 0 : i32
    return %arg0, %arg1 : i32, i32
  }
}

module attributes {stable_mosaic.version = 11 : i64} {
  func.func @_layernorm_kernel(%arg0: i32, %arg1: memref<18x32xbf16, #tpu.memory_space<vmem>>, %arg2: memref<1x32xf32, #tpu.memory_space<vmem>>, %arg3: memref<1x32xf32, #tpu.memory_space<vmem>>, %arg4: memref<18x32xbf16, #tpu.memory_space<vmem>>) attributes {dimension_semantics = [#tpu.dimension_semantics<parallel>], iteration_bounds = array<i64: 1>, scalar_prefetch = 0 : i64, scratch_operands = 0 : i64, tpu.core_type = #tpu.core_type<tc>, window_params = [{transform_indices = @transform_0, window_bounds = array<i64: 18, 32>}, {pipeline_mode = #tpu.pipeline_mode<synchronous>, transform_indices = @transform_1, window_bounds = array<i64: 1, 32>}, {pipeline_mode = #tpu.pipeline_mode<synchronous>, transform_indices = @transform_2, window_bounds = array<i64: 1, 32>}, {transform_indices = @transform_3, window_bounds = array<i64: 18, 32>}]} {
    %c0 = arith.constant 0 : index
    %c0_0 = arith.constant 0 : index
    %0 = vector.load %arg1[%c0, %c0_0] : memref<18x32xbf16, #tpu.memory_space<vmem>>, vector<18x32xbf16>
    %1 = arith.extf %0 : vector<18x32xbf16> to vector<18x32xf32>
    %cst = arith.constant dense<0.000000e+00> : vector<18xf32>
    %2 = vector.multi_reduction <add>, %1, %cst [1] : vector<18x32xf32> to vector<18xf32>
    %3 = vector.shape_cast %2 : vector<18xf32> to vector<18x1xf32>
    %cst_1 = arith.constant 3.200000e+01 : f32
    %4 = vector.broadcast %cst_1 : f32 to vector<18x1xf32>
    %5 = arith.divf %3, %4 : vector<18x1xf32>
    %6 = vector.broadcast %5 : vector<18x1xf32> to vector<18x32xf32>
    %7 = arith.subf %1, %6 : vector<18x32xf32>
    %8 = arith.mulf %7, %7 : vector<18x32xf32>
    %cst_2 = arith.constant dense<0.000000e+00> : vector<18xf32>
    %9 = vector.multi_reduction <add>, %8, %cst_2 [1] : vector<18x32xf32> to vector<18xf32>
    %10 = vector.shape_cast %9 : vector<18xf32> to vector<18x1xf32>
    %cst_3 = arith.constant 3.200000e+01 : f32
    %11 = vector.broadcast %cst_3 : f32 to vector<18x1xf32>
    %12 = arith.divf %10, %11 : vector<18x1xf32>
    %13 = vector.broadcast %5 : vector<18x1xf32> to vector<18x32xf32>
    %14 = arith.subf %1, %13 : vector<18x32xf32>
    %cst_4 = arith.constant 9.99999974E-6 : f32
    %15 = vector.broadcast %cst_4 : f32 to vector<18x1xf32>
    %16 = arith.addf %12, %15 : vector<18x1xf32>
    %17 = math.rsqrt %16 : vector<18x1xf32>
    %18 = vector.broadcast %17 : vector<18x1xf32> to vector<18x32xf32>
    %19 = arith.mulf %14, %18 : vector<18x32xf32>
    %c0_5 = arith.constant 0 : index
    %c0_6 = arith.constant 0 : index
    %20 = vector.load %arg2[%c0_5, %c0_6] : memref<1x32xf32, #tpu.memory_space<vmem>>, vector<1x32xf32>
    %21 = vector.broadcast %20 : vector<1x32xf32> to vector<18x32xf32>
    %22 = arith.mulf %19, %21 : vector<18x32xf32>
    %c0_7 = arith.constant 0 : index
    %c0_8 = arith.constant 0 : index
    %23 = vector.load %arg3[%c0_7, %c0_8] : memref<1x32xf32, #tpu.memory_space<vmem>>, vector<1x32xf32>
    %24 = vector.broadcast %23 : vector<1x32xf32> to vector<18x32xf32>
    %25 = arith.addf %22, %24 : vector<18x32xf32>
    %26 = arith.truncf %25 : vector<18x32xf32> to vector<18x32xbf16>
    %c0_9 = arith.constant 0 : index
    %c0_10 = arith.constant 0 : index
    %27 = vector.load %arg4[%c0_9, %c0_10] : memref<18x32xbf16, #tpu.memory_space<vmem>>, vector<18x32xbf16>
    tpu.vector_store %arg4[%c0_9, %c0_10], %26 {strides = array<i32>} : memref<18x32xbf16, #tpu.memory_space<vmem>>, vector<18x32xbf16>,
    return
  }
  func.func @transform_0(%arg0: i32) -> (i32, i32) {
    %c0_i32 = arith.constant 0 : i32
    %c0_i32_0 = arith.constant 0 : i32
    return %arg0, %c0_i32 : i32, i32
  }
  func.func @transform_1(%arg0: i32) -> (i32, i32) {
    %c0_i32 = arith.constant 0 : i32
    %c0_i32_0 = arith.constant 0 : i32
    %c0_i32_1 = arith.constant 0 : i32
    return %c0_i32, %c0_i32_0 : i32, i32
  }
  func.func @transform_2(%arg0: i32) -> (i32, i32) {
    %c0_i32 = arith.constant 0 : i32
    %c0_i32_0 = arith.constant 0 : i32
    %c0_i32_1 = arith.constant 0 : i32
    return %c0_i32, %c0_i32_0 : i32, i32
  }
  func.func @transform_3(%arg0: i32) -> (i32, i32) {
    %c0_i32 = arith.constant 0 : i32
    %c0_i32_0 = arith.constant 0 : i32
    return %arg0, %c0_i32 : i32, i32
  }
}

module attributes {stable_mosaic.version = 11 : i64} {
  func.func @kernel(%arg0: i32, %arg1: i32, %arg2: memref<2x32xbf16, #tpu.memory_space<vmem>>, %arg3: memref<1x32xf32, #tpu.memory_space<vmem>>, %arg4: memref<1x32xf32, #tpu.memory_space<vmem>>, %arg5: memref<32x128xbf16, #tpu.memory_space<vmem>>, %arg6: memref<1x128xf32, #tpu.memory_space<vmem>>, %arg7: memref<2x128xf32, #tpu.memory_space<vmem>>, %arg8: memref<2x32xbf16, #tpu.memory_space<vmem>>) attributes {dimension_semantics = [#tpu.dimension_semantics<parallel>, #tpu.dimension_semantics<arbitrary>], iteration_bounds = array<i64: 1, 1>, scalar_prefetch = 0 : i64, scratch_operands = 1 : i64, tpu.core_type = #tpu.core_type<tc>, window_params = [{transform_indices = @transform_0, window_bounds = array<i64: 2, 32>}, {pipeline_mode = #tpu.pipeline_mode<synchronous>, transform_indices = @transform_1, window_bounds = array<i64: 1, 32>}, {pipeline_mode = #tpu.pipeline_mode<synchronous>, transform_indices = @transform_2, window_bounds = array<i64: 1, 32>}, {transform_indices = @transform_3, window_bounds = array<i64: 32, 128>}, {transform_indices = @transform_4, window_bounds = array<i64: 1, 128>}, {transform_indices = @transform_5, window_bounds = array<i64: 2, 128>}]} {
    %c0_i32 = arith.constant 0 : i32
    %0 = arith.cmpi eq, %arg1, %c0_i32 : i32
    %1 = arith.extui %0 : i1 to i32
    %c0_i32_0 = arith.constant 0 : i32
    %2 = arith.cmpi ne, %1, %c0_i32_0 : i32
    scf.if %2 {
      %c0_8 = arith.constant 0 : index
      %c0_9 = arith.constant 0 : index
      %10 = vector.load %arg2[%c0_8, %c0_9] : memref<2x32xbf16, #tpu.memory_space<vmem>>, vector<2x32xbf16>
      %11 = arith.extf %10 : vector<2x32xbf16> to vector<2x32xf32>
      %cst_10 = arith.constant dense<0.000000e+00> : vector<2xf32>
      %12 = vector.multi_reduction <add>, %11, %cst_10 [1] : vector<2x32xf32> to vector<2xf32>
      %13 = vector.shape_cast %12 : vector<2xf32> to vector<2x1xf32>
      %cst_11 = arith.constant 3.200000e+01 : f32
      %14 = vector.broadcast %cst_11 : f32 to vector<2x1xf32>
      %15 = arith.divf %13, %14 : vector<2x1xf32>
      %16 = vector.broadcast %15 : vector<2x1xf32> to vector<2x32xf32>
      %17 = arith.subf %11, %16 : vector<2x32xf32>
      %18 = arith.mulf %17, %17 : vector<2x32xf32>
      %cst_12 = arith.constant dense<0.000000e+00> : vector<2xf32>
      %19 = vector.multi_reduction <add>, %18, %cst_12 [1] : vector<2x32xf32> to vector<2xf32>
      %20 = vector.shape_cast %19 : vector<2xf32> to vector<2x1xf32>
      %cst_13 = arith.constant 3.200000e+01 : f32
      %21 = vector.broadcast %cst_13 : f32 to vector<2x1xf32>
      %22 = arith.divf %20, %21 : vector<2x1xf32>
      %23 = vector.broadcast %15 : vector<2x1xf32> to vector<2x32xf32>
      %24 = arith.subf %11, %23 : vector<2x32xf32>
      %cst_14 = arith.constant 9.99999974E-6 : f32
      %25 = vector.broadcast %cst_14 : f32 to vector<2x1xf32>
      %26 = arith.addf %22, %25 : vector<2x1xf32>
      %27 = math.rsqrt %26 : vector<2x1xf32>
      %28 = vector.broadcast %27 : vector<2x1xf32> to vector<2x32xf32>
      %29 = arith.mulf %24, %28 : vector<2x32xf32>
      %c0_15 = arith.constant 0 : index
      %c0_16 = arith.constant 0 : index
      %30 = vector.load %arg3[%c0_15, %c0_16] : memref<1x32xf32, #tpu.memory_space<vmem>>, vector<1x32xf32>
      %31 = vector.broadcast %30 : vector<1x32xf32> to vector<2x32xf32>
      %32 = arith.mulf %29, %31 : vector<2x32xf32>
      %c0_17 = arith.constant 0 : index
      %c0_18 = arith.constant 0 : index
      %33 = vector.load %arg4[%c0_17, %c0_18] : memref<1x32xf32, #tpu.memory_space<vmem>>, vector<1x32xf32>
      %34 = vector.broadcast %33 : vector<1x32xf32> to vector<2x32xf32>
      %35 = arith.addf %32, %34 : vector<2x32xf32>
      %36 = arith.truncf %35 : vector<2x32xf32> to vector<2x32xbf16>
      %c0_19 = arith.constant 0 : index
      %c0_20 = arith.constant 0 : index
      %37 = vector.load %arg8[%c0_19, %c0_20] : memref<2x32xbf16, #tpu.memory_space<vmem>>, vector<2x32xbf16>
      tpu.vector_store %arg8[%c0_19, %c0_20], %36 {strides = array<i32>} : memref<2x32xbf16, #tpu.memory_space<vmem>>, vector<2x32xbf16>,
    } else {
    }
    %c0 = arith.constant 0 : index
    %c0_1 = arith.constant 0 : index
    %3 = vector.load %arg8[%c0, %c0_1] : memref<2x32xbf16, #tpu.memory_space<vmem>>, vector<2x32xbf16>
    %c0_2 = arith.constant 0 : index
    %c0_3 = arith.constant 0 : index
    %4 = vector.load %arg5[%c0_2, %c0_3] : memref<32x128xbf16, #tpu.memory_space<vmem>>, vector<32x128xbf16>
    %cst = arith.constant dense<0.000000e+00> : vector<2x128xf32>
    %5 = tpu.matmul %3, %4, %cst {dimension_numbers = #tpu.dot_dimension_numbers<[1], [0], [0], [1], [0, 0, 1, 1], [], []>} : vector<2x32xbf16>, vector<32x128xbf16>, vector<2x128xf32> -> vector<2x128xf32>
    %c0_4 = arith.constant 0 : index
    %c0_5 = arith.constant 0 : index
    %6 = vector.load %arg6[%c0_4, %c0_5] : memref<1x128xf32, #tpu.memory_space<vmem>>, vector<1x128xf32>
    %7 = vector.broadcast %6 : vector<1x128xf32> to vector<2x128xf32>
    %8 = arith.addf %5, %7 : vector<2x128xf32>
    %c0_6 = arith.constant 0 : index
    %c0_7 = arith.constant 0 : index
    %9 = vector.load %arg7[%c0_6, %c0_7] : memref<2x128xf32, #tpu.memory_space<vmem>>, vector<2x128xf32>
    tpu.vector_store %arg7[%c0_6, %c0_7], %8 {strides = array<i32>} : memref<2x128xf32, #tpu.memory_space<vmem>>, vector<2x128xf32>,
    return
  }
  func.func @transform_0(%arg0: i32, %arg1: i32) -> (i32, i32) {
    %c0_i32 = arith.constant 0 : i32
    %c0_i32_0 = arith.constant 0 : i32
    return %arg0, %c0_i32 : i32, i32
  }
  func.func @transform_1(%arg0: i32, %arg1: i32) -> (i32, i32) {
    %c0_i32 = arith.constant 0 : i32
    %c0_i32_0 = arith.constant 0 : i32
    %c0_i32_1 = arith.constant 0 : i32
    return %c0_i32, %c0_i32_0 : i32, i32
  }
  func.func @transform_2(%arg0: i32, %arg1: i32) -> (i32, i32) {
    %c0_i32 = arith.constant 0 : i32
    %c0_i32_0 = arith.constant 0 : i32
    %c0_i32_1 = arith.constant 0 : i32
    return %c0_i32, %c0_i32_0 : i32, i32
  }
  func.func @transform_3(%arg0: i32, %arg1: i32) -> (i32, i32) {
    %c0_i32 = arith.constant 0 : i32
    %c0_i32_0 = arith.constant 0 : i32
    return %c0_i32, %arg1 : i32, i32
  }
  func.func @transform_4(%arg0: i32, %arg1: i32) -> (i32, i32) {
    %c0_i32 = arith.constant 0 : i32
    %c0_i32_0 = arith.constant 0 : i32
    return %c0_i32, %arg1 : i32, i32
  }
  func.func @transform_5(%arg0: i32, %arg1: i32) -> (i32, i32) {
    %c0_i32 = arith.constant 0 : i32
    return %arg0, %arg1 : i32, i32
  }
}

</mosaic_0001>

<llo_original>
// kernel: vivit_forward.15
$region0: #{vivit_forward.15}
  #allocation0 [shape = 'u32[]', space=smem, size = 0x4, offset = 0x4, fixed_abs, tag = 'smem constant byte address 0x4 - core index']
  #allocation1 [shape = 'u32[144,128]{1,0:T(1,128)}', space=vmem, size = 0x12000, scoped, tag = 'internal scratch']
  #allocation2 [shape = 'f32[16,32]{1,0:T(8,128)}', space=vmem, size = 0x2000, scoped, tag = 'scratch operand']
  %s0 = inlined_call_operand.vmem [shape: bf16[16,384], index: 0, kind: input, shape index: {}]
  %s1 = inlined_call_operand.vmem [shape: bf16[384,32], index: 1, kind: input, shape index: {}]
  %s2 = inlined_call_operand.vmem [shape: f32[1,32], index: 2, kind: input, shape index: {}]
  %s3 = inlined_call_operand.vmem [shape: bf16[16,32], index: 3, kind: output, shape index: {}]
  %s4 = sld [smem:[#allocation0]]
  $region94: #{vivit_forward.15} parent=0
    _
  %s6 = ssub.s32 1, %s4
  %s7 = scalar_select 0, %s6, %s4
  $region1: #{vivit_forward.15} parent=0
    #allocation3 [shape = 'u8[8192]{0}', space=vmem, size = 0x2000, scoped, tag = 'input window, operand 0']
    loop: start=0, step=1, limit=5
    $region2: #{vivit_forward.15} parent=1 // loop_pre_header
      _
    $region3: #{vivit_forward.15} parent=1 // loop_header
      %s9 = sphi 0, %s13
      %p10 = scmp.ge.s32.totalorder %s9, 5
      %s16 = sphi 0, %s35
      %s17 = sphi 0, %s31
      %s18 = sphi 0, %s27
      %s19 = sphi 0, %s16
      %s20 = sphi 0, %s17
      %s21 = sphi 0, %s18
      %s22 = sphi 0, %s19
      %s23 = sphi 0, %s20
      %s24 = sphi 0, %s21
      %s40 = sphi 0, %s42
      %s43 = sphi 0, %s40
      %s44 = sphi 0, %s43
      %s60 = sphi 0, %s44
      %s68 = sphi 0, %s70
      %s71 = sphi 0, %s68
      %s72 = sphi 0, %s71
      %s88 = sphi 0, %s72
      %s94 = sphi 0, %s96
      %s97 = sphi 0, %s94
      %s98 = sphi 0, %s97
      %s114 = sphi 0, %s98
      %s122 = sphi 0, %s124
      %s125 = sphi 0, %s122
      %s126 = sphi 0, %s125
      %s142 = sphi 0, %s126
    $region4: #{vivit_forward.15} parent=1 // loop_header_branch
      %12 = sbr.rel (%p10) target = $region8
    $region5: #{vivit_forward.15} parent=1 // loop_body
      %s14 = ssub.s32 %s9, 1
      %s15 = ssub.s32 %s9, 2
      %s25 = sadd.s32 1, %s18
      %p26 = scmp.ge.s32.totalorder %s25, 3
      %s27 = scalar_select %p26, 0, %s25
      %s28 = sadd.s32 1, %s17
      %s29 = scalar_select %p26, %s28, %s17
      %p30 = scmp.ge.s32.totalorder %s29, 1
      %s31 = scalar_select %p30, 0, %s29
      %s32 = sadd.s32 1, %s16
      %s33 = scalar_select %p30, %s32, %s16
      %p34 = scmp.ge.s32.totalorder %s33, 1
      %s35 = scalar_select %p34, 0, %s33
      %s36 = ssub.s32 %s16, %s35
      %s37 = ssub.s32 %s18, %s27
      %s38 = sor.u32 %s36, %s37
      %p39 = scmp.eq.s32.totalorder %s38, 0
      %s41 = sadd.s32 %s40, 1
      %s42 = scalar_select %p39, %s40, %s41
      %p45 = pneg %p39
      %p46 = scmp.eq.s32.totalorder %s9, 2
      %p47 = por %p45, %p46
      %p48 = scmp.ne.s32.totalorder %s40, %s43
      %p49 = scmp.eq.s32.totalorder %s9, 0
      %p50 = por %p48, %p49
      %p51 = scmp.ne.s32.totalorder %s40, %s43
      %p52 = scmp.eq.s32.totalorder %s14, 2
      %p53 = por %p51, %p52
      %p54 = scmp.ne.s32.totalorder %s43, %s44
      %p55 = scmp.eq.s32.totalorder %s14, 0
      %p56 = por %p54, %p55
      %p57 = scmp.ne.s32.totalorder %s43, %s44
      %p58 = scmp.eq.s32.totalorder %s15, 2
      %p59 = por %p57, %p58
      %p61 = scmp.ne.s32.totalorder %s44, %s60
      %p62 = scmp.eq.s32.totalorder %s15, 0
      %p63 = por %p61, %p62
      %s64 = ssub.s32 %s18, %s27
      %s65 = ssub.s32 %s17, %s31
      %s66 = sor.u32 %s64, %s65
      %p67 = scmp.eq.s32.totalorder %s66, 0
      %s69 = sadd.s32 %s68, 1
      %s70 = scalar_select %p67, %s68, %s69
      %p73 = pneg %p67
      %p74 = scmp.eq.s32.totalorder %s9, 2
      %p75 = por %p73, %p74
      %p76 = scmp.ne.s32.totalorder %s68, %s71
      %p77 = scmp.eq.s32.totalorder %s9, 0
      %p78 = por %p76, %p77
      %p79 = scmp.ne.s32.totalorder %s68, %s71
      %p80 = scmp.eq.s32.totalorder %s14, 2
      %p81 = por %p79, %p80
      %p82 = scmp.ne.s32.totalorder %s71, %s72
      %p83 = scmp.eq.s32.totalorder %s14, 0
      %p84 = por %p82, %p83
      %p85 = scmp.ne.s32.totalorder %s71, %s72
      %p86 = scmp.eq.s32.totalorder %s15, 2
      %p87 = por %p85, %p86
      %p89 = scmp.ne.s32.totalorder %s72, %s88
      %p90 = scmp.eq.s32.totalorder %s15, 0
      %p91 = por %p89, %p90
      %s92 = ssub.s32 %s17, %s31
      %p93 = scmp.eq.s32.totalorder %s92, 0
      %s95 = sadd.s32 %s94, 1
      %s96 = scalar_select %p93, %s94, %s95
      %p99 = pneg %p93
      %p100 = scmp.eq.s32.totalorder %s9, 2
      %p101 = por %p99, %p100
      %p102 = scmp.ne.s32.totalorder %s94, %s97
      %p103 = scmp.eq.s32.totalorder %s9, 0
      %p104 = por %p102, %p103
      %p105 = scmp.ne.s32.totalorder %s94, %s97
      %p106 = scmp.eq.s32.totalorder %s14, 2
      %p107 = por %p105, %p106
      %p108 = scmp.ne.s32.totalorder %s97, %s98
      %p109 = scmp.eq.s32.totalorder %s14, 0
      %p110 = por %p108, %p109
      %p111 = scmp.ne.s32.totalorder %s97, %s98
      %p112 = scmp.eq.s32.totalorder %s15, 2
      %p113 = por %p111, %p112
      %p115 = scmp.ne.s32.totalorder %s98, %s114
      %p116 = scmp.eq.s32.totalorder %s15, 0
      %p117 = por %p115, %p116
      %s118 = ssub.s32 %s16, %s35
      %s119 = ssub.s32 %s17, %s31
      %s120 = sor.u32 %s118, %s119
      %p121 = scmp.eq.s32.totalorder %s120, 0
      %s123 = sadd.s32 %s122, 1
      %s124 = scalar_select %p121, %s122, %s123
      %p127 = pneg %p121
      %p128 = scmp.eq.s32.totalorder %s9, 2
      %p129 = por %p127, %p128
      %p130 = scmp.ne.s32.totalorder %s122, %s125
      %p131 = scmp.eq.s32.totalorder %s9, 0
      %p132 = por %p130, %p131
      %p133 = scmp.ne.s32.totalorder %s122, %s125
      %p134 = scmp.eq.s32.totalorder %s14, 2
      %p135 = por %p133, %p134
      %p136 = scmp.ne.s32.totalorder %s125, %s126
      %p137 = scmp.eq.s32.totalorder %s14, 0
      %p138 = por %p136, %p137
      %p139 = scmp.ne.s32.totalorder %s125, %s126
      %p140 = scmp.eq.s32.totalorder %s15, 2
      %p141 = por %p139, %p140
      %p143 = scmp.ne.s32.totalorder %s126, %s142
      %p144 = scmp.eq.s32.totalorder %s15, 0
      %p145 = por %p143, %p144
      %p146 = scmp.le.s32.totalorder 1, %s9
      %p147 = scmp.lt.s32.totalorder %s9, 4
      %p148 = pnand %p146, %p147
      %p149 = pneg %p148
      // Predicated region
      $region9: #{vivit_forward.15} parent=5 // pred_check
        _
      $region10: #{vivit_forward.15} parent=5 // pred_check_branch
        %151 = sbr.rel (%p148) target = $region12
      $region11: #{vivit_forward.15} parent=5 // pred_region
        %s152 = ssub.s32 %s9, 1
        // Predicated region
        $region13: #{vivit_forward.15} parent=11 // pred_check
          %p153 = pneg %p110
        $region14: #{vivit_forward.15} parent=11 // pred_check_branch
          %155 = sbr.rel (%p153) target = $region16
        $region15: #{vivit_forward.15} parent=11 // pred_region
          %p156 = scmp.lt.s32.totalorder %s20, 0
          %s157 = scalar_select %p156, %s20, 0
          %s158 = scalar_lea.vmem %s2, %s157
        $region16: #{vivit_forward.15} parent=11 // pred_fallthru
          _
      $region12: #{vivit_forward.15} parent=5 // pred_fallthru
        _
      %p159 = scmp.lt.s32.totalorder %s9, 3
      // Predicated region
      $region17: #{vivit_forward.15} parent=5 // pred_check
        %p160 = pneg %p159
      $region18: #{vivit_forward.15} parent=5 // pred_check_branch
        %162 = sbr.rel (%p160) target = $region20
      $region19: #{vivit_forward.15} parent=5 // pred_region
        // Predicated region
        $region21: #{vivit_forward.15} parent=19 // pred_check
          %p163 = pneg %p50
        $region22: #{vivit_forward.15} parent=19 // pred_check_branch
          %165 = sbr.rel (%p163) target = $region24
        $region23: #{vivit_forward.15} parent=19 // pred_region
          %s166 = sand.u32 %s40, 1
          %s167 = sand.u32 %s40, 1
          %s168 = smul.addr %s167, 8
          %s169 = scalar_lea.vmem [#allocation3], %s168
          %s170 = smul.u32 2, %s16
          %s171 = smul.addr %s170, 3
          %s172 = sadd.s32 %s18, %s171
          %s173 = smul.addr %s172, 4
          %s174 = scalar_lea.vmem %s0, %s173
          // Predicated region
          $region25: #{vivit_forward.15} parent=23 // pred_check
            _
          $region26: #{vivit_forward.15} parent=23 // pred_check_branch
            %176 = sbr.rel (0) target = $region28
          $region27: #{vivit_forward.15} parent=23 // pred_region
            // Predicated region
            $region29: #{vivit_forward.15} parent=27 // pred_check
              _
            $region30: #{vivit_forward.15} parent=27 // pred_check_branch
              %178 = sbr.rel target = $region32
            $region31: #{vivit_forward.15} parent=27 // pred_region
              // Predicated region
              $region44: #{vivit_forward.15} parent=31 // pred_check
                _
              $region45: #{vivit_forward.15} parent=31 // pred_check_branch
                %195 = sbr.rel (0) target = $region47
              $region46: #{vivit_forward.15} parent=31 // pred_region
                loop: start=0, step=1, limit=1
                $region48: #{vivit_forward.15} parent=46 // loop_pre_header
                  _
                $region49: #{vivit_forward.15} parent=46 // loop_header
                  %s197 = sphi 0, %s201
                  %p198 = scmp.ge.s32.totalorder %s197, 1
                  %s202 = sphi %s174, %s174
                  %s203 = sphi %s169, %s169
                $region50: #{vivit_forward.15} parent=46 // loop_header_branch
                  %200 = sbr.rel (%p198) target = $region54
                $region51: #{vivit_forward.15} parent=46 // loop_body
                  _
                $region52: #{vivit_forward.15} parent=46 // loop_footer
                  %s201 = sadd.s32 1, %s197
                $region53: #{vivit_forward.15} parent=46 // loop_footer_branch
                  %196 = sbr.rel target = $region49
                $region54: #{vivit_forward.15} parent=46 // loop_exit
                  _
                loop: start=0, step=1, limit=1
                $region55: #{vivit_forward.15} parent=46 // loop_pre_header
                  _
                $region56: #{vivit_forward.15} parent=46 // loop_header
                  %s206 = sphi 0, %s210
                  %p207 = scmp.ge.s32.totalorder %s206, 1
                  %s211 = sphi %s174, %s174
                  %s212 = sphi %s169, %s169
                $region57: #{vivit_forward.15} parent=46 // loop_header_branch
                  %209 = sbr.rel (%p207) target = $region61
                $region58: #{vivit_forward.15} parent=46 // loop_body
                  %v213 = vld [vmem:[%s211] sm:$0xf]
                  %214 = vst [vmem:[%s212] sm:$0xf] %v213
                  %v215 = vld [vmem:[%s211 + $0xc] sm:$0xf]
                  %216 = vst [vmem:[%s212 + $0x4] sm:$0xf] %v215
                $region59: #{vivit_forward.15} parent=46 // loop_footer
                  %s210 = sadd.s32 1, %s206
                $region60: #{vivit_forward.15} parent=46 // loop_footer_branch
                  %205 = sbr.rel target = $region56
                $region61: #{vivit_forward.15} parent=46 // loop_exit
                  _
              $region47: #{vivit_forward.15} parent=31 // pred_fallthru
                _
            $region32: #{vivit_forward.15} parent=27 // pred_fallthru
              _
            // Predicated region
            $region33: #{vivit_forward.15} parent=27 // pred_check
              _
            $region34: #{vivit_forward.15} parent=27 // pred_check_branch
              %180 = sbr.rel (0) target = $region36
            $region35: #{vivit_forward.15} parent=27 // pred_region
              loop: start=0, step=1, limit=1
              $region37: #{vivit_forward.15} parent=35 // loop_pre_header
                _
              $region38: #{vivit_forward.15} parent=35 // loop_header
                %s183 = sphi 0, %s187
                %p184 = scmp.ge.s32.totalorder %s183, 1
                %s188 = sphi %s174, %s174
                %s189 = sphi %s169, %s169
              $region39: #{vivit_forward.15} parent=35 // loop_header_branch
                %186 = sbr.rel (%p184) target = $region43
              $region40: #{vivit_forward.15} parent=35 // loop_body
                %v190 = vld [vmem:[%s188] sm:$0xf]
                %191 = vst [vmem:[%s189] sm:$0xf] %v190
                %v192 = vld [vmem:[%s188 + $0xc] sm:$0xf]
                %193 = vst [vmem:[%s189 + $0x4] sm:$0xf] %v192
              $region41: #{vivit_forward.15} parent=35 // loop_footer
                %s187 = sadd.s32 1, %s183
              $region42: #{vivit_forward.15} parent=35 // loop_footer_branch
                %182 = sbr.rel target = $region38
              $region43: #{vivit_forward.15} parent=35 // loop_exit
                _
            $region36: #{vivit_forward.15} parent=27 // pred_fallthru
              _
          $region28: #{vivit_forward.15} parent=23 // pred_fallthru
            _
          %217 = vnop
        $region24: #{vivit_forward.15} parent=19 // pred_fallthru
          _
        // Predicated region
        $region62: #{vivit_forward.15} parent=19 // pred_check
          %p218 = pneg %p78
        $region63: #{vivit_forward.15} parent=19 // pred_check_branch
          %220 = sbr.rel (%p218) target = $region65
        $region64: #{vivit_forward.15} parent=19 // pred_region
          %s221 = smul.u32 16, %s18
          %p222 = scmp.lt.s32.totalorder %s221, 47
          %s223 = scalar_select %p222, %s221, 47
          %p224 = scmp.lt.s32.totalorder %s17, 0
          %s225 = scalar_select %p224, %s17, 0
          %s226 = sadd.s32 %s225, %s223
          %s227 = smul.addr %s226, 4
          %s228 = scalar_lea.vmem %s1, %s227
          %s229 = smul.u32 16, %s18
        $region65: #{vivit_forward.15} parent=19 // pred_fallthru
          _
      $region20: #{vivit_forward.15} parent=5 // pred_fallthru
        _
      %p230 = scmp.le.s32.totalorder 1, %s9
      %p231 = scmp.lt.s32.totalorder %s9, 4
      %p232 = pnand %p230, %p231
      %p233 = pneg %p232
      // Predicated region
      $region66: #{vivit_forward.15} parent=5 // pred_check
        _
      $region67: #{vivit_forward.15} parent=5 // pred_check_branch
        %235 = sbr.rel (%p232) target = $region69
      $region68: #{vivit_forward.15} parent=5 // pred_region
        %s236 = ssub.s32 %s9, 1
        %s237 = sand.u32 %s43, 1
        %s238 = sand.u32 %s43, 1
        %s239 = smul.addr %s238, 8
        %s240 = scalar_lea.vmem [#allocation3], %s239
        // Predicated region
        $region70: #{vivit_forward.15} parent=68 // pred_check
          %p241 = pneg %p56
        $region71: #{vivit_forward.15} parent=68 // pred_check_branch
          %243 = sbr.rel (%p241) target = $region73
        $region72: #{vivit_forward.15} parent=68 // pred_region
          _
        $region73: #{vivit_forward.15} parent=68 // pred_fallthru
          _
        %s244 = sand.u32 %s43, 1
        %s245 = sand.u32 %s43, 1
        %s246 = smul.addr %s245, 8
        %s247 = scalar_lea.vmem [#allocation3], %s246
        %p248 = pneg %p56
        %p249 = pneg %p53
        %s250 = smul.u32 16, %s21
        %p251 = scmp.lt.s32.totalorder %s250, 47
        %s252 = scalar_select %p251, %s250, 47
        %p253 = scmp.lt.s32.totalorder %s20, 0
        %s254 = scalar_select %p253, %s20, 0
        %s255 = sadd.s32 %s254, %s252
        %s256 = smul.addr %s255, 4
        %s257 = scalar_lea.vmem %s1, %s256
        %p258 = pneg %p84
        %p259 = pneg %p81
        %p260 = scmp.lt.s32.totalorder %s20, 0
        %s261 = scalar_select %p260, %s20, 0
        %s262 = scalar_lea.vmem %s2, %s261
        %p263 = pneg %p110
        %p264 = pneg %p107
        %p265 = pneg %p138
        %p266 = pneg %p135
        %s267 = smul.u32 2, %s19
        %p268 = scmp.lt.s32.totalorder %s267, 1
        %s269 = scalar_select %p268, %s267, 1
        %p270 = scmp.lt.s32.totalorder %s20, 0
        %s271 = scalar_select %p270, %s20, 0
        %s272 = sadd.s32 %s271, %s269
        %s273 = smul.addr %s272, 4
        %s274 = scalar_lea.vmem %s3, %s273
        %s275 = smul.u32 2, %s19
        %s276 = smul.u32 16, %s21
        %p277 = scmp.lt.s32.totalorder %s276, 47
        %s278 = scalar_select %p277, %s276, 47
        %p279 = scmp.lt.s32.totalorder %s20, 0
        %s280 = scalar_select %p279, %s20, 0
        %s281 = sadd.s32 %s280, %s278
        %s282 = smul.addr %s281, 4
        %s283 = scalar_lea.vmem %s1, %s282
        %s284 = smul.u32 16, %s21
        %p285 = scmp.lt.s32.totalorder %s20, 0
        %s286 = scalar_select %p285, %s20, 0
        %s287 = scalar_lea.vmem %s2, %s286
        %s288 = smul.u32 2, %s19
        %p289 = scmp.lt.s32.totalorder %s288, 1
        %s290 = scalar_select %p289, %s288, 1
        %p291 = scmp.lt.s32.totalorder %s20, 0
        %s292 = scalar_select %p291, %s20, 0
        %s293 = sadd.s32 %s292, %s290
        %s294 = smul.addr %s293, 4
        %s295 = scalar_lea.vmem %s3, %s294
        %s296 = smul.u32 2, %s19
        %p298 = scmp.eq.s32.totalorder %s21, 0
        // Predicated region
        $region74: #{vivit_forward.15} parent=68 // pred_check
          %p299 = pneg %p298
        $region75: #{vivit_forward.15} parent=68 // pred_check_branch
          %301 = sbr.rel (%p299) target = $region77
        $region76: #{vivit_forward.15} parent=68 // pred_region
          %vm302 = vcmask 261120
          %303 = vst.msk [vmem:[#allocation2] sm:$0xff] %vm302, 0.0
          %304 = vst.msk [vmem:[#allocation2 + $0x8] sm:$0xff] %vm302, 0.0
        $region77: #{vivit_forward.15} parent=68 // pred_fallthru
          _
        %v305 = vld [vmem:[#allocation2] sm:$0xff]
        %v306 = vld [vmem:[#allocation2 + $0x8] sm:$0xff]
        %v307 = vld [vmem:[%s240] sm:$0xf]
        %v308 = vld [vmem:[%s240 + $0x4] sm:$0xf]
        %v309 = vld [vmem:[%s283] sm:$0xf]
        %v310 = vld [vmem:[%s283 + $0x4] sm:$0xf]
        %v311 = vld [vmem:[%s283 + $0x8] sm:$0xf]
        %v312 = vld [vmem:[%s283 + $0xc] sm:$0xf]
        %v313 = vld [vmem:[%s283 + $0x10] sm:$0xf]
        %v314 = vld [vmem:[%s283 + $0x14] sm:$0xf]
        %v315 = vld [vmem:[%s283 + $0x18] sm:$0xf]
        %v316 = vld [vmem:[%s283 + $0x1c] sm:$0xf]
        %v317 = vld [vmem:[%s283 + $0x20] sm:$0xf]
        %v318 = vld [vmem:[%s283 + $0x24] sm:$0xf]
        %v319 = vld [vmem:[%s283 + $0x28] sm:$0xf]
        %v320 = vld [vmem:[%s283 + $0x2c] sm:$0xf]
        %v321 = vld [vmem:[%s283 + $0x30] sm:$0xf]
        %v322 = vld [vmem:[%s283 + $0x34] sm:$0xf]
        %v323 = vld [vmem:[%s283 + $0x38] sm:$0xf]
        %v324 = vld [vmem:[%s283 + $0x3c] sm:$0xf]
        %v327 = vunpack.c.l.b16 %v307
        %v328 = vunpack.c.l.b16 %v308
        %v329 = vpack.c.b16 %v328, %v327
        %v347 = vunpack.c.l.b16 %v309
        %v348 = vunpack.c.l.b16 %v310
        %v349 = vunpack.c.l.b16 %v311
        %v350 = vunpack.c.l.b16 %v312
        %v351 = vunpack.c.l.b16 %v313
        %v352 = vunpack.c.l.b16 %v314
        %v353 = vunpack.c.l.b16 %v315
        %v354 = vunpack.c.l.b16 %v316
        %v355 = vunpack.c.l.b16 %v317
        %v356 = vunpack.c.l.b16 %v318
        %v357 = vunpack.c.l.b16 %v319
        %v358 = vunpack.c.l.b16 %v320
        %v359 = vunpack.c.l.b16 %v321
        %v360 = vunpack.c.l.b16 %v322
        %v361 = vunpack.c.l.b16 %v323
        %v362 = vunpack.c.l.b16 %v324
        %v363 = vpack.c.b16 %v348, %v347
        %v364 = vpack.c.b16 %v350, %v349
        %v365 = vpack.c.b16 %v352, %v351
        %v366 = vpack.c.b16 %v354, %v353
        %v367 = vpack.c.b16 %v356, %v355
        %v368 = vpack.c.b16 %v358, %v357
        %v369 = vpack.c.b16 %v360, %v359
        %v370 = vpack.c.b16 %v362, %v361
        %379 = vmatprep.subr.bf16.mxu0 0
        %380 = vmatpush1.bf16.msra.mxu0 %v363
        %381 = vmatprep.subr.bf16.mxu0 0
        %382 = vmatpush1.bf16.msra.mxu0 %v364
        %383 = vmatprep.subr.bf16.mxu0 0
        %384 = vmatpush1.bf16.msra.mxu0 %v365
        %385 = vmatprep.subr.bf16.mxu0 0
        %386 = vmatpush1.bf16.msra.mxu0 %v366
        %387 = vmatprep.subr.bf16.mxu0 0
        %388 = vmatpush1.bf16.msra.mxu0 %v367
        %389 = vmatprep.subr.bf16.mxu0 0
        %390 = vmatpush1.bf16.msra.mxu0 %v368
        %391 = vmatprep.subr.bf16.mxu0 0
        %392 = vmatpush1.bf16.msra.mxu0 %v369
        %393 = vmatprep.subr.bf16.mxu0 0
        %394 = vmatpush1.bf16.msra.mxu0 %v370
        %395 = vmatprep.subr.bf16.mxu0 0
        %396 = vmatpush1.bf16.msra.mxu0 0
        %397 = vmatprep.subr.bf16.mxu0 0
        %398 = vmatpush1.bf16.msra.mxu0 0
        %399 = vmatprep.subr.bf16.mxu0 0
        %400 = vmatpush1.bf16.msra.mxu0 0
        %401 = vmatprep.subr.bf16.mxu0 0
        %402 = vmatpush1.bf16.msra.mxu0 0
        %403 = vmatprep.subr.bf16.mxu0 0
        %404 = vmatpush1.bf16.msra.mxu0 0
        %405 = vmatprep.subr.bf16.mxu0 0
        %406 = vmatpush1.bf16.msra.mxu0 0
        %407 = vmatprep.subr.bf16.mxu0 0
        %408 = vmatpush1.bf16.msra.mxu0 0
        %409 = vmatprep.subr.bf16.mxu0 0
        %410 = vmatpush1.bf16.msra.mxu0 0
        %411 = vmatprep.mubr.bf16.mxu0 0
        %412 = vmatmul.mubr.bf16.gmra.mrb[0].mxu0 %v329
        %v413 = vpop.f32.mrb[0].mxu0
        %v414 = vadd.f32 0.0, %v413
        %v415 = vpop.f32.mrb[0].mxu0
        %v416 = vpop.f32.mrb[0].mxu0
        %v417 = vadd.f32 0.0, %v416
        %v418 = vpop.f32.mrb[0].mxu0
        %419 = vdwg.mxu0
        %v420 = vadd.f32 %v305, %v414
        %v421 = vadd.f32 %v306, %v417
        %vm422 = vcmask 261120
        %423 = vst.msk [vmem:[#allocation2] sm:$0xff] %vm422, %v420
        %424 = vst.msk [vmem:[#allocation2 + $0x8] sm:$0xff] %vm422, %v421
        %p425 = scmp.eq.s32.totalorder %s21, 2
        // Predicated region
        $region78: #{vivit_forward.15} parent=68 // pred_check
          %p426 = pneg %p425
        $region79: #{vivit_forward.15} parent=68 // pred_check_branch
          %428 = sbr.rel (%p426) target = $region81
        $region80: #{vivit_forward.15} parent=68 // pred_region
          %v429 = vld [vmem:[#allocation2] sm:$0xff]
          %v430 = vld [vmem:[#allocation2 + $0x8] sm:$0xff]
          %v431 = vld [vmem:[%s287] sm:$0x1]
          %v433 = vlaneseq
          %v434 = vshrl.u32 %v433, 7
          %v435 = vsub.s32 0, %v434
          %v436 = vrot.slane %v431, %v435
          %v438 = vadd.f32 %v429, %v436
          %v439 = vadd.f32 %v430, %v436
          %v440 = vpack.c.bf16 %v439, %v438
          %v442 = vunpack.c.l.b16 %v440
          %v443 = vunpack.c.h.b16 %v440
          %v444 = vpack.c.b16 %v442, %v442
          %v445 = vpack.c.b16 %v443, %v443
          %vm448 = vcmask 257024
          %449 = vst.msk [vmem:[%s295] sm:$0xf] %vm448, %v444
          %450 = vst.msk [vmem:[%s295 + $0x4] sm:$0xf] %vm448, %v445
        $region81: #{vivit_forward.15} parent=68 // pred_fallthru
          _
        %s451 = smul.u32 2, %s19
        %p452 = scmp.lt.s32.totalorder %s451, 1
        %s453 = scalar_select %p452, %s451, 1
        %p454 = scmp.lt.s32.totalorder %s20, 0
        %s455 = scalar_select %p454, %s20, 0
        %s456 = sadd.s32 %s455, %s453
        %s457 = smul.addr %s456, 4
        %s458 = scalar_lea.vmem %s3, %s457
        // Predicated region
        $region82: #{vivit_forward.15} parent=68 // pred_check
          %p459 = pneg %p135
        $region83: #{vivit_forward.15} parent=68 // pred_check_branch
          %461 = sbr.rel (%p459) target = $region85
        $region84: #{vivit_forward.15} parent=68 // pred_region
          %s462 = smul.u32 2, %s19
        $region85: #{vivit_forward.15} parent=68 // pred_fallthru
          _
        // Predicated region
        $region86: #{vivit_forward.15} parent=68 // pred_check
          %p463 = pneg %p135
        $region87: #{vivit_forward.15} parent=68 // pred_check_branch
          %465 = sbr.rel (%p463) target = $region89
        $region88: #{vivit_forward.15} parent=68 // pred_region
          %s466 = smul.u32 2, %s19
          %p467 = scmp.lt.s32.totalorder %s466, 1
          %s468 = scalar_select %p467, %s466, 1
          %p469 = scmp.lt.s32.totalorder %s20, 0
          %s470 = scalar_select %p469, %s20, 0
          %s471 = sadd.s32 %s470, %s468
          %s472 = smul.addr %s471, 4
          %s473 = scalar_lea.vmem %s3, %s472
        $region89: #{vivit_forward.15} parent=68 // pred_fallthru
          _
      $region69: #{vivit_forward.15} parent=5 // pred_fallthru
        _
      %p474 = scmp.le.s32.totalorder 2, %s9
      // Predicated region
      $region90: #{vivit_forward.15} parent=5 // pred_check
        %p475 = pneg %p474
      $region91: #{vivit_forward.15} parent=5 // pred_check_branch
        %477 = sbr.rel (%p475) target = $region93
      $region92: #{vivit_forward.15} parent=5 // pred_region
        %s478 = ssub.s32 %s9, 2
      $region93: #{vivit_forward.15} parent=5 // pred_fallthru
        _
    $region6: #{vivit_forward.15} parent=1 // loop_footer
      %s13 = sadd.s32 1, %s9
    $region7: #{vivit_forward.15} parent=1 // loop_footer_branch
      %8 = sbr.rel target = $region3
    $region8: #{vivit_forward.15} parent=1 // loop_exit
      _

// kernel: vivit_forward.16
$region0: #{vivit_forward.16}
  #allocation0 [shape = 'u32[]', space=smem, size = 0x4, offset = 0x4, fixed_abs, tag = 'smem constant byte address 0x4 - core index']
  #allocation1 [shape = 'u32[144,128]{1,0:T(1,128)}', space=vmem, size = 0x12000, scoped, tag = 'internal scratch']
  #allocation2 [shape = 'bf16[18,32]{1,0:T(8,128)(2,1)}', space=vmem, size = 0x1800, scoped, tag = 'scratch operand']
  %s0 = inlined_call_operand.vmem [shape: bf16[18,32], index: 0, kind: input, shape index: {}]
  %s1 = inlined_call_operand.vmem [shape: f32[1,32], index: 1, kind: input, shape index: {}]
  %s2 = inlined_call_operand.vmem [shape: f32[1,32], index: 2, kind: input, shape index: {}]
  %s3 = inlined_call_operand.vmem [shape: bf16[32,32], index: 3, kind: input, shape index: {}]
  %s4 = inlined_call_operand.vmem [shape: bf16[18,32], index: 4, kind: output, shape index: {}]
  %s5 = sld [smem:[#allocation0]]
  $region30: #{vivit_forward.16} parent=0
    _
  %s7 = ssub.s32 1, %s5
  %s8 = scalar_select 0, %s7, %s5
  // Predicated region
  $region2: #{vivit_forward.16} parent=0 // pred_check
    _
  $region3: #{vivit_forward.16} parent=0 // pred_check_branch
    %10 = sbr.rel (0) target = $region5
  $region4: #{vivit_forward.16} parent=0 // pred_region
    _
  $region5: #{vivit_forward.16} parent=0 // pred_fallthru
    _
  // Predicated region
  $region6: #{vivit_forward.16} parent=0 // pred_check
    _
  $region7: #{vivit_forward.16} parent=0 // pred_check_branch
    %12 = sbr.rel (0) target = $region9
  $region8: #{vivit_forward.16} parent=0 // pred_region
    _
  $region9: #{vivit_forward.16} parent=0 // pred_fallthru
    _
  // Predicated region
  $region10: #{vivit_forward.16} parent=0 // pred_check
    _
  $region11: #{vivit_forward.16} parent=0 // pred_check_branch
    %14 = sbr.rel (0) target = $region13
  $region12: #{vivit_forward.16} parent=0 // pred_region
    _
  $region13: #{vivit_forward.16} parent=0 // pred_fallthru
    _
  // Predicated region
  $region14: #{vivit_forward.16} parent=0 // pred_check
    _
  $region15: #{vivit_forward.16} parent=0 // pred_check_branch
    %16 = sbr.rel (0) target = $region17
  $region16: #{vivit_forward.16} parent=0 // pred_region
    _
  $region17: #{vivit_forward.16} parent=0 // pred_fallthru
    _
  %p18 = scmp.eq.s32.totalorder 0, 0
  // Predicated region
  $region18: #{vivit_forward.16} parent=0 // pred_check
    %p19 = pneg %p18
  $region19: #{vivit_forward.16} parent=0 // pred_check_branch
    %21 = sbr.rel (%p19) target = $region21
  $region20: #{vivit_forward.16} parent=0 // pred_region
    %v22 = vld [vmem:[%s0] sm:$0xf]
    %v23 = vld [vmem:[%s0 + $0x4] sm:$0xf]
    %v24 = vld [vmem:[%s0 + $0x8] sm:$0x1]
    %v25 = vunpack.c.l.bf16 %v22
    %v26 = vunpack.c.l.bf16 %v23
    %v27 = vunpack.c.l.bf16 %v24
    %vm28 = vcmask 261120
    %v29 = vsel %vm28, %v25, 0.0
    %30 = vadd.xlane.f32.xlu0 %v29
    %v31 = vpop.xlane.xlu0 %30
    %v32 = vsel %vm28, %v26, 0.0
    %33 = vadd.xlane.f32.xlu0 %v32
    %v34 = vpop.xlane.xlu0 %33
    %vm35 = vcmask 254976
    %v36 = vsel %vm35, %v27, 0.0
    %37 = vadd.xlane.f32.xlu0 %v36
    %v38 = vpop.xlane.xlu0 %37
    %v39 = vrcp.pop 32.0
    %v40 = vmul.f32 %v31, %v39
    %v41 = vmul.f32 %v34, %v39
    %v42 = vmul.f32 %v38, %v39
    %v43 = vsub.f32 %v25, %v40
    %v44 = vsub.f32 %v26, %v41
    %v45 = vsub.f32 %v27, %v42
    %v46 = vmul.f32 %v43, %v43
    %v47 = vmul.f32 %v44, %v44
    %v48 = vmul.f32 %v45, %v45
    %v49 = vsel %vm28, %v46, 0.0
    %50 = vadd.xlane.f32.xlu0 %v49
    %v51 = vpop.xlane.xlu0 %50
    %v52 = vsel %vm28, %v47, 0.0
    %53 = vadd.xlane.f32.xlu0 %v52
    %v54 = vpop.xlane.xlu0 %53
    %v55 = vsel %vm35, %v48, 0.0
    %56 = vadd.xlane.f32.xlu0 %v55
    %v57 = vpop.xlane.xlu0 %56
    %v58 = vmul.f32 %v51, %v39
    %v59 = vmul.f32 %v54, %v39
    %v60 = vmul.f32 %v57, %v39
    %v61 = vadd.f32 %v58, 1e-05
    %v62 = vadd.f32 %v59, 1e-05
    %v63 = vadd.f32 %v60, 1e-05
    %v64 = vrsqrt.pop %v61
    %v65 = vrsqrt.pop %v62
    %v66 = vrsqrt.pop %v63
    %v67 = vmul.f32 %v43, %v64
    %v68 = vmul.f32 %v44, %v65
    %v69 = vmul.f32 %v45, %v66
    %v70 = vld [vmem:[%s1] sm:$0x1]
    %v72 = vlaneseq
    %v73 = vshrl.u32 %v72, 7
    %v74 = vsub.s32 0, %v73
    %v75 = vrot.slane %v70, %v74
    %v77 = vmul.f32 %v67, %v75
    %v78 = vmul.f32 %v68, %v75
    %v79 = vmul.f32 %v69, %v75
    %v80 = vld [vmem:[%s2] sm:$0x1]
    %v82 = vlaneseq
    %v83 = vshrl.u32 %v82, 7
    %v84 = vsub.s32 0, %v83
    %v85 = vrot.slane %v80, %v84
    %v87 = vadd.f32 %v77, %v85
    %v88 = vadd.f32 %v78, %v85
    %v89 = vadd.f32 %v79, %v85
    %v90 = vpack.c.bf16 %v88, %v87
    %v91 = vpack.c.bf16 %v89, %v89
    %v94 = vunpack.c.l.b16 %v90
    %v95 = vunpack.c.h.b16 %v90
    %v96 = vunpack.c.l.b16 %v91
    %v97 = vpack.c.b16 %v94, %v94
    %v98 = vpack.c.b16 %v95, %v95
    %v99 = vpack.c.b16 %v96, %v96
    %vm103 = vcmask 257024
    %104 = vst.msk [vmem:[#allocation2] sm:$0xf] %vm103, %v97
    %105 = vst.msk [vmem:[#allocation2 + $0x4] sm:$0xf] %vm103, %v98
    %vm106 = vcmask 253952
    %107 = vst.msk [vmem:[#allocation2 + $0x8] sm:$0x1] %vm106, %v99
  $region21: #{vivit_forward.16} parent=0 // pred_fallthru
    _
  %v108 = vld [vmem:[#allocation2] sm:$0xf]
  %v109 = vld [vmem:[#allocation2 + $0x4] sm:$0xf]
  %v110 = vld [vmem:[#allocation2 + $0x8] sm:$0x1]
  %v111 = vld [vmem:[%s3] sm:$0xf]
  %v112 = vld [vmem:[%s3 + $0x4] sm:$0xf]
  %v113 = vld [vmem:[%s3 + $0x8] sm:$0xf]
  %v114 = vld [vmem:[%s3 + $0xc] sm:$0xf]
  %v118 = vunpack.c.l.b16 %v108
  %v119 = vunpack.c.l.b16 %v109
  %v120 = vunpack.c.l.b16 %v110
  %v121 = vpack.c.b16 %v119, %v118
  %v122 = vpack.c.b16 %v120, %v120
  %v127 = vunpack.c.l.b16 %v111
  %v128 = vunpack.c.l.b16 %v112
  %v129 = vunpack.c.l.b16 %v113
  %v130 = vunpack.c.l.b16 %v114
  %v131 = vpack.c.b16 %v128, %v127
  %v132 = vpack.c.b16 %v130, %v129
  %vm135 = vcmask 261120
  %v137 = vsel %vm135, %v121, 0
  %v140 = vsel %vm135, %v122, 0
  %142 = vmatprep.subr.bf16.mxu0 0
  %143 = vmatpush1.bf16.msra.mxu0 %v131
  %144 = vmatprep.subr.bf16.mxu0 0
  %145 = vmatpush1.bf16.msra.mxu0 %v132
  %146 = vmatprep.subr.bf16.mxu0 0
  %147 = vmatpush1.bf16.msra.mxu0 0
  %148 = vmatprep.subr.bf16.mxu0 0
  %149 = vmatpush1.bf16.msra.mxu0 0
  %150 = vmatprep.subr.bf16.mxu0 0
  %151 = vmatpush1.bf16.msra.mxu0 0
  %152 = vmatprep.subr.bf16.mxu0 0
  %153 = vmatpush1.bf16.msra.mxu0 0
  %154 = vmatprep.subr.bf16.mxu0 0
  %155 = vmatpush1.bf16.msra.mxu0 0
  %156 = vmatprep.subr.bf16.mxu0 0
  %157 = vmatpush1.bf16.msra.mxu0 0
  %158 = vmatprep.subr.bf16.mxu0 0
  %159 = vmatpush1.bf16.msra.mxu0 0
  %160 = vmatprep.subr.bf16.mxu0 0
  %161 = vmatpush1.bf16.msra.mxu0 0
  %162 = vmatprep.subr.bf16.mxu0 0
  %163 = vmatpush1.bf16.msra.mxu0 0
  %164 = vmatprep.subr.bf16.mxu0 0
  %165 = vmatpush1.bf16.msra.mxu0 0
  %166 = vmatprep.subr.bf16.mxu0 0
  %167 = vmatpush1.bf16.msra.mxu0 0
  %168 = vmatprep.subr.bf16.mxu0 0
  %169 = vmatpush1.bf16.msra.mxu0 0
  %170 = vmatprep.subr.bf16.mxu0 0
  %171 = vmatpush1.bf16.msra.mxu0 0
  %172 = vmatprep.subr.bf16.mxu0 0
  %173 = vmatpush1.bf16.msra.mxu0 0
  %174 = vmatprep.mubr.bf16.mxu0 0
  %175 = vmatmul.mubr.bf16.gmra.mrb[0].mxu0 %v137
  %v176 = vpop.f32.mrb[0].mxu0
  %v177 = vadd.f32 0.0, %v176
  %v178 = vpop.f32.mrb[0].mxu0
  %v179 = vpop.f32.mrb[0].mxu0
  %v180 = vadd.f32 0.0, %v179
  %v181 = vpop.f32.mrb[0].mxu0
  %182 = vmatprep.mubr.bf16.mxu0 0
  %183 = vmatmul.mubr.bf16.gmra.mrb[0].mxu0 %v140
  %v184 = vpop.f32.mrb[0].mxu0
  %v185 = vadd.f32 0.0, %v184
  %v186 = vpop.f32.mrb[0].mxu0
  %v187 = vpop.f32.mrb[0].mxu0
  %v188 = vpop.f32.mrb[0].mxu0
  %189 = vdwg.mxu0
  %v190 = vpack.c.bf16 %v180, %v177
  %v191 = vpack.c.bf16 %v185, %v185
  %v194 = vunpack.c.l.b16 %v190
  %v195 = vunpack.c.h.b16 %v190
  %v196 = vunpack.c.l.b16 %v191
  %v197 = vpack.c.b16 %v194, %v194
  %v198 = vpack.c.b16 %v195, %v195
  %v199 = vpack.c.b16 %v196, %v196
  %vm203 = vcmask 257024
  %204 = vst.msk [vmem:[%s4] sm:$0xf] %vm203, %v197
  %205 = vst.msk [vmem:[%s4 + $0x4] sm:$0xf] %vm203, %v198
  %vm206 = vcmask 253952
  %207 = vst.msk [vmem:[%s4 + $0x8] sm:$0x1] %vm206, %v199
  // Predicated region
  $region22: #{vivit_forward.16} parent=0 // pred_check
    _
  $region23: #{vivit_forward.16} parent=0 // pred_check_branch
    %209 = sbr.rel (0) target = $region25
  $region24: #{vivit_forward.16} parent=0 // pred_region
    _
  $region25: #{vivit_forward.16} parent=0 // pred_fallthru
    _
  // Predicated region
  $region26: #{vivit_forward.16} parent=0 // pred_check
    _
  $region27: #{vivit_forward.16} parent=0 // pred_check_branch
    %211 = sbr.rel (0) target = $region29
  $region28: #{vivit_forward.16} parent=0 // pred_region
    _
  $region29: #{vivit_forward.16} parent=0 // pred_fallthru
    _

// kernel: vivit_forward.17
$region0: #{vivit_forward.17}
  #allocation0 [shape = 'u32[]', space=smem, size = 0x4, offset = 0x4, fixed_abs, tag = 'smem constant byte address 0x4 - core index']
  #allocation1 [shape = 'u32[144,128]{1,0:T(1,128)}', space=vmem, size = 0x12000, scoped, tag = 'internal scratch']
  #allocation2 [shape = 'bf16[18,32]{1,0:T(8,128)(2,1)}', space=vmem, size = 0x1800, scoped, tag = 'scratch operand']
  %s0 = inlined_call_operand.vmem [shape: bf16[18,32], index: 0, kind: input, shape index: {}]
  %s1 = inlined_call_operand.vmem [shape: f32[1,32], index: 1, kind: input, shape index: {}]
  %s2 = inlined_call_operand.vmem [shape: f32[1,32], index: 2, kind: input, shape index: {}]
  %s3 = inlined_call_operand.vmem [shape: bf16[32,64], index: 3, kind: input, shape index: {}]
  %s4 = inlined_call_operand.vmem [shape: bf16[18,64], index: 4, kind: output, shape index: {}]
  %s5 = sld [smem:[#allocation0]]
  $region30: #{vivit_forward.17} parent=0
    _
  %s7 = ssub.s32 1, %s5
  %s8 = scalar_select 0, %s7, %s5
  // Predicated region
  $region2: #{vivit_forward.17} parent=0 // pred_check
    _
  $region3: #{vivit_forward.17} parent=0 // pred_check_branch
    %10 = sbr.rel (0) target = $region5
  $region4: #{vivit_forward.17} parent=0 // pred_region
    _
  $region5: #{vivit_forward.17} parent=0 // pred_fallthru
    _
  // Predicated region
  $region6: #{vivit_forward.17} parent=0 // pred_check
    _
  $region7: #{vivit_forward.17} parent=0 // pred_check_branch
    %12 = sbr.rel (0) target = $region9
  $region8: #{vivit_forward.17} parent=0 // pred_region
    _
  $region9: #{vivit_forward.17} parent=0 // pred_fallthru
    _
  // Predicated region
  $region10: #{vivit_forward.17} parent=0 // pred_check
    _
  $region11: #{vivit_forward.17} parent=0 // pred_check_branch
    %14 = sbr.rel (0) target = $region13
  $region12: #{vivit_forward.17} parent=0 // pred_region
    _
  $region13: #{vivit_forward.17} parent=0 // pred_fallthru
    _
  // Predicated region
  $region14: #{vivit_forward.17} parent=0 // pred_check
    _
  $region15: #{vivit_forward.17} parent=0 // pred_check_branch
    %16 = sbr.rel (0) target = $region17
  $region16: #{vivit_forward.17} parent=0 // pred_region
    _
  $region17: #{vivit_forward.17} parent=0 // pred_fallthru
    _
  %p18 = scmp.eq.s32.totalorder 0, 0
  // Predicated region
  $region18: #{vivit_forward.17} parent=0 // pred_check
    %p19 = pneg %p18
  $region19: #{vivit_forward.17} parent=0 // pred_check_branch
    %21 = sbr.rel (%p19) target = $region21
  $region20: #{vivit_forward.17} parent=0 // pred_region
    %v22 = vld [vmem:[%s0] sm:$0xf]
    %v23 = vld [vmem:[%s0 + $0x4] sm:$0xf]
    %v24 = vld [vmem:[%s0 + $0x8] sm:$0x1]
    %v25 = vunpack.c.l.bf16 %v22
    %v26 = vunpack.c.l.bf16 %v23
    %v27 = vunpack.c.l.bf16 %v24
    %vm28 = vcmask 261120
    %v29 = vsel %vm28, %v25, 0.0
    %30 = vadd.xlane.f32.xlu0 %v29
    %v31 = vpop.xlane.xlu0 %30
    %v32 = vsel %vm28, %v26, 0.0
    %33 = vadd.xlane.f32.xlu0 %v32
    %v34 = vpop.xlane.xlu0 %33
    %vm35 = vcmask 254976
    %v36 = vsel %vm35, %v27, 0.0
    %37 = vadd.xlane.f32.xlu0 %v36
    %v38 = vpop.xlane.xlu0 %37
    %v39 = vrcp.pop 32.0
    %v40 = vmul.f32 %v31, %v39
    %v41 = vmul.f32 %v34, %v39
    %v42 = vmul.f32 %v38, %v39
    %v43 = vsub.f32 %v25, %v40
    %v44 = vsub.f32 %v26, %v41
    %v45 = vsub.f32 %v27, %v42
    %v46 = vmul.f32 %v43, %v43
    %v47 = vmul.f32 %v44, %v44
    %v48 = vmul.f32 %v45, %v45
    %v49 = vsel %vm28, %v46, 0.0
    %50 = vadd.xlane.f32.xlu0 %v49
    %v51 = vpop.xlane.xlu0 %50
    %v52 = vsel %vm28, %v47, 0.0
    %53 = vadd.xlane.f32.xlu0 %v52
    %v54 = vpop.xlane.xlu0 %53
    %v55 = vsel %vm35, %v48, 0.0
    %56 = vadd.xlane.f32.xlu0 %v55
    %v57 = vpop.xlane.xlu0 %56
    %v58 = vmul.f32 %v51, %v39
    %v59 = vmul.f32 %v54, %v39
    %v60 = vmul.f32 %v57, %v39
    %v61 = vadd.f32 %v58, 1e-05
    %v62 = vadd.f32 %v59, 1e-05
    %v63 = vadd.f32 %v60, 1e-05
    %v64 = vrsqrt.pop %v61
    %v65 = vrsqrt.pop %v62
    %v66 = vrsqrt.pop %v63
    %v67 = vmul.f32 %v43, %v64
    %v68 = vmul.f32 %v44, %v65
    %v69 = vmul.f32 %v45, %v66
    %v70 = vld [vmem:[%s1] sm:$0x1]
    %v72 = vlaneseq
    %v73 = vshrl.u32 %v72, 7
    %v74 = vsub.s32 0, %v73
    %v75 = vrot.slane %v70, %v74
    %v77 = vmul.f32 %v67, %v75
    %v78 = vmul.f32 %v68, %v75
    %v79 = vmul.f32 %v69, %v75
    %v80 = vld [vmem:[%s2] sm:$0x1]
    %v82 = vlaneseq
    %v83 = vshrl.u32 %v82, 7
    %v84 = vsub.s32 0, %v83
    %v85 = vrot.slane %v80, %v84
    %v87 = vadd.f32 %v77, %v85
    %v88 = vadd.f32 %v78, %v85
    %v89 = vadd.f32 %v79, %v85
    %v90 = vpack.c.bf16 %v88, %v87
    %v91 = vpack.c.bf16 %v89, %v89
    %v94 = vunpack.c.l.b16 %v90
    %v95 = vunpack.c.h.b16 %v90
    %v96 = vunpack.c.l.b16 %v91
    %v97 = vpack.c.b16 %v94, %v94
    %v98 = vpack.c.b16 %v95, %v95
    %v99 = vpack.c.b16 %v96, %v96
    %vm103 = vcmask 257024
    %104 = vst.msk [vmem:[#allocation2] sm:$0xf] %vm103, %v97
    %105 = vst.msk [vmem:[#allocation2 + $0x4] sm:$0xf] %vm103, %v98
    %vm106 = vcmask 253952
    %107 = vst.msk [vmem:[#allocation2 + $0x8] sm:$0x1] %vm106, %v99
  $region21: #{vivit_forward.17} parent=0 // pred_fallthru
    _
  %v108 = vld [vmem:[#allocation2] sm:$0xf]
  %v109 = vld [vmem:[#allocation2 + $0x4] sm:$0xf]
  %v110 = vld [vmem:[#allocation2 + $0x8] sm:$0x1]
  %v111 = vld [vmem:[%s3] sm:$0xf]
  %v112 = vld [vmem:[%s3 + $0x4] sm:$0xf]
  %v113 = vld [vmem:[%s3 + $0x8] sm:$0xf]
  %v114 = vld [vmem:[%s3 + $0xc] sm:$0xf]
  %v118 = vunpack.c.l.b16 %v108
  %v119 = vunpack.c.l.b16 %v109
  %v120 = vunpack.c.l.b16 %v110
  %v121 = vpack.c.b16 %v119, %v118
  %v122 = vpack.c.b16 %v120, %v120
  %v127 = vunpack.c.l.b16 %v111
  %v128 = vunpack.c.l.b16 %v112
  %v129 = vunpack.c.l.b16 %v113
  %v130 = vunpack.c.l.b16 %v114
  %v131 = vpack.c.b16 %v128, %v127
  %v132 = vpack.c.b16 %v130, %v129
  %vm135 = vcmask 261120
  %v137 = vsel %vm135, %v121, 0
  %v140 = vsel %vm135, %v122, 0
  %142 = vmatprep.subr.bf16.mxu0 0
  %143 = vmatpush1.bf16.msra.mxu0 %v131
  %144 = vmatprep.subr.bf16.mxu0 0
  %145 = vmatpush1.bf16.msra.mxu0 %v132
  %146 = vmatprep.subr.bf16.mxu0 0
  %147 = vmatpush1.bf16.msra.mxu0 0
  %148 = vmatprep.subr.bf16.mxu0 0
  %149 = vmatpush1.bf16.msra.mxu0 0
  %150 = vmatprep.subr.bf16.mxu0 0
  %151 = vmatpush1.bf16.msra.mxu0 0
  %152 = vmatprep.subr.bf16.mxu0 0
  %153 = vmatpush1.bf16.msra.mxu0 0
  %154 = vmatprep.subr.bf16.mxu0 0
  %155 = vmatpush1.bf16.msra.mxu0 0
  %156 = vmatprep.subr.bf16.mxu0 0
  %157 = vmatpush1.bf16.msra.mxu0 0
  %158 = vmatprep.subr.bf16.mxu0 0
  %159 = vmatpush1.bf16.msra.mxu0 0
  %160 = vmatprep.subr.bf16.mxu0 0
  %161 = vmatpush1.bf16.msra.mxu0 0
  %162 = vmatprep.subr.bf16.mxu0 0
  %163 = vmatpush1.bf16.msra.mxu0 0
  %164 = vmatprep.subr.bf16.mxu0 0
  %165 = vmatpush1.bf16.msra.mxu0 0
  %166 = vmatprep.subr.bf16.mxu0 0
  %167 = vmatpush1.bf16.msra.mxu0 0
  %168 = vmatprep.subr.bf16.mxu0 0
  %169 = vmatpush1.bf16.msra.mxu0 0
  %170 = vmatprep.subr.bf16.mxu0 0
  %171 = vmatpush1.bf16.msra.mxu0 0
  %172 = vmatprep.subr.bf16.mxu0 0
  %173 = vmatpush1.bf16.msra.mxu0 0
  %174 = vmatprep.mubr.bf16.mxu0 0
  %175 = vmatmul.mubr.bf16.gmra.mrb[0].mxu0 %v137
  %v176 = vpop.f32.mrb[0].mxu0
  %v177 = vadd.f32 0.0, %v176
  %v178 = vpop.f32.mrb[0].mxu0
  %v179 = vpop.f32.mrb[0].mxu0
  %v180 = vadd.f32 0.0, %v179
  %v181 = vpop.f32.mrb[0].mxu0
  %182 = vmatprep.mubr.bf16.mxu0 0
  %183 = vmatmul.mubr.bf16.gmra.mrb[0].mxu0 %v140
  %v184 = vpop.f32.mrb[0].mxu0
  %v185 = vadd.f32 0.0, %v184
  %v186 = vpop.f32.mrb[0].mxu0
  %v187 = vpop.f32.mrb[0].mxu0
  %v188 = vpop.f32.mrb[0].mxu0
  %189 = vdwg.mxu0
  %v190 = vpack.c.bf16 %v180, %v177
  %v191 = vpack.c.bf16 %v185, %v185
  %v194 = vunpack.c.l.b16 %v190
  %v195 = vunpack.c.h.b16 %v190
  %v196 = vunpack.c.l.b16 %v191
  %v197 = vpack.c.b16 %v194, %v194
  %v198 = vpack.c.b16 %v195, %v195
  %v199 = vpack.c.b16 %v196, %v196
  %vm203 = vcmask 519168
  %204 = vst.msk [vmem:[%s4] sm:$0xf] %vm203, %v197
  %205 = vst.msk [vmem:[%s4 + $0x4] sm:$0xf] %vm203, %v198
  %vm206 = vcmask 516096
  %207 = vst.msk [vmem:[%s4 + $0x8] sm:$0x1] %vm206, %v199
  // Predicated region
  $region22: #{vivit_forward.17} parent=0 // pred_check
    _
  $region23: #{vivit_forward.17} parent=0 // pred_check_branch
    %209 = sbr.rel (0) target = $region25
  $region24: #{vivit_forward.17} parent=0 // pred_region
    _
  $region25: #{vivit_forward.17} parent=0 // pred_fallthru
    _
  // Predicated region
  $region26: #{vivit_forward.17} parent=0 // pred_check
    _
  $region27: #{vivit_forward.17} parent=0 // pred_check_branch
    %211 = sbr.rel (0) target = $region29
  $region28: #{vivit_forward.17} parent=0 // pred_region
    _
  $region29: #{vivit_forward.17} parent=0 // pred_fallthru
    _

// kernel: vivit_forward.18
$region0: #{vivit_forward.18}
  #allocation0 [shape = 'u32[]', space=smem, size = 0x4, offset = 0x4, fixed_abs, tag = 'smem constant byte address 0x4 - core index']
  #allocation1 [shape = 'u32[144,128]{1,0:T(1,128)}', space=vmem, size = 0x12000, scoped, tag = 'internal scratch']
  #allocation2 [shape = 'f32[4,9,1]{2,1,0:T(8,128)}', space=vmem, size = 0x8000, scoped, tag = 'scratch operand']
  #allocation3 [shape = 'f32[4,9,1]{2,1,0:T(8,128)}', space=vmem, size = 0x8000, scoped, tag = 'scratch operand']
  #allocation4 [shape = 'f32[9,32]{1,0:T(8,128)}', space=vmem, size = 0x2000, scoped, tag = 'scratch operand']
  %s0 = inlined_call_operand.vmem [shape: bf16[2,9,32], index: 0, kind: input, shape index: {}]
  %s1 = inlined_call_operand.vmem [shape: bf16[2,9,64], index: 1, kind: input, shape index: {}]
  %s2 = inlined_call_operand.vmem [shape: bf16[2,9,32], index: 2, kind: output, shape index: {}]
  %s3 = sld [smem:[#allocation0]]
  $region49: #{vivit_forward.18} parent=0
    _
  %s5 = ssub.s32 1, %s3
  %s6 = scalar_select 0, %s5, %s3
  loop: start=0, step=1, limit=4
  $region2: #{vivit_forward.18} parent=0 // loop_pre_header
    _
  $region3: #{vivit_forward.18} parent=0 // loop_header
    %s8 = sphi 0, %s12
    %p9 = scmp.ge.s32.totalorder %s8, 4
    %s15 = sphi 0, %s34
    %s16 = sphi 0, %s30
    %s17 = sphi 0, %s26
    %s18 = sphi 0, %s15
    %s19 = sphi 0, %s16
    %s20 = sphi 0, %s17
    %s21 = sphi 0, %s18
    %s22 = sphi 0, %s19
    %s23 = sphi 0, %s20
    %s39 = sphi 0, %s41
    %s42 = sphi 0, %s39
    %s43 = sphi 0, %s42
    %s59 = sphi 0, %s43
    %s67 = sphi 0, %s69
    %s70 = sphi 0, %s67
    %s71 = sphi 0, %s70
    %s87 = sphi 0, %s71
    %s95 = sphi 0, %s97
    %s98 = sphi 0, %s95
    %s99 = sphi 0, %s98
    %s115 = sphi 0, %s99
  $region4: #{vivit_forward.18} parent=0 // loop_header_branch
    %11 = sbr.rel (%p9) target = $region8
  $region5: #{vivit_forward.18} parent=0 // loop_body
    %s13 = ssub.s32 %s8, 1
    %s14 = ssub.s32 %s8, 2
    %s24 = sadd.s32 1, %s17
    %p25 = scmp.ge.s32.totalorder %s24, 1
    %s26 = scalar_select %p25, 0, %s24
    %s27 = sadd.s32 1, %s16
    %s28 = scalar_select %p25, %s27, %s16
    %p29 = scmp.ge.s32.totalorder %s28, 1
    %s30 = scalar_select %p29, 0, %s28
    %s31 = sadd.s32 1, %s15
    %s32 = scalar_select %p29, %s31, %s15
    %p33 = scmp.ge.s32.totalorder %s32, 2
    %s34 = scalar_select %p33, 0, %s32
    %s35 = ssub.s32 %s15, %s34
    %s36 = ssub.s32 %s16, %s30
    %s37 = sor.u32 %s35, %s36
    %p38 = scmp.eq.s32.totalorder %s37, 0
    %s40 = sadd.s32 %s39, 1
    %s41 = scalar_select %p38, %s39, %s40
    %p44 = pneg %p38
    %p45 = scmp.eq.s32.totalorder %s8, 1
    %p46 = por %p44, %p45
    %p47 = scmp.ne.s32.totalorder %s39, %s42
    %p48 = scmp.eq.s32.totalorder %s8, 0
    %p49 = por %p47, %p48
    %p50 = scmp.ne.s32.totalorder %s39, %s42
    %p51 = scmp.eq.s32.totalorder %s13, 1
    %p52 = por %p50, %p51
    %p53 = scmp.ne.s32.totalorder %s42, %s43
    %p54 = scmp.eq.s32.totalorder %s13, 0
    %p55 = por %p53, %p54
    %p56 = scmp.ne.s32.totalorder %s42, %s43
    %p57 = scmp.eq.s32.totalorder %s14, 1
    %p58 = por %p56, %p57
    %p60 = scmp.ne.s32.totalorder %s43, %s59
    %p61 = scmp.eq.s32.totalorder %s14, 0
    %p62 = por %p60, %p61
    %s63 = ssub.s32 %s15, %s34
    %s64 = ssub.s32 %s17, %s26
    %s65 = sor.u32 %s63, %s64
    %p66 = scmp.eq.s32.totalorder %s65, 0
    %s68 = sadd.s32 %s67, 1
    %s69 = scalar_select %p66, %s67, %s68
    %p72 = pneg %p66
    %p73 = scmp.eq.s32.totalorder %s8, 1
    %p74 = por %p72, %p73
    %p75 = scmp.ne.s32.totalorder %s67, %s70
    %p76 = scmp.eq.s32.totalorder %s8, 0
    %p77 = por %p75, %p76
    %p78 = scmp.ne.s32.totalorder %s67, %s70
    %p79 = scmp.eq.s32.totalorder %s13, 1
    %p80 = por %p78, %p79
    %p81 = scmp.ne.s32.totalorder %s70, %s71
    %p82 = scmp.eq.s32.totalorder %s13, 0
    %p83 = por %p81, %p82
    %p84 = scmp.ne.s32.totalorder %s70, %s71
    %p85 = scmp.eq.s32.totalorder %s14, 1
    %p86 = por %p84, %p85
    %p88 = scmp.ne.s32.totalorder %s71, %s87
    %p89 = scmp.eq.s32.totalorder %s14, 0
    %p90 = por %p88, %p89
    %s91 = ssub.s32 %s15, %s34
    %s92 = ssub.s32 %s16, %s30
    %s93 = sor.u32 %s91, %s92
    %p94 = scmp.eq.s32.totalorder %s93, 0
    %s96 = sadd.s32 %s95, 1
    %s97 = scalar_select %p94, %s95, %s96
    %p100 = pneg %p94
    %p101 = scmp.eq.s32.totalorder %s8, 1
    %p102 = por %p100, %p101
    %p103 = scmp.ne.s32.totalorder %s95, %s98
    %p104 = scmp.eq.s32.totalorder %s8, 0
    %p105 = por %p103, %p104
    %p106 = scmp.ne.s32.totalorder %s95, %s98
    %p107 = scmp.eq.s32.totalorder %s13, 1
    %p108 = por %p106, %p107
    %p109 = scmp.ne.s32.totalorder %s98, %s99
    %p110 = scmp.eq.s32.totalorder %s13, 0
    %p111 = por %p109, %p110
    %p112 = scmp.ne.s32.totalorder %s98, %s99
    %p113 = scmp.eq.s32.totalorder %s14, 1
    %p114 = por %p112, %p113
    %p116 = scmp.ne.s32.totalorder %s99, %s115
    %p117 = scmp.eq.s32.totalorder %s14, 0
    %p118 = por %p116, %p117
    %p119 = scmp.le.s32.totalorder 1, %s8
    %p120 = scmp.lt.s32.totalorder %s8, 3
    %p121 = pnand %p119, %p120
    %p122 = pneg %p121
    // Predicated region
    $region9: #{vivit_forward.18} parent=5 // pred_check
      _
    $region10: #{vivit_forward.18} parent=5 // pred_check_branch
      %124 = sbr.rel (%p121) target = $region12
    $region11: #{vivit_forward.18} parent=5 // pred_region
      %s125 = ssub.s32 %s8, 1
    $region12: #{vivit_forward.18} parent=5 // pred_fallthru
      _
    %p126 = scmp.lt.s32.totalorder %s8, 2
    // Predicated region
    $region13: #{vivit_forward.18} parent=5 // pred_check
      %p127 = pneg %p126
    $region14: #{vivit_forward.18} parent=5 // pred_check_branch
      %129 = sbr.rel (%p127) target = $region16
    $region15: #{vivit_forward.18} parent=5 // pred_region
      // Predicated region
      $region17: #{vivit_forward.18} parent=15 // pred_check
        %p130 = pneg %p49
      $region18: #{vivit_forward.18} parent=15 // pred_check_branch
        %132 = sbr.rel (%p130) target = $region20
      $region19: #{vivit_forward.18} parent=15 // pred_region
        %s133 = smul.u32 2, %s16
        %p134 = scmp.lt.s32.totalorder %s15, 1
        %s135 = scalar_select %p134, %s15, 1
        %p136 = scmp.lt.s32.totalorder %s133, 1
        %s137 = scalar_select %p136, %s133, 1
        %s138 = smul.addr %s135, 2
        %s139 = sadd.s32 %s137, %s138
        %s140 = smul.addr %s139, 4
        %s141 = scalar_lea.vmem %s0, %s140
        %s142 = smul.u32 2, %s16
      $region20: #{vivit_forward.18} parent=15 // pred_fallthru
        _
      // Predicated region
      $region21: #{vivit_forward.18} parent=15 // pred_check
        %p143 = pneg %p77
      $region22: #{vivit_forward.18} parent=15 // pred_check_branch
        %145 = sbr.rel (%p143) target = $region24
      $region23: #{vivit_forward.18} parent=15 // pred_region
        %s146 = smul.u32 2, %s17
        %p147 = scmp.lt.s32.totalorder %s15, 1
        %s148 = scalar_select %p147, %s15, 1
        %p149 = scmp.lt.s32.totalorder %s146, 1
        %s150 = scalar_select %p149, %s146, 1
        %s151 = smul.addr %s148, 2
        %s152 = sadd.s32 %s150, %s151
        %s153 = smul.addr %s152, 4
        %s154 = scalar_lea.vmem %s1, %s153
        %s155 = smul.u32 2, %s17
      $region24: #{vivit_forward.18} parent=15 // pred_fallthru
        _
    $region16: #{vivit_forward.18} parent=5 // pred_fallthru
      _
    %p156 = scmp.le.s32.totalorder 1, %s8
    %p157 = scmp.lt.s32.totalorder %s8, 3
    %p158 = pnand %p156, %p157
    %p159 = pneg %p158
    // Predicated region
    $region25: #{vivit_forward.18} parent=5 // pred_check
      _
    $region26: #{vivit_forward.18} parent=5 // pred_check_branch
      %161 = sbr.rel (%p158) target = $region28
    $region27: #{vivit_forward.18} parent=5 // pred_region
      %s162 = ssub.s32 %s8, 1
      %s163 = smul.u32 2, %s19
      %p164 = scmp.lt.s32.totalorder %s18, 1
      %s165 = scalar_select %p164, %s18, 1
      %p166 = scmp.lt.s32.totalorder %s163, 1
      %s167 = scalar_select %p166, %s163, 1
      %s168 = smul.addr %s165, 2
      %s169 = sadd.s32 %s167, %s168
      %s170 = smul.addr %s169, 4
      %s171 = scalar_lea.vmem %s0, %s170
      %p172 = pneg %p55
      %p173 = pneg %p52
      %s174 = smul.u32 2, %s20
      %p175 = scmp.lt.s32.totalorder %s18, 1
      %s176 = scalar_select %p175, %s18, 1
      %p177 = scmp.lt.s32.totalorder %s174, 1
      %s178 = scalar_select %p177, %s174, 1
      %s179 = smul.addr %s176, 2
      %s180 = sadd.s32 %s178, %s179
      %s181 = smul.addr %s180, 4
      %s182 = scalar_lea.vmem %s1, %s181
      %p183 = pneg %p83
      %p184 = pneg %p80
      %p185 = pneg %p111
      %p186 = pneg %p108
      %s187 = smul.u32 2, %s19
      %p188 = scmp.lt.s32.totalorder %s18, 1
      %s189 = scalar_select %p188, %s18, 1
      %p190 = scmp.lt.s32.totalorder %s187, 1
      %s191 = scalar_select %p190, %s187, 1
      %s192 = smul.addr %s189, 2
      %s193 = sadd.s32 %s191, %s192
      %s194 = smul.addr %s193, 4
      %s195 = scalar_lea.vmem %s2, %s194
      %s196 = smul.u32 2, %s19
      %p197 = scmp.lt.s32.totalorder %s18, 1
      %s198 = scalar_select %p197, %s18, 1
      %p199 = scmp.lt.s32.totalorder %s196, 1
      %s200 = scalar_select %p199, %s196, 1
      %s201 = smul.addr %s198, 2
      %s202 = sadd.s32 %s200, %s201
      %s203 = smul.addr %s202, 4
      %s204 = scalar_lea.vmem %s0, %s203
      %s205 = smul.u32 2, %s19
      %s206 = smul.u32 2, %s20
      %p207 = scmp.lt.s32.totalorder %s18, 1
      %s208 = scalar_select %p207, %s18, 1
      %p209 = scmp.lt.s32.totalorder %s206, 1
      %s210 = scalar_select %p209, %s206, 1
      %s211 = smul.addr %s208, 2
      %s212 = sadd.s32 %s210, %s211
      %s213 = smul.addr %s212, 4
      %s214 = scalar_lea.vmem %s1, %s213
      %s215 = smul.u32 2, %s20
      %s216 = smul.u32 2, %s19
      %p217 = scmp.lt.s32.totalorder %s18, 1
      %s218 = scalar_select %p217, %s18, 1
      %p219 = scmp.lt.s32.totalorder %s216, 1
      %s220 = scalar_select %p219, %s216, 1
      %s221 = smul.addr %s218, 2
      %s222 = sadd.s32 %s220, %s221
      %s223 = smul.addr %s222, 4
      %s224 = scalar_lea.vmem %s2, %s223
      %s225 = smul.u32 2, %s19
      %p227 = scmp.eq.s32.totalorder %s20, 0
      // Predicated region
      $region29: #{vivit_forward.18} parent=27 // pred_check
        %p228 = pneg %p227
      $region30: #{vivit_forward.18} parent=27 // pred_check_branch
        %230 = sbr.rel (%p228) target = $region32
      $region31: #{vivit_forward.18} parent=27 // pred_region
        %vm231 = vcmask 7168
        %232 = vst.msk [vmem:[#allocation2] sm:$0xff] %vm231, -inf
        %vm233 = vcmask 0
        %234 = vst.msk [vmem:[#allocation2 + $0x8] sm:$0x1] %vm233, -inf
        %235 = vst.msk [vmem:[#allocation2 + $0x10] sm:$0xff] %vm231, -inf
        %236 = vst.msk [vmem:[#allocation2 + $0x18] sm:$0x1] %vm233, -inf
        %237 = vst.msk [vmem:[#allocation2 + $0x20] sm:$0xff] %vm231, -inf
        %238 = vst.msk [vmem:[#allocation2 + $0x28] sm:$0x1] %vm233, -inf
        %239 = vst.msk [vmem:[#allocation2 + $0x30] sm:$0xff] %vm231, -inf
        %240 = vst.msk [vmem:[#allocation2 + $0x38] sm:$0x1] %vm233, -inf
        %241 = vst.msk [vmem:[#allocation3] sm:$0xff] %vm231, 0.0
        %242 = vst.msk [vmem:[#allocation3 + $0x8] sm:$0x1] %vm233, 0.0
        %243 = vst.msk [vmem:[#allocation3 + $0x10] sm:$0xff] %vm231, 0.0
        %244 = vst.msk [vmem:[#allocation3 + $0x18] sm:$0x1] %vm233, 0.0
        %245 = vst.msk [vmem:[#allocation3 + $0x20] sm:$0xff] %vm231, 0.0
        %246 = vst.msk [vmem:[#allocation3 + $0x28] sm:$0x1] %vm233, 0.0
        %247 = vst.msk [vmem:[#allocation3 + $0x30] sm:$0xff] %vm231, 0.0
        %248 = vst.msk [vmem:[#allocation3 + $0x38] sm:$0x1] %vm233, 0.0
        %vm249 = vcmask 261120
        %250 = vst.msk [vmem:[#allocation4] sm:$0xff] %vm249, 0.0
        %vm251 = vcmask 253952
        %252 = vst.msk [vmem:[#allocation4 + $0x8] sm:$0x1] %vm251, 0.0
      $region32: #{vivit_forward.18} parent=27 // pred_fallthru
        _
      %v253 = vld [vmem:[%s204] sm:$0xf]
      %v254 = vld [vmem:[%s204 + $0x4] sm:$0x1]
      %v255 = vld [vmem:[%s214] sm:$0xf]
      %v256 = vld [vmem:[%s214 + $0x4] sm:$0x1]
      %v259 = vunpack.c.l.b16 %v253
      %v260 = vunpack.c.l.b16 %v254
      %v261 = vpack.c.b16 %v260, %v259
      %v264 = vunpack.c.l.b16 %v255
      %v265 = vunpack.c.l.b16 %v256
      %v266 = vpack.c.b16 %v265, %v264
      %vm267 = vcmask 64512
      %v269 = vsel %vm267, %v261, 0
      %v272 = vsel %vm267, %v266, 0
      %274 = vmatprep.subr.bf16.mxu0 0
      %275 = vmatpush1.bf16.xpose.msra.mxu0 %v272
      %276 = vmatprep.subr.bf16.mxu0 0
      %277 = vmatpush1.bf16.xpose.msra.mxu0 0
      %278 = vmatprep.subr.bf16.mxu0 0
      %279 = vmatpush1.bf16.xpose.msra.mxu0 0
      %280 = vmatprep.subr.bf16.mxu0 0
      %281 = vmatpush1.bf16.xpose.msra.mxu0 0
      %282 = vmatprep.subr.bf16.mxu0 0
      %283 = vmatpush1.bf16.xpose.msra.mxu0 0
      %284 = vmatprep.subr.bf16.mxu0 0
      %285 = vmatpush1.bf16.xpose.msra.mxu0 0
      %286 = vmatprep.subr.bf16.mxu0 0
      %287 = vmatpush1.bf16.xpose.msra.mxu0 0
      %288 = vmatprep.subr.bf16.mxu0 0
      %289 = vmatpush1.bf16.xpose.msra.mxu0 0
      %290 = vmatprep.subr.bf16.mxu0 0
      %291 = vmatpush1.bf16.xpose.msra.mxu0 0
      %292 = vmatprep.subr.bf16.mxu0 0
      %293 = vmatpush1.bf16.xpose.msra.mxu0 0
      %294 = vmatprep.subr.bf16.mxu0 0
      %295 = vmatpush1.bf16.xpose.msra.mxu0 0
      %296 = vmatprep.subr.bf16.mxu0 0
      %297 = vmatpush1.bf16.xpose.msra.mxu0 0
      %298 = vmatprep.subr.bf16.mxu0 0
      %299 = vmatpush1.bf16.xpose.msra.mxu0 0
      %300 = vmatprep.subr.bf16.mxu0 0
      %301 = vmatpush1.bf16.xpose.msra.mxu0 0
      %302 = vmatprep.subr.bf16.mxu0 0
      %303 = vmatpush1.bf16.xpose.msra.mxu0 0
      %304 = vmatprep.subr.bf16.mxu0 0
      %305 = vmatpush1.bf16.xpose.msra.mxu0 0
      %306 = vmatprep.mubr.bf16.mxu0 0
      %307 = vmatmul.mubr.bf16.gmra.mrb[0].mxu0 %v269
      %v308 = vpop.f32.mrb[0].mxu0
      %v309 = vadd.f32 0.0, %v308
      %v310 = vpop.f32.mrb[0].mxu0
      %v311 = vpop.f32.mrb[0].mxu0
      %v312 = vadd.f32 0.0, %v311
      %v313 = vpop.f32.mrb[0].mxu0
      %314 = vdwg.mxu0
      %v315 = vmul.f32 %v309, 0.35355338
      %v316 = vmul.f32 %v312, 0.35355338
      %v317 = vld [vmem:[#allocation2] sm:$0xff]
      %v318 = vld [vmem:[#allocation2 + $0x8] sm:$0x1]
      %v319 = vld [vmem:[#allocation3] sm:$0xff]
      %v320 = vld [vmem:[#allocation3 + $0x8] sm:$0x1]
      %vm321 = vcmask 72704
      %v322 = vsel %vm321, %v315, -inf
      %323 = vmax.xlane.f32.xlu0 %v322
      %v324 = vpop.xlane.xlu0 %323
      %vm325 = vcmask 65536
      %v326 = vsel %vm325, %v316, -inf
      %327 = vmax.xlane.f32.xlu0 %v326
      %v328 = vpop.xlane.xlu0 %327
      %v329 = vmax.f32 %v317, %v324
      %v330 = vmax.f32 %v318, %v328
      %v331 = vsub.f32 %v317, %v329
      %v332 = vsub.f32 %v318, %v330
      %v333 = vmul.f32 %v331, 1.442695
      %v334 = vpow.pop %v333
      %v335 = vmul.f32 %v332, 1.442695
      %v336 = vpow.pop %v335
      %338 = vset.pattern.permute.xlu0 0
      %339 = vperm.xlu0 %338, %v329
      %v340 = vpop.permute.xlu0 %339
      %343 = vset.pattern.permute.xlu0 0
      %344 = vperm.xlu0 %343, %v330
      %v345 = vpop.permute.xlu0 %344
      %v347 = vsub.f32 %v315, %v340
      %v348 = vsub.f32 %v316, %v345
      %v349 = vmul.f32 %v347, 1.442695
      %v350 = vpow.pop %v349
      %v351 = vmul.f32 %v348, 1.442695
      %v352 = vpow.pop %v351
      %v353 = vmul.f32 %v334, %v319
      %v354 = vmul.f32 %v336, %v320
      %v355 = vsel %vm321, %v350, 0.0
      %356 = vadd.xlane.f32.xlu0 %v355
      %v357 = vpop.xlane.xlu0 %356
      %v358 = vsel %vm325, %v352, 0.0
      %359 = vadd.xlane.f32.xlu0 %v358
      %v360 = vpop.xlane.xlu0 %359
      %v361 = vadd.f32 %v353, %v357
      %v362 = vadd.f32 %v354, %v360
      %vm363 = vcmask 7168
      %364 = vst.msk [vmem:[#allocation3] sm:$0xff] %vm363, %v361
      %vm365 = vcmask 0
      %366 = vst.msk [vmem:[#allocation3 + $0x8] sm:$0x1] %vm365, %v362
      %v367 = vld [vmem:[#allocation4] sm:$0xff]
      %v368 = vld [vmem:[#allocation4 + $0x8] sm:$0x1]
      %370 = vset.pattern.permute.xlu0 0
      %371 = vperm.xlu0 %370, %v334
      %v372 = vpop.permute.xlu0 %371
      %375 = vset.pattern.permute.xlu0 0
      %376 = vperm.xlu0 %375, %v336
      %v377 = vpop.permute.xlu0 %376
      %v379 = vmul.f32 %v372, %v367
      %v380 = vmul.f32 %v377, %v368
      %v381 = vpack.c.bf16 %v352, %v350
      %382 = vrot.lane.b32.xlu0 %v266, 96
      %v383 = vpop.permute.xlu0 %382
      %v385 = vsel %vm321, %v381, 0
      %vm387 = vcmask 1043456
      %vm388 = vcmask 1044480
      %v389 = vsel %vm387, 4294967295, 65535
      %v390 = vsel %vm388, %v389, 0
      %v392 = vand.u32 %v383, %v390
      %394 = vmatprep.subr.bf16.mxu0 0
      %395 = vmatpush1.bf16.msra.mxu0 %v392
      %396 = vmatprep.subr.bf16.mxu0 0
      %397 = vmatpush1.bf16.msra.mxu0 0
      %398 = vmatprep.subr.bf16.mxu0 0
      %399 = vmatpush1.bf16.msra.mxu0 0
      %400 = vmatprep.subr.bf16.mxu0 0
      %401 = vmatpush1.bf16.msra.mxu0 0
      %402 = vmatprep.subr.bf16.mxu0 0
      %403 = vmatpush1.bf16.msra.mxu0 0
      %404 = vmatprep.subr.bf16.mxu0 0
      %405 = vmatpush1.bf16.msra.mxu0 0
      %406 = vmatprep.subr.bf16.mxu0 0
      %407 = vmatpush1.bf16.msra.mxu0 0
      %408 = vmatprep.subr.bf16.mxu0 0
      %409 = vmatpush1.bf16.msra.mxu0 0
      %410 = vmatprep.subr.bf16.mxu0 0
      %411 = vmatpush1.bf16.msra.mxu0 0
      %412 = vmatprep.subr.bf16.mxu0 0
      %413 = vmatpush1.bf16.msra.mxu0 0
      %414 = vmatprep.subr.bf16.mxu0 0
      %415 = vmatpush1.bf16.msra.mxu0 0
      %416 = vmatprep.subr.bf16.mxu0 0
      %417 = vmatpush1.bf16.msra.mxu0 0
      %418 = vmatprep.subr.bf16.mxu0 0
      %419 = vmatpush1.bf16.msra.mxu0 0
      %420 = vmatprep.subr.bf16.mxu0 0
      %421 = vmatpush1.bf16.msra.mxu0 0
      %422 = vmatprep.subr.bf16.mxu0 0
      %423 = vmatpush1.bf16.msra.mxu0 0
      %424 = vmatprep.subr.bf16.mxu0 0
      %425 = vmatpush1.bf16.msra.mxu0 0
      %426 = vmatprep.mubr.bf16.mxu0 0
      %427 = vmatmul.mubr.bf16.gmra.mrb[0].mxu0 %v385
      %v428 = vpop.f32.mrb[0].mxu0
      %v429 = vadd.f32 0.0, %v428
      %v430 = vpop.f32.mrb[0].mxu0
      %v431 = vpop.f32.mrb[0].mxu0
      %v432 = vadd.f32 0.0, %v431
      %v433 = vpop.f32.mrb[0].mxu0
      %434 = vdwg.mxu0
      %v435 = vadd.f32 %v379, %v429
      %v436 = vadd.f32 %v380, %v432
      %437 = vst.msk [vmem:[#allocation4] sm:$0xff] %vm267, %v435
      %vm438 = vcmask 57344
      %439 = vst.msk [vmem:[#allocation4 + $0x8] sm:$0x1] %vm438, %v436
      %440 = vst.msk [vmem:[#allocation2] sm:$0xff] %vm363, %v329
      %441 = vst.msk [vmem:[#allocation2 + $0x8] sm:$0x1] %vm365, %v330
      %442 = vrot.lane.b32.xlu0 %v261, 120
      %v443 = vpop.permute.xlu0 %442
      %444 = vrot.lane.b32.xlu0 %v266, 120
      %v445 = vpop.permute.xlu0 %444
      %v447 = vsel %vm267, %v443, 0
      %v450 = vsel %vm267, %v445, 0
      %452 = vmatprep.subr.bf16.mxu0 0
      %453 = vmatpush1.bf16.xpose.msra.mxu0 %v450
      %454 = vmatprep.subr.bf16.mxu0 0
      %455 = vmatpush1.bf16.xpose.msra.mxu0 0
      %456 = vmatprep.subr.bf16.mxu0 0
      %457 = vmatpush1.bf16.xpose.msra.mxu0 0
      %458 = vmatprep.subr.bf16.mxu0 0
      %459 = vmatpush1.bf16.xpose.msra.mxu0 0
      %460 = vmatprep.subr.bf16.mxu0 0
      %461 = vmatpush1.bf16.xpose.msra.mxu0 0
      %462 = vmatprep.subr.bf16.mxu0 0
      %463 = vmatpush1.bf16.xpose.msra.mxu0 0
      %464 = vmatprep.subr.bf16.mxu0 0
      %465 = vmatpush1.bf16.xpose.msra.mxu0 0
      %466 = vmatprep.subr.bf16.mxu0 0
      %467 = vmatpush1.bf16.xpose.msra.mxu0 0
      %468 = vmatprep.subr.bf16.mxu0 0
      %469 = vmatpush1.bf16.xpose.msra.mxu0 0
      %470 = vmatprep.subr.bf16.mxu0 0
      %471 = vmatpush1.bf16.xpose.msra.mxu0 0
      %472 = vmatprep.subr.bf16.mxu0 0
      %473 = vmatpush1.bf16.xpose.msra.mxu0 0
      %474 = vmatprep.subr.bf16.mxu0 0
      %475 = vmatpush1.bf16.xpose.msra.mxu0 0
      %476 = vmatprep.subr.bf16.mxu0 0
      %477 = vmatpush1.bf16.xpose.msra.mxu0 0
      %478 = vmatprep.subr.bf16.mxu0 0
      %479 = vmatpush1.bf16.xpose.msra.mxu0 0
      %480 = vmatprep.subr.bf16.mxu0 0
      %481 = vmatpush1.bf16.xpose.msra.mxu0 0
      %482 = vmatprep.subr.bf16.mxu0 0
      %483 = vmatpush1.bf16.xpose.msra.mxu0 0
      %484 = vmatprep.mubr.bf16.mxu0 0
      %485 = vmatmul.mubr.bf16.gmra.mrb[0].mxu0 %v447
      %v486 = vpop.f32.mrb[0].mxu0
      %v487 = vadd.f32 0.0, %v486
      %v488 = vpop.f32.mrb[0].mxu0
      %v489 = vpop.f32.mrb[0].mxu0
      %v490 = vadd.f32 0.0, %v489
      %v491 = vpop.f32.mrb[0].mxu0
      %492 = vdwg.mxu0
      %v493 = vmul.f32 %v487, 0.35355338
      %v494 = vmul.f32 %v490, 0.35355338
      %s495 = scalar_lea.vmem [#allocation2], 16
      %v496 = vld [vmem:[%s495] sm:$0xff]
      %v497 = vld [vmem:[%s495 + $0x8] sm:$0x1]
      %s498 = scalar_lea.vmem [#allocation3], 16
      %v499 = vld [vmem:[%s498] sm:$0xff]
      %v500 = vld [vmem:[%s498 + $0x8] sm:$0x1]
      %v501 = vsel %vm321, %v493, -inf
      %502 = vmax.xlane.f32.xlu0 %v501
      %v503 = vpop.xlane.xlu0 %502
      %v504 = vsel %vm325, %v494, -inf
      %505 = vmax.xlane.f32.xlu0 %v504
      %v506 = vpop.xlane.xlu0 %505
      %v507 = vmax.f32 %v496, %v503
      %v508 = vmax.f32 %v497, %v506
      %v509 = vsub.f32 %v496, %v507
      %v510 = vsub.f32 %v497, %v508
      %v511 = vmul.f32 %v509, 1.442695
      %v512 = vpow.pop %v511
      %v513 = vmul.f32 %v510, 1.442695
      %v514 = vpow.pop %v513
      %516 = vset.pattern.permute.xlu0 0
      %517 = vperm.xlu0 %516, %v507
      %v518 = vpop.permute.xlu0 %517
      %521 = vset.pattern.permute.xlu0 0
      %522 = vperm.xlu0 %521, %v508
      %v523 = vpop.permute.xlu0 %522
      %v525 = vsub.f32 %v493, %v518
      %v526 = vsub.f32 %v494, %v523
      %v527 = vmul.f32 %v525, 1.442695
      %v528 = vpow.pop %v527
      %v529 = vmul.f32 %v526, 1.442695
      %v530 = vpow.pop %v529
      %v531 = vmul.f32 %v512, %v499
      %v532 = vmul.f32 %v514, %v500
      %v533 = vsel %vm321, %v528, 0.0
      %534 = vadd.xlane.f32.xlu0 %v533
      %v535 = vpop.xlane.xlu0 %534
      %v536 = vsel %vm325, %v530, 0.0
      %537 = vadd.xlane.f32.xlu0 %v536
      %v538 = vpop.xlane.xlu0 %537
      %v539 = vadd.f32 %v531, %v535
      %v540 = vadd.f32 %v532, %v538
      %541 = vst.msk [vmem:[%s498] sm:$0xff] %vm363, %v539
      %542 = vst.msk [vmem:[%s498 + $0x8] sm:$0x1] %vm365, %v540
      %v543 = vld [vmem:[#allocation4] sm:$0xff]
      %v544 = vld [vmem:[#allocation4 + $0x8] sm:$0x1]
      %546 = vset.pattern.permute.xlu0 0
      %547 = vperm.xlu0 %546, %v512
      %v548 = vpop.permute.xlu0 %547
      %551 = vset.pattern.permute.xlu0 0
      %552 = vperm.xlu0 %551, %v514
      %v553 = vpop.permute.xlu0 %552
      %v555 = vmul.f32 %v548, %v543
      %v556 = vmul.f32 %v553, %v544
      %v557 = vpack.c.bf16 %v530, %v528
      %558 = vrot.lane.b32.xlu0 %v266, 88
      %v559 = vpop.permute.xlu0 %558
      %v561 = vsel %vm321, %v557, 0
      %v564 = vand.u32 %v559, %v390
      %566 = vmatprep.subr.bf16.mxu0 0
      %567 = vmatpush1.bf16.msra.mxu0 %v564
      %568 = vmatprep.subr.bf16.mxu0 0
      %569 = vmatpush1.bf16.msra.mxu0 0
      %570 = vmatprep.subr.bf16.mxu0 0
      %571 = vmatpush1.bf16.msra.mxu0 0
      %572 = vmatprep.subr.bf16.mxu0 0
      %573 = vmatpush1.bf16.msra.mxu0 0
      %574 = vmatprep.subr.bf16.mxu0 0
      %575 = vmatpush1.bf16.msra.mxu0 0
      %576 = vmatprep.subr.bf16.mxu0 0
      %577 = vmatpush1.bf16.msra.mxu0 0
      %578 = vmatprep.subr.bf16.mxu0 0
      %579 = vmatpush1.bf16.msra.mxu0 0
      %580 = vmatprep.subr.bf16.mxu0 0
      %581 = vmatpush1.bf16.msra.mxu0 0
      %582 = vmatprep.subr.bf16.mxu0 0
      %583 = vmatpush1.bf16.msra.mxu0 0
      %584 = vmatprep.subr.bf16.mxu0 0
      %585 = vmatpush1.bf16.msra.mxu0 0
      %586 = vmatprep.subr.bf16.mxu0 0
      %587 = vmatpush1.bf16.msra.mxu0 0
      %588 = vmatprep.subr.bf16.mxu0 0
      %589 = vmatpush1.bf16.msra.mxu0 0
      %590 = vmatprep.subr.bf16.mxu0 0
      %591 = vmatpush1.bf16.msra.mxu0 0
      %592 = vmatprep.subr.bf16.mxu0 0
      %593 = vmatpush1.bf16.msra.mxu0 0
      %594 = vmatprep.subr.bf16.mxu0 0
      %595 = vmatpush1.bf16.msra.mxu0 0
      %596 = vmatprep.subr.bf16.mxu0 0
      %597 = vmatpush1.bf16.msra.mxu0 0
      %598 = vmatprep.mubr.bf16.mxu0 0
      %599 = vmatmul.mubr.bf16.gmra.mrb[0].mxu0 %v561
      %v600 = vpop.f32.mrb[0].mxu0
      %v601 = vadd.f32 0.0, %v600
      %v602 = vpop.f32.mrb[0].mxu0
      %v603 = vpop.f32.mrb[0].mxu0
      %v604 = vadd.f32 0.0, %v603
      %v605 = vpop.f32.mrb[0].mxu0
      %606 = vdwg.mxu0
      %609 = vrot.lane.b32.xlu0 %v601, 8
      %v610 = vpop.permute.xlu0 %609
      %611 = vrot.lane.b32.xlu0 %v604, 8
      %v612 = vpop.permute.xlu0 %611
      %v615 = vadd.f32 %v555, %v610
      %v616 = vadd.f32 %v556, %v612
      %vm617 = vcmask 130112
      %618 = vst.msk [vmem:[#allocation4] sm:$0xff] %vm617, %v615
      %vm619 = vcmask 122944
      %620 = vst.msk [vmem:[#allocation4 + $0x8] sm:$0x1] %vm619, %v616
      %621 = vst.msk [vmem:[%s495] sm:$0xff] %vm363, %v507
      %622 = vst.msk [vmem:[%s495 + $0x8] sm:$0x1] %vm365, %v508
      %623 = vrot.lane.b32.xlu0 %v261, 112
      %v624 = vpop.permute.xlu0 %623
      %625 = vrot.lane.b32.xlu0 %v266, 112
      %v626 = vpop.permute.xlu0 %625
      %v628 = vsel %vm267, %v624, 0
      %v631 = vsel %vm267, %v626, 0
      %633 = vmatprep.subr.bf16.mxu0 0
      %634 = vmatpush1.bf16.xpose.msra.mxu0 %v631
      %635 = vmatprep.subr.bf16.mxu0 0
      %636 = vmatpush1.bf16.xpose.msra.mxu0 0
      %637 = vmatprep.subr.bf16.mxu0 0
      %638 = vmatpush1.bf16.xpose.msra.mxu0 0
      %639 = vmatprep.subr.bf16.mxu0 0
      %640 = vmatpush1.bf16.xpose.msra.mxu0 0
      %641 = vmatprep.subr.bf16.mxu0 0
      %642 = vmatpush1.bf16.xpose.msra.mxu0 0
      %643 = vmatprep.subr.bf16.mxu0 0
      %644 = vmatpush1.bf16.xpose.msra.mxu0 0
      %645 = vmatprep.subr.bf16.mxu0 0
      %646 = vmatpush1.bf16.xpose.msra.mxu0 0
      %647 = vmatprep.subr.bf16.mxu0 0
      %648 = vmatpush1.bf16.xpose.msra.mxu0 0
      %649 = vmatprep.subr.bf16.mxu0 0
      %650 = vmatpush1.bf16.xpose.msra.mxu0 0
      %651 = vmatprep.subr.bf16.mxu0 0
      %652 = vmatpush1.bf16.xpose.msra.mxu0 0
      %653 = vmatprep.subr.bf16.mxu0 0
      %654 = vmatpush1.bf16.xpose.msra.mxu0 0
      %655 = vmatprep.subr.bf16.mxu0 0
      %656 = vmatpush1.bf16.xpose.msra.mxu0 0
      %657 = vmatprep.subr.bf16.mxu0 0
      %658 = vmatpush1.bf16.xpose.msra.mxu0 0
      %659 = vmatprep.subr.bf16.mxu0 0
      %660 = vmatpush1.bf16.xpose.msra.mxu0 0
      %661 = vmatprep.subr.bf16.mxu0 0
      %662 = vmatpush1.bf16.xpose.msra.mxu0 0
      %663 = vmatprep.subr.bf16.mxu0 0
      %664 = vmatpush1.bf16.xpose.msra.mxu0 0
      %665 = vmatprep.mubr.bf16.mxu0 0
      %666 = vmatmul.mubr.bf16.gmra.mrb[0].mxu0 %v628
      %v667 = vpop.f32.mrb[0].mxu0
      %v668 = vadd.f32 0.0, %v667
      %v669 = vpop.f32.mrb[0].mxu0
      %v670 = vpop.f32.mrb[0].mxu0
      %v671 = vadd.f32 0.0, %v670
      %v672 = vpop.f32.mrb[0].mxu0
      %673 = vdwg.mxu0
      %v674 = vmul.f32 %v668, 0.35355338
      %v675 = vmul.f32 %v671, 0.35355338
      %s676 = scalar_lea.vmem [#allocation2], 32
      %v677 = vld [vmem:[%s676] sm:$0xff]
      %v678 = vld [vmem:[%s676 + $0x8] sm:$0x1]
      %s679 = scalar_lea.vmem [#allocation3], 32
      %v680 = vld [vmem:[%s679] sm:$0xff]
      %v681 = vld [vmem:[%s679 + $0x8] sm:$0x1]
      %v682 = vsel %vm321, %v674, -inf
      %683 = vmax.xlane.f32.xlu0 %v682
      %v684 = vpop.xlane.xlu0 %683
      %v685 = vsel %vm325, %v675, -inf
      %686 = vmax.xlane.f32.xlu0 %v685
      %v687 = vpop.xlane.xlu0 %686
      %v688 = vmax.f32 %v677, %v684
      %v689 = vmax.f32 %v678, %v687
      %v690 = vsub.f32 %v677, %v688
      %v691 = vsub.f32 %v678, %v689
      %v692 = vmul.f32 %v690, 1.442695
      %v693 = vpow.pop %v692
      %v694 = vmul.f32 %v691, 1.442695
      %v695 = vpow.pop %v694
      %697 = vset.pattern.permute.xlu0 0
      %698 = vperm.xlu0 %697, %v688
      %v699 = vpop.permute.xlu0 %698
      %702 = vset.pattern.permute.xlu0 0
      %703 = vperm.xlu0 %702, %v689
      %v704 = vpop.permute.xlu0 %703
      %v706 = vsub.f32 %v674, %v699
      %v707 = vsub.f32 %v675, %v704
      %v708 = vmul.f32 %v706, 1.442695
      %v709 = vpow.pop %v708
      %v710 = vmul.f32 %v707, 1.442695
      %v711 = vpow.pop %v710
      %v712 = vmul.f32 %v693, %v680
      %v713 = vmul.f32 %v695, %v681
      %v714 = vsel %vm321, %v709, 0.0
      %715 = vadd.xlane.f32.xlu0 %v714
      %v716 = vpop.xlane.xlu0 %715
      %v717 = vsel %vm325, %v711, 0.0
      %718 = vadd.xlane.f32.xlu0 %v717
      %v719 = vpop.xlane.xlu0 %718
      %v720 = vadd.f32 %v712, %v716
      %v721 = vadd.f32 %v713, %v719
      %722 = vst.msk [vmem:[%s679] sm:$0xff] %vm363, %v720
      %723 = vst.msk [vmem:[%s679 + $0x8] sm:$0x1] %vm365, %v721
      %v724 = vld [vmem:[#allocation4] sm:$0xff]
      %v725 = vld [vmem:[#allocation4 + $0x8] sm:$0x1]
      %727 = vset.pattern.permute.xlu0 0
      %728 = vperm.xlu0 %727, %v693
      %v729 = vpop.permute.xlu0 %728
      %732 = vset.pattern.permute.xlu0 0
      %733 = vperm.xlu0 %732, %v695
      %v734 = vpop.permute.xlu0 %733
      %v736 = vmul.f32 %v729, %v724
      %v737 = vmul.f32 %v734, %v725
      %v738 = vpack.c.bf16 %v711, %v709
      %739 = vrot.lane.b32.xlu0 %v266, 80
      %v740 = vpop.permute.xlu0 %739
      %v742 = vsel %vm321, %v738, 0
      %v745 = vand.u32 %v740, %v390
      %747 = vmatprep.subr.bf16.mxu0 0
      %748 = vmatpush1.bf16.msra.mxu0 %v745
      %749 = vmatprep.subr.bf16.mxu0 0
      %750 = vmatpush1.bf16.msra.mxu0 0
      %751 = vmatprep.subr.bf16.mxu0 0
      %752 = vmatpush1.bf16.msra.mxu0 0
      %753 = vmatprep.subr.bf16.mxu0 0
      %754 = vmatpush1.bf16.msra.mxu0 0
      %755 = vmatprep.subr.bf16.mxu0 0
      %756 = vmatpush1.bf16.msra.mxu0 0
      %757 = vmatprep.subr.bf16.mxu0 0
      %758 = vmatpush1.bf16.msra.mxu0 0
      %759 = vmatprep.subr.bf16.mxu0 0
      %760 = vmatpush1.bf16.msra.mxu0 0
      %761 = vmatprep.subr.bf16.mxu0 0
      %762 = vmatpush1.bf16.msra.mxu0 0
      %763 = vmatprep.subr.bf16.mxu0 0
      %764 = vmatpush1.bf16.msra.mxu0 0
      %765 = vmatprep.subr.bf16.mxu0 0
      %766 = vmatpush1.bf16.msra.mxu0 0
      %767 = vmatprep.subr.bf16.mxu0 0
      %768 = vmatpush1.bf16.msra.mxu0 0
      %769 = vmatprep.subr.bf16.mxu0 0
      %770 = vmatpush1.bf16.msra.mxu0 0
      %771 = vmatprep.subr.bf16.mxu0 0
      %772 = vmatpush1.bf16.msra.mxu0 0
      %773 = vmatprep.subr.bf16.mxu0 0
      %774 = vmatpush1.bf16.msra.mxu0 0
      %775 = vmatprep.subr.bf16.mxu0 0
      %776 = vmatpush1.bf16.msra.mxu0 0
      %777 = vmatprep.subr.bf16.mxu0 0
      %778 = vmatpush1.bf16.msra.mxu0 0
      %779 = vmatprep.mubr.bf16.mxu0 0
      %780 = vmatmul.mubr.bf16.gmra.mrb[0].mxu0 %v742
      %v781 = vpop.f32.mrb[0].mxu0
      %v782 = vadd.f32 0.0, %v781
      %v783 = vpop.f32.mrb[0].mxu0
      %v784 = vpop.f32.mrb[0].mxu0
      %v785 = vadd.f32 0.0, %v784
      %v786 = vpop.f32.mrb[0].mxu0
      %787 = vdwg.mxu0
      %790 = vrot.lane.b32.xlu0 %v782, 16
      %v791 = vpop.permute.xlu0 %790
      %792 = vrot.lane.b32.xlu0 %v785, 16
      %v793 = vpop.permute.xlu0 %792
      %v796 = vadd.f32 %v736, %v791
      %v797 = vadd.f32 %v737, %v793
      %vm798 = vcmask 195712
      %799 = vst.msk [vmem:[#allocation4] sm:$0xff] %vm798, %v796
      %vm800 = vcmask 188544
      %801 = vst.msk [vmem:[#allocation4 + $0x8] sm:$0x1] %vm800, %v797
      %802 = vst.msk [vmem:[%s676] sm:$0xff] %vm363, %v688
      %803 = vst.msk [vmem:[%s676 + $0x8] sm:$0x1] %vm365, %v689
      %804 = vrot.lane.b32.xlu0 %v261, 104
      %v805 = vpop.permute.xlu0 %804
      %806 = vrot.lane.b32.xlu0 %v266, 104
      %v807 = vpop.permute.xlu0 %806
      %v809 = vsel %vm267, %v805, 0
      %v812 = vsel %vm267, %v807, 0
      %814 = vmatprep.subr.bf16.mxu0 0
      %815 = vmatpush1.bf16.xpose.msra.mxu0 %v812
      %816 = vmatprep.subr.bf16.mxu0 0
      %817 = vmatpush1.bf16.xpose.msra.mxu0 0
      %818 = vmatprep.subr.bf16.mxu0 0
      %819 = vmatpush1.bf16.xpose.msra.mxu0 0
      %820 = vmatprep.subr.bf16.mxu0 0
      %821 = vmatpush1.bf16.xpose.msra.mxu0 0
      %822 = vmatprep.subr.bf16.mxu0 0
      %823 = vmatpush1.bf16.xpose.msra.mxu0 0
      %824 = vmatprep.subr.bf16.mxu0 0
      %825 = vmatpush1.bf16.xpose.msra.mxu0 0
      %826 = vmatprep.subr.bf16.mxu0 0
      %827 = vmatpush1.bf16.xpose.msra.mxu0 0
      %828 = vmatprep.subr.bf16.mxu0 0
      %829 = vmatpush1.bf16.xpose.msra.mxu0 0
      %830 = vmatprep.subr.bf16.mxu0 0
      %831 = vmatpush1.bf16.xpose.msra.mxu0 0
      %832 = vmatprep.subr.bf16.mxu0 0
      %833 = vmatpush1.bf16.xpose.msra.mxu0 0
      %834 = vmatprep.subr.bf16.mxu0 0
      %835 = vmatpush1.bf16.xpose.msra.mxu0 0
      %836 = vmatprep.subr.bf16.mxu0 0
      %837 = vmatpush1.bf16.xpose.msra.mxu0 0
      %838 = vmatprep.subr.bf16.mxu0 0
      %839 = vmatpush1.bf16.xpose.msra.mxu0 0
      %840 = vmatprep.subr.bf16.mxu0 0
      %841 = vmatpush1.bf16.xpose.msra.mxu0 0
      %842 = vmatprep.subr.bf16.mxu0 0
      %843 = vmatpush1.bf16.xpose.msra.mxu0 0
      %844 = vmatprep.subr.bf16.mxu0 0
      %845 = vmatpush1.bf16.xpose.msra.mxu0 0
      %846 = vmatprep.mubr.bf16.mxu0 0
      %847 = vmatmul.mubr.bf16.gmra.mrb[0].mxu0 %v809
      %v848 = vpop.f32.mrb[0].mxu0
      %v849 = vadd.f32 0.0, %v848
      %v850 = vpop.f32.mrb[0].mxu0
      %v851 = vpop.f32.mrb[0].mxu0
      %v852 = vadd.f32 0.0, %v851
      %v853 = vpop.f32.mrb[0].mxu0
      %854 = vdwg.mxu0
      %v855 = vmul.f32 %v849, 0.35355338
      %v856 = vmul.f32 %v852, 0.35355338
      %s857 = scalar_lea.vmem [#allocation2], 48
      %v858 = vld [vmem:[%s857] sm:$0xff]
      %v859 = vld [vmem:[%s857 + $0x8] sm:$0x1]
      %s860 = scalar_lea.vmem [#allocation3], 48
      %v861 = vld [vmem:[%s860] sm:$0xff]
      %v862 = vld [vmem:[%s860 + $0x8] sm:$0x1]
      %v863 = vsel %vm321, %v855, -inf
      %864 = vmax.xlane.f32.xlu0 %v863
      %v865 = vpop.xlane.xlu0 %864
      %v866 = vsel %vm325, %v856, -inf
      %867 = vmax.xlane.f32.xlu0 %v866
      %v868 = vpop.xlane.xlu0 %867
      %v869 = vmax.f32 %v858, %v865
      %v870 = vmax.f32 %v859, %v868
      %v871 = vsub.f32 %v858, %v869
      %v872 = vsub.f32 %v859, %v870
      %v873 = vmul.f32 %v871, 1.442695
      %v874 = vpow.pop %v873
      %v875 = vmul.f32 %v872, 1.442695
      %v876 = vpow.pop %v875
      %878 = vset.pattern.permute.xlu0 0
      %879 = vperm.xlu0 %878, %v869
      %v880 = vpop.permute.xlu0 %879
      %883 = vset.pattern.permute.xlu0 0
      %884 = vperm.xlu0 %883, %v870
      %v885 = vpop.permute.xlu0 %884
      %v887 = vsub.f32 %v855, %v880
      %v888 = vsub.f32 %v856, %v885
      %v889 = vmul.f32 %v887, 1.442695
      %v890 = vpow.pop %v889
      %v891 = vmul.f32 %v888, 1.442695
      %v892 = vpow.pop %v891
      %v893 = vmul.f32 %v874, %v861
      %v894 = vmul.f32 %v876, %v862
      %v895 = vsel %vm321, %v890, 0.0
      %896 = vadd.xlane.f32.xlu0 %v895
      %v897 = vpop.xlane.xlu0 %896
      %v898 = vsel %vm325, %v892, 0.0
      %899 = vadd.xlane.f32.xlu0 %v898
      %v900 = vpop.xlane.xlu0 %899
      %v901 = vadd.f32 %v893, %v897
      %v902 = vadd.f32 %v894, %v900
      %903 = vst.msk [vmem:[%s860] sm:$0xff] %vm363, %v901
      %904 = vst.msk [vmem:[%s860 + $0x8] sm:$0x1] %vm365, %v902
      %v905 = vld [vmem:[#allocation4] sm:$0xff]
      %v906 = vld [vmem:[#allocation4 + $0x8] sm:$0x1]
      %908 = vset.pattern.permute.xlu0 0
      %909 = vperm.xlu0 %908, %v874
      %v910 = vpop.permute.xlu0 %909
      %913 = vset.pattern.permute.xlu0 0
      %914 = vperm.xlu0 %913, %v876
      %v915 = vpop.permute.xlu0 %914
      %v917 = vmul.f32 %v910, %v905
      %v918 = vmul.f32 %v915, %v906
      %v919 = vpack.c.bf16 %v892, %v890
      %920 = vrot.lane.b32.xlu0 %v266, 72
      %v921 = vpop.permute.xlu0 %920
      %v923 = vsel %vm321, %v919, 0
      %v926 = vand.u32 %v921, %v390
      %928 = vmatprep.subr.bf16.mxu0 0
      %929 = vmatpush1.bf16.msra.mxu0 %v926
      %930 = vmatprep.subr.bf16.mxu0 0
      %931 = vmatpush1.bf16.msra.mxu0 0
      %932 = vmatprep.subr.bf16.mxu0 0
      %933 = vmatpush1.bf16.msra.mxu0 0
      %934 = vmatprep.subr.bf16.mxu0 0
      %935 = vmatpush1.bf16.msra.mxu0 0
      %936 = vmatprep.subr.bf16.mxu0 0
      %937 = vmatpush1.bf16.msra.mxu0 0
      %938 = vmatprep.subr.bf16.mxu0 0
      %939 = vmatpush1.bf16.msra.mxu0 0
      %940 = vmatprep.subr.bf16.mxu0 0
      %941 = vmatpush1.bf16.msra.mxu0 0
      %942 = vmatprep.subr.bf16.mxu0 0
      %943 = vmatpush1.bf16.msra.mxu0 0
      %944 = vmatprep.subr.bf16.mxu0 0
      %945 = vmatpush1.bf16.msra.mxu0 0
      %946 = vmatprep.subr.bf16.mxu0 0
      %947 = vmatpush1.bf16.msra.mxu0 0
      %948 = vmatprep.subr.bf16.mxu0 0
      %949 = vmatpush1.bf16.msra.mxu0 0
      %950 = vmatprep.subr.bf16.mxu0 0
      %951 = vmatpush1.bf16.msra.mxu0 0
      %952 = vmatprep.subr.bf16.mxu0 0
      %953 = vmatpush1.bf16.msra.mxu0 0
      %954 = vmatprep.subr.bf16.mxu0 0
      %955 = vmatpush1.bf16.msra.mxu0 0
      %956 = vmatprep.subr.bf16.mxu0 0
      %957 = vmatpush1.bf16.msra.mxu0 0
      %958 = vmatprep.subr.bf16.mxu0 0
      %959 = vmatpush1.bf16.msra.mxu0 0
      %960 = vmatprep.mubr.bf16.mxu0 0
      %961 = vmatmul.mubr.bf16.gmra.mrb[0].mxu0 %v923
      %v962 = vpop.f32.mrb[0].mxu0
      %v963 = vadd.f32 0.0, %v962
      %v964 = vpop.f32.mrb[0].mxu0
      %v965 = vpop.f32.mrb[0].mxu0
      %v966 = vadd.f32 0.0, %v965
      %v967 = vpop.f32.mrb[0].mxu0
      %968 = vdwg.mxu0
      %971 = vrot.lane.b32.xlu0 %v963, 24
      %v972 = vpop.permute.xlu0 %971
      %973 = vrot.lane.b32.xlu0 %v966, 24
      %v974 = vpop.permute.xlu0 %973
      %v977 = vadd.f32 %v917, %v972
      %v978 = vadd.f32 %v918, %v974
      %vm979 = vcmask 261312
      %980 = vst.msk [vmem:[#allocation4] sm:$0xff] %vm979, %v977
      %vm981 = vcmask 254144
      %982 = vst.msk [vmem:[#allocation4 + $0x8] sm:$0x1] %vm981, %v978
      %983 = vst.msk [vmem:[%s857] sm:$0xff] %vm363, %v869
      %984 = vst.msk [vmem:[%s857 + $0x8] sm:$0x1] %vm365, %v870
      // Predicated region
      $region33: #{vivit_forward.18} parent=27 // pred_check
        %p985 = pneg %p227
      $region34: #{vivit_forward.18} parent=27 // pred_check_branch
        %987 = sbr.rel (%p985) target = $region36
      $region35: #{vivit_forward.18} parent=27 // pred_region
        %v988 = vld [vmem:[#allocation4] sm:$0xff]
        %v989 = vld [vmem:[#allocation4 + $0x8] sm:$0x1]
        %v990 = vld [vmem:[#allocation3] sm:$0xff]
        %v991 = vld [vmem:[#allocation3 + $0x8] sm:$0x1]
        %993 = vset.pattern.permute.xlu0 0
        %994 = vperm.xlu0 %993, %v990
        %v995 = vpop.permute.xlu0 %994
        %998 = vset.pattern.permute.xlu0 0
        %999 = vperm.xlu0 %998, %v991
        %v1000 = vpop.permute.xlu0 %999
        %v1002 = vrcp.pop %v995
        %v1003 = vmul.f32 %v988, %v1002
        %v1004 = vrcp.pop %v1000
        %v1005 = vmul.f32 %v989, %v1004
        %v1006 = vpack.c.bf16 %v1005, %v1003
        %v1008 = vunpack.c.l.b16 %v1006
        %v1009 = vunpack.c.h.b16 %v1006
        %v1010 = vpack.c.b16 %v1008, %v1008
        %v1011 = vpack.c.b16 %v1009, %v1009
        %vm1014 = vcmask 60416
        %1015 = vst.msk [vmem:[%s224] sm:$0xf] %vm1014, %v1010
        %vm1016 = vcmask 57344
        %vm1017 = vsmask.f32 256
        %vm1018 = vmand %vm1016, %vm1017
        %v1019 = vld [vmem:[%s224 + $0x4] sm:$0x1]
        %v1020 = vsel %vm1018, %v1011, %v1019
        %1021 = vst [vmem:[%s224 + $0x4] sm:$0x1] %v1020
        %v1022 = vld [vmem:[#allocation4] sm:$0xff]
        %v1023 = vld [vmem:[#allocation4 + $0x8] sm:$0x1]
        %v1024 = vld [vmem:[%s498] sm:$0xff]
        %v1025 = vld [vmem:[%s498 + $0x8] sm:$0x1]
        %1027 = vset.pattern.permute.xlu0 0
        %1028 = vperm.xlu0 %1027, %v1024
        %v1029 = vpop.permute.xlu0 %1028
        %1032 = vset.pattern.permute.xlu0 0
        %1033 = vperm.xlu0 %1032, %v1025
        %v1034 = vpop.permute.xlu0 %1033
        %v1036 = vrcp.pop %v1029
        %v1037 = vmul.f32 %v1022, %v1036
        %v1038 = vrcp.pop %v1034
        %v1039 = vmul.f32 %v1023, %v1038
        %v1040 = vpack.c.bf16 %v1039, %v1037
        %v1042 = vunpack.c.l.b16 %v1040
        %v1043 = vunpack.c.h.b16 %v1040
        %v1044 = vpack.c.b16 %v1042, %v1042
        %v1045 = vpack.c.b16 %v1043, %v1043
        %vm1048 = vcmask 126016
        %1049 = vst.msk [vmem:[%s224] sm:$0xf] %vm1048, %v1044
        %vm1050 = vcmask 122944
        %vm1051 = vmand %vm1050, %vm1017
        %v1052 = vld [vmem:[%s224 + $0x4] sm:$0x1]
        %v1053 = vsel %vm1051, %v1045, %v1052
        %1054 = vst [vmem:[%s224 + $0x4] sm:$0x1] %v1053
        %v1055 = vld [vmem:[#allocation4] sm:$0xff]
        %v1056 = vld [vmem:[#allocation4 + $0x8] sm:$0x1]
        %v1057 = vld [vmem:[%s679] sm:$0xff]
        %v1058 = vld [vmem:[%s679 + $0x8] sm:$0x1]
        %1060 = vset.pattern.permute.xlu0 0
        %1061 = vperm.xlu0 %1060, %v1057
        %v1062 = vpop.permute.xlu0 %1061
        %1065 = vset.pattern.permute.xlu0 0
        %1066 = vperm.xlu0 %1065, %v1058
        %v1067 = vpop.permute.xlu0 %1066
        %v1069 = vrcp.pop %v1062
        %v1070 = vmul.f32 %v1055, %v1069
        %v1071 = vrcp.pop %v1067
        %v1072 = vmul.f32 %v1056, %v1071
        %v1073 = vpack.c.bf16 %v1072, %v1070
        %v1075 = vunpack.c.l.b16 %v1073
        %v1076 = vunpack.c.h.b16 %v1073
        %v1077 = vpack.c.b16 %v1075, %v1075
        %v1078 = vpack.c.b16 %v1076, %v1076
        %vm1081 = vcmask 191616
        %1082 = vst.msk [vmem:[%s224] sm:$0xf] %vm1081, %v1077
        %vm1083 = vcmask 188544
        %vm1084 = vmand %vm1083, %vm1017
        %v1085 = vld [vmem:[%s224 + $0x4] sm:$0x1]
        %v1086 = vsel %vm1084, %v1078, %v1085
        %1087 = vst [vmem:[%s224 + $0x4] sm:$0x1] %v1086
        %v1088 = vld [vmem:[#allocation4] sm:$0xff]
        %v1089 = vld [vmem:[#allocation4 + $0x8] sm:$0x1]
        %v1090 = vld [vmem:[%s860] sm:$0xff]
        %v1091 = vld [vmem:[%s860 + $0x8] sm:$0x1]
        %1093 = vset.pattern.permute.xlu0 0
        %1094 = vperm.xlu0 %1093, %v1090
        %v1095 = vpop.permute.xlu0 %1094
        %1098 = vset.pattern.permute.xlu0 0
        %1099 = vperm.xlu0 %1098, %v1091
        %v1100 = vpop.permute.xlu0 %1099
        %v1102 = vrcp.pop %v1095
        %v1103 = vmul.f32 %v1088, %v1102
        %v1104 = vrcp.pop %v1100
        %v1105 = vmul.f32 %v1089, %v1104
        %v1106 = vpack.c.bf16 %v1105, %v1103
        %v1108 = vunpack.c.l.b16 %v1106
        %v1109 = vunpack.c.h.b16 %v1106
        %v1110 = vpack.c.b16 %v1108, %v1108
        %v1111 = vpack.c.b16 %v1109, %v1109
        %vm1114 = vcmask 257216
        %1115 = vst.msk [vmem:[%s224] sm:$0xf] %vm1114, %v1110
        %vm1116 = vcmask 254144
        %vm1117 = vmand %vm1116, %vm1017
        %v1118 = vld [vmem:[%s224 + $0x4] sm:$0x1]
        %v1119 = vsel %vm1117, %v1111, %v1118
        %1120 = vst [vmem:[%s224 + $0x4] sm:$0x1] %v1119
      $region36: #{vivit_forward.18} parent=27 // pred_fallthru
        _
      %s1121 = smul.u32 2, %s19
      %p1122 = scmp.lt.s32.totalorder %s18, 1
      %s1123 = scalar_select %p1122, %s18, 1
      %p1124 = scmp.lt.s32.totalorder %s1121, 1
      %s1125 = scalar_select %p1124, %s1121, 1
      %s1126 = smul.addr %s1123, 2
      %s1127 = sadd.s32 %s1125, %s1126
      %s1128 = smul.addr %s1127, 4
      %s1129 = scalar_lea.vmem %s2, %s1128
      // Predicated region
      $region37: #{vivit_forward.18} parent=27 // pred_check
        %p1130 = pneg %p108
      $region38: #{vivit_forward.18} parent=27 // pred_check_branch
        %1132 = sbr.rel (%p1130) target = $region40
      $region39: #{vivit_forward.18} parent=27 // pred_region
        %s1133 = smul.u32 2, %s19
      $region40: #{vivit_forward.18} parent=27 // pred_fallthru
        _
    $region28: #{vivit_forward.18} parent=5 // pred_fallthru
      _
    %p1134 = scmp.le.s32.totalorder 2, %s8
    // Predicated region
    $region41: #{vivit_forward.18} parent=5 // pred_check
      %p1135 = pneg %p1134
    $region42: #{vivit_forward.18} parent=5 // pred_check_branch
      %1137 = sbr.rel (%p1135) target = $region44
    $region43: #{vivit_forward.18} parent=5 // pred_region
      %s1138 = ssub.s32 %s8, 2
      // Predicated region
      $region45: #{vivit_forward.18} parent=43 // pred_check
        %p1139 = pneg %p114
      $region46: #{vivit_forward.18} parent=43 // pred_check_branch
        %1141 = sbr.rel (%p1139) target = $region48
      $region47: #{vivit_forward.18} parent=43 // pred_region
        %s1142 = smul.u32 2, %s22
        %p1143 = scmp.lt.s32.totalorder %s21, 1
        %s1144 = scalar_select %p1143, %s21, 1
        %p1145 = scmp.lt.s32.totalorder %s1142, 1
        %s1146 = scalar_select %p1145, %s1142, 1
        %s1147 = smul.addr %s1144, 2
        %s1148 = sadd.s32 %s1146, %s1147
        %s1149 = smul.addr %s1148, 4
        %s1150 = scalar_lea.vmem %s2, %s1149
      $region48: #{vivit_forward.18} parent=43 // pred_fallthru
        _
    $region44: #{vivit_forward.18} parent=5 // pred_fallthru
      _
  $region6: #{vivit_forward.18} parent=0 // loop_footer
    %s12 = sadd.s32 1, %s8
  $region7: #{vivit_forward.18} parent=0 // loop_footer_branch
    %7 = sbr.rel target = $region3
  $region8: #{vivit_forward.18} parent=0 // loop_exit
    _

// kernel: vivit_forward.20
$region0: #{vivit_forward.20}
  #allocation0 [shape = 'u32[]', space=smem, size = 0x4, offset = 0x4, fixed_abs, tag = 'smem constant byte address 0x4 - core index']
  #allocation1 [shape = 'u32[144,128]{1,0:T(1,128)}', space=vmem, size = 0x12000, scoped, tag = 'internal scratch']
  #allocation2 [shape = 'bf16[18,32]{1,0:T(8,128)(2,1)}', space=vmem, size = 0x1800, scoped, tag = 'scratch operand']
  %s0 = inlined_call_operand.vmem [shape: bf16[18,32], index: 0, kind: input, shape index: {}]
  %s1 = inlined_call_operand.vmem [shape: f32[1,32], index: 1, kind: input, shape index: {}]
  %s2 = inlined_call_operand.vmem [shape: f32[1,32], index: 2, kind: input, shape index: {}]
  %s3 = inlined_call_operand.vmem [shape: bf16[32,64], index: 3, kind: input, shape index: {}]
  %s4 = inlined_call_operand.vmem [shape: f32[1,64], index: 4, kind: input, shape index: {}]
  %s5 = inlined_call_operand.vmem [shape: bf16[18,64], index: 5, kind: output, shape index: {}]
  %s6 = sld [smem:[#allocation0]]
  $region34: #{vivit_forward.20} parent=0
    _
  %s8 = ssub.s32 1, %s6
  %s9 = scalar_select 0, %s8, %s6
  // Predicated region
  $region2: #{vivit_forward.20} parent=0 // pred_check
    _
  $region3: #{vivit_forward.20} parent=0 // pred_check_branch
    %11 = sbr.rel (0) target = $region5
  $region4: #{vivit_forward.20} parent=0 // pred_region
    _
  $region5: #{vivit_forward.20} parent=0 // pred_fallthru
    _
  // Predicated region
  $region6: #{vivit_forward.20} parent=0 // pred_check
    _
  $region7: #{vivit_forward.20} parent=0 // pred_check_branch
    %13 = sbr.rel (0) target = $region9
  $region8: #{vivit_forward.20} parent=0 // pred_region
    _
  $region9: #{vivit_forward.20} parent=0 // pred_fallthru
    _
  // Predicated region
  $region10: #{vivit_forward.20} parent=0 // pred_check
    _
  $region11: #{vivit_forward.20} parent=0 // pred_check_branch
    %15 = sbr.rel (0) target = $region13
  $region12: #{vivit_forward.20} parent=0 // pred_region
    _
  $region13: #{vivit_forward.20} parent=0 // pred_fallthru
    _
  // Predicated region
  $region14: #{vivit_forward.20} parent=0 // pred_check
    _
  $region15: #{vivit_forward.20} parent=0 // pred_check_branch
    %17 = sbr.rel (0) target = $region17
  $region16: #{vivit_forward.20} parent=0 // pred_region
    _
  $region17: #{vivit_forward.20} parent=0 // pred_fallthru
    _
  // Predicated region
  $region18: #{vivit_forward.20} parent=0 // pred_check
    _
  $region19: #{vivit_forward.20} parent=0 // pred_check_branch
    %19 = sbr.rel (0) target = $region21
  $region20: #{vivit_forward.20} parent=0 // pred_region
    _
  $region21: #{vivit_forward.20} parent=0 // pred_fallthru
    _
  %p21 = scmp.eq.s32.totalorder 0, 0
  // Predicated region
  $region22: #{vivit_forward.20} parent=0 // pred_check
    %p22 = pneg %p21
  $region23: #{vivit_forward.20} parent=0 // pred_check_branch
    %24 = sbr.rel (%p22) target = $region25
  $region24: #{vivit_forward.20} parent=0 // pred_region
    %v25 = vld [vmem:[%s0] sm:$0xf]
    %v26 = vld [vmem:[%s0 + $0x4] sm:$0xf]
    %v27 = vld [vmem:[%s0 + $0x8] sm:$0x1]
    %v28 = vunpack.c.l.bf16 %v25
    %v29 = vunpack.c.l.bf16 %v26
    %v30 = vunpack.c.l.bf16 %v27
    %vm31 = vcmask 261120
    %v32 = vsel %vm31, %v28, 0.0
    %33 = vadd.xlane.f32.xlu0 %v32
    %v34 = vpop.xlane.xlu0 %33
    %v35 = vsel %vm31, %v29, 0.0
    %36 = vadd.xlane.f32.xlu0 %v35
    %v37 = vpop.xlane.xlu0 %36
    %vm38 = vcmask 254976
    %v39 = vsel %vm38, %v30, 0.0
    %40 = vadd.xlane.f32.xlu0 %v39
    %v41 = vpop.xlane.xlu0 %40
    %v42 = vrcp.pop 32.0
    %v43 = vmul.f32 %v34, %v42
    %v44 = vmul.f32 %v37, %v42
    %v45 = vmul.f32 %v41, %v42
    %v46 = vsub.f32 %v28, %v43
    %v47 = vsub.f32 %v29, %v44
    %v48 = vsub.f32 %v30, %v45
    %v49 = vmul.f32 %v46, %v46
    %v50 = vmul.f32 %v47, %v47
    %v51 = vmul.f32 %v48, %v48
    %v52 = vsel %vm31, %v49, 0.0
    %53 = vadd.xlane.f32.xlu0 %v52
    %v54 = vpop.xlane.xlu0 %53
    %v55 = vsel %vm31, %v50, 0.0
    %56 = vadd.xlane.f32.xlu0 %v55
    %v57 = vpop.xlane.xlu0 %56
    %v58 = vsel %vm38, %v51, 0.0
    %59 = vadd.xlane.f32.xlu0 %v58
    %v60 = vpop.xlane.xlu0 %59
    %v61 = vmul.f32 %v54, %v42
    %v62 = vmul.f32 %v57, %v42
    %v63 = vmul.f32 %v60, %v42
    %v64 = vadd.f32 %v61, 1e-05
    %v65 = vadd.f32 %v62, 1e-05
    %v66 = vadd.f32 %v63, 1e-05
    %v67 = vrsqrt.pop %v64
    %v68 = vrsqrt.pop %v65
    %v69 = vrsqrt.pop %v66
    %v70 = vmul.f32 %v46, %v67
    %v71 = vmul.f32 %v47, %v68
    %v72 = vmul.f32 %v48, %v69
    %v73 = vld [vmem:[%s1] sm:$0x1]
    %v75 = vlaneseq
    %v76 = vshrl.u32 %v75, 7
    %v77 = vsub.s32 0, %v76
    %v78 = vrot.slane %v73, %v77
    %v80 = vmul.f32 %v70, %v78
    %v81 = vmul.f32 %v71, %v78
    %v82 = vmul.f32 %v72, %v78
    %v83 = vld [vmem:[%s2] sm:$0x1]
    %v85 = vlaneseq
    %v86 = vshrl.u32 %v85, 7
    %v87 = vsub.s32 0, %v86
    %v88 = vrot.slane %v83, %v87
    %v90 = vadd.f32 %v80, %v88
    %v91 = vadd.f32 %v81, %v88
    %v92 = vadd.f32 %v82, %v88
    %v93 = vpack.c.bf16 %v91, %v90
    %v94 = vpack.c.bf16 %v92, %v92
    %v97 = vunpack.c.l.b16 %v93
    %v98 = vunpack.c.h.b16 %v93
    %v99 = vunpack.c.l.b16 %v94
    %v100 = vpack.c.b16 %v97, %v97
    %v101 = vpack.c.b16 %v98, %v98
    %v102 = vpack.c.b16 %v99, %v99
    %vm106 = vcmask 257024
    %107 = vst.msk [vmem:[#allocation2] sm:$0xf] %vm106, %v100
    %108 = vst.msk [vmem:[#allocation2 + $0x4] sm:$0xf] %vm106, %v101
    %vm109 = vcmask 253952
    %110 = vst.msk [vmem:[#allocation2 + $0x8] sm:$0x1] %vm109, %v102
  $region25: #{vivit_forward.20} parent=0 // pred_fallthru
    _
  %v111 = vld [vmem:[#allocation2] sm:$0xf]
  %v112 = vld [vmem:[#allocation2 + $0x4] sm:$0xf]
  %v113 = vld [vmem:[#allocation2 + $0x8] sm:$0x1]
  %v114 = vld [vmem:[%s3] sm:$0xf]
  %v115 = vld [vmem:[%s3 + $0x4] sm:$0xf]
  %v116 = vld [vmem:[%s3 + $0x8] sm:$0xf]
  %v117 = vld [vmem:[%s3 + $0xc] sm:$0xf]
  %v118 = vld [vmem:[%s4] sm:$0x1]
  %v120 = vlaneseq
  %v121 = vshrl.u32 %v120, 7
  %v122 = vsub.s32 0, %v121
  %v123 = vrot.slane %v118, %v122
  %v128 = vunpack.c.l.b16 %v111
  %v129 = vunpack.c.l.b16 %v112
  %v130 = vunpack.c.l.b16 %v113
  %v131 = vpack.c.b16 %v129, %v128
  %v132 = vpack.c.b16 %v130, %v130
  %v137 = vunpack.c.l.b16 %v114
  %v138 = vunpack.c.l.b16 %v115
  %v139 = vunpack.c.l.b16 %v116
  %v140 = vunpack.c.l.b16 %v117
  %v141 = vpack.c.b16 %v138, %v137
  %v142 = vpack.c.b16 %v140, %v139
  %vm145 = vcmask 261120
  %v147 = vsel %vm145, %v131, 0
  %v150 = vsel %vm145, %v132, 0
  %152 = vmatprep.subr.bf16.mxu0 0
  %153 = vmatpush1.bf16.msra.mxu0 %v141
  %154 = vmatprep.subr.bf16.mxu0 0
  %155 = vmatpush1.bf16.msra.mxu0 %v142
  %156 = vmatprep.subr.bf16.mxu0 0
  %157 = vmatpush1.bf16.msra.mxu0 0
  %158 = vmatprep.subr.bf16.mxu0 0
  %159 = vmatpush1.bf16.msra.mxu0 0
  %160 = vmatprep.subr.bf16.mxu0 0
  %161 = vmatpush1.bf16.msra.mxu0 0
  %162 = vmatprep.subr.bf16.mxu0 0
  %163 = vmatpush1.bf16.msra.mxu0 0
  %164 = vmatprep.subr.bf16.mxu0 0
  %165 = vmatpush1.bf16.msra.mxu0 0
  %166 = vmatprep.subr.bf16.mxu0 0
  %167 = vmatpush1.bf16.msra.mxu0 0
  %168 = vmatprep.subr.bf16.mxu0 0
  %169 = vmatpush1.bf16.msra.mxu0 0
  %170 = vmatprep.subr.bf16.mxu0 0
  %171 = vmatpush1.bf16.msra.mxu0 0
  %172 = vmatprep.subr.bf16.mxu0 0
  %173 = vmatpush1.bf16.msra.mxu0 0
  %174 = vmatprep.subr.bf16.mxu0 0
  %175 = vmatpush1.bf16.msra.mxu0 0
  %176 = vmatprep.subr.bf16.mxu0 0
  %177 = vmatpush1.bf16.msra.mxu0 0
  %178 = vmatprep.subr.bf16.mxu0 0
  %179 = vmatpush1.bf16.msra.mxu0 0
  %180 = vmatprep.subr.bf16.mxu0 0
  %181 = vmatpush1.bf16.msra.mxu0 0
  %182 = vmatprep.subr.bf16.mxu0 0
  %183 = vmatpush1.bf16.msra.mxu0 0
  %184 = vmatprep.mubr.bf16.mxu0 0
  %185 = vmatmul.mubr.bf16.gmra.mrb[0].mxu0 %v147
  %v186 = vpop.f32.mrb[0].mxu0
  %v187 = vadd.f32 %v123, %v186
  %v188 = vpop.f32.mrb[0].mxu0
  %v189 = vpop.f32.mrb[0].mxu0
  %v190 = vadd.f32 %v123, %v189
  %v191 = vpop.f32.mrb[0].mxu0
  %192 = vmatprep.mubr.bf16.mxu0 0
  %193 = vmatmul.mubr.bf16.gmra.mrb[0].mxu0 %v150
  %v194 = vpop.f32.mrb[0].mxu0
  %v195 = vadd.f32 %v123, %v194
  %v196 = vpop.f32.mrb[0].mxu0
  %v197 = vpop.f32.mrb[0].mxu0
  %v198 = vpop.f32.mrb[0].mxu0
  %199 = vdwg.mxu0
  %v200 = vmul.f32 %v187, 0.5
  %v201 = vmul.f32 %v190, 0.5
  %v202 = vmul.f32 %v195, 0.5
  %v203 = vmul.f32 %v187, 0.70710677
  %v204 = vmul.f32 %v190, 0.70710677
  %v205 = vmul.f32 %v195, 0.70710677
  %v206 = verf.f32.pop %v203
  %v207 = verf.f32.pop %v204
  %v208 = verf.f32.pop %v205
  %v209 = vadd.f32 %v206, 1.0
  %v210 = vadd.f32 %v207, 1.0
  %v211 = vadd.f32 %v208, 1.0
  %v212 = vmul.f32 %v200, %v209
  %v213 = vmul.f32 %v201, %v210
  %v214 = vmul.f32 %v202, %v211
  %v215 = vpack.c.bf16 %v213, %v212
  %v216 = vpack.c.bf16 %v214, %v214
  %v219 = vunpack.c.l.b16 %v215
  %v220 = vunpack.c.h.b16 %v215
  %v221 = vunpack.c.l.b16 %v216
  %v222 = vpack.c.b16 %v219, %v219
  %v223 = vpack.c.b16 %v220, %v220
  %v224 = vpack.c.b16 %v221, %v221
  %vm228 = vcmask 519168
  %229 = vst.msk [vmem:[%s5] sm:$0xf] %vm228, %v222
  %230 = vst.msk [vmem:[%s5 + $0x4] sm:$0xf] %vm228, %v223
  %vm231 = vcmask 516096
  %232 = vst.msk [vmem:[%s5 + $0x8] sm:$0x1] %vm231, %v224
  // Predicated region
  $region26: #{vivit_forward.20} parent=0 // pred_check
    _
  $region27: #{vivit_forward.20} parent=0 // pred_check_branch
    %234 = sbr.rel (0) target = $region29
  $region28: #{vivit_forward.20} parent=0 // pred_region
    _
  $region29: #{vivit_forward.20} parent=0 // pred_fallthru
    _
  // Predicated region
  $region30: #{vivit_forward.20} parent=0 // pred_check
    _
  $region31: #{vivit_forward.20} parent=0 // pred_check_branch
    %236 = sbr.rel (0) target = $region33
  $region32: #{vivit_forward.20} parent=0 // pred_region
    _
  $region33: #{vivit_forward.20} parent=0 // pred_fallthru
    _

// kernel: vivit_forward.21
$region0: #{vivit_forward.21}
  #allocation0 [shape = 'u32[]', space=smem, size = 0x4, offset = 0x4, fixed_abs, tag = 'smem constant byte address 0x4 - core index']
  #allocation1 [shape = 'u32[144,128]{1,0:T(1,128)}', space=vmem, size = 0x12000, scoped, tag = 'internal scratch']
  #allocation2 [shape = 'f32[18,32]{1,0:T(8,128)}', space=vmem, size = 0x3000, scoped, tag = 'scratch operand']
  %s0 = inlined_call_operand.vmem [shape: bf16[18,64], index: 0, kind: input, shape index: {}]
  %s1 = inlined_call_operand.vmem [shape: bf16[64,32], index: 1, kind: input, shape index: {}]
  %s2 = inlined_call_operand.vmem [shape: f32[1,32], index: 2, kind: input, shape index: {}]
  %s3 = inlined_call_operand.vmem [shape: bf16[18,32], index: 3, kind: input, shape index: {}]
  %s4 = inlined_call_operand.vmem [shape: bf16[18,32], index: 4, kind: output, shape index: {}]
  %s5 = sld [smem:[#allocation0]]
  $region34: #{vivit_forward.21} parent=0
    _
  %s7 = ssub.s32 1, %s5
  %s8 = scalar_select 0, %s7, %s5
  // Predicated region
  $region2: #{vivit_forward.21} parent=0 // pred_check
    _
  $region3: #{vivit_forward.21} parent=0 // pred_check_branch
    %10 = sbr.rel (0) target = $region5
  $region4: #{vivit_forward.21} parent=0 // pred_region
    _
  $region5: #{vivit_forward.21} parent=0 // pred_fallthru
    _
  // Predicated region
  $region6: #{vivit_forward.21} parent=0 // pred_check
    _
  $region7: #{vivit_forward.21} parent=0 // pred_check_branch
    %12 = sbr.rel (0) target = $region9
  $region8: #{vivit_forward.21} parent=0 // pred_region
    _
  $region9: #{vivit_forward.21} parent=0 // pred_fallthru
    _
  // Predicated region
  $region10: #{vivit_forward.21} parent=0 // pred_check
    _
  $region11: #{vivit_forward.21} parent=0 // pred_check_branch
    %14 = sbr.rel (0) target = $region13
  $region12: #{vivit_forward.21} parent=0 // pred_region
    _
  $region13: #{vivit_forward.21} parent=0 // pred_fallthru
    _
  // Predicated region
  $region14: #{vivit_forward.21} parent=0 // pred_check
    _
  $region15: #{vivit_forward.21} parent=0 // pred_check_branch
    %16 = sbr.rel (0) target = $region17
  $region16: #{vivit_forward.21} parent=0 // pred_region
    _
  $region17: #{vivit_forward.21} parent=0 // pred_fallthru
    _
  %p18 = scmp.eq.s32.totalorder 0, 0
  // Predicated region
  $region18: #{vivit_forward.21} parent=0 // pred_check
    %p19 = pneg %p18
  $region19: #{vivit_forward.21} parent=0 // pred_check_branch
    %21 = sbr.rel (%p19) target = $region21
  $region20: #{vivit_forward.21} parent=0 // pred_region
    %vm22 = vcmask 261120
    %23 = vst.msk [vmem:[#allocation2] sm:$0xff] %vm22, 0.0
    %24 = vst.msk [vmem:[#allocation2 + $0x8] sm:$0xff] %vm22, 0.0
    %vm25 = vcmask 254976
    %26 = vst.msk [vmem:[#allocation2 + $0x10] sm:$0x3] %vm25, 0.0
  $region21: #{vivit_forward.21} parent=0 // pred_fallthru
    _
  %v27 = vld [vmem:[#allocation2] sm:$0xff]
  %v28 = vld [vmem:[#allocation2 + $0x8] sm:$0xff]
  %v29 = vld [vmem:[#allocation2 + $0x10] sm:$0x3]
  %v30 = vld [vmem:[%s0] sm:$0xf]
  %v31 = vld [vmem:[%s0 + $0x4] sm:$0xf]
  %v32 = vld [vmem:[%s0 + $0x8] sm:$0x1]
  %v33 = vld [vmem:[%s1] sm:$0xf]
  %v34 = vld [vmem:[%s1 + $0x4] sm:$0xf]
  %v35 = vld [vmem:[%s1 + $0x8] sm:$0xf]
  %v36 = vld [vmem:[%s1 + $0xc] sm:$0xf]
  %v37 = vld [vmem:[%s1 + $0x10] sm:$0xf]
  %v38 = vld [vmem:[%s1 + $0x14] sm:$0xf]
  %v39 = vld [vmem:[%s1 + $0x18] sm:$0xf]
  %v40 = vld [vmem:[%s1 + $0x1c] sm:$0xf]
  %v44 = vunpack.c.l.b16 %v30
  %v45 = vunpack.c.l.b16 %v31
  %v46 = vunpack.c.l.b16 %v32
  %v47 = vpack.c.b16 %v45, %v44
  %v48 = vpack.c.b16 %v46, %v46
  %v57 = vunpack.c.l.b16 %v33
  %v58 = vunpack.c.l.b16 %v34
  %v59 = vunpack.c.l.b16 %v35
  %v60 = vunpack.c.l.b16 %v36
  %v61 = vunpack.c.l.b16 %v37
  %v62 = vunpack.c.l.b16 %v38
  %v63 = vunpack.c.l.b16 %v39
  %v64 = vunpack.c.l.b16 %v40
  %v65 = vpack.c.b16 %v58, %v57
  %v66 = vpack.c.b16 %v60, %v59
  %v67 = vpack.c.b16 %v62, %v61
  %v68 = vpack.c.b16 %v64, %v63
  %vm73 = vcmask 523264
  %v75 = vsel %vm73, %v47, 0
  %v78 = vsel %vm73, %v48, 0
  %80 = vmatprep.subr.bf16.mxu0 0
  %81 = vmatpush1.bf16.msra.mxu0 %v65
  %82 = vmatprep.subr.bf16.mxu0 0
  %83 = vmatpush1.bf16.msra.mxu0 %v66
  %84 = vmatprep.subr.bf16.mxu0 0
  %85 = vmatpush1.bf16.msra.mxu0 %v67
  %86 = vmatprep.subr.bf16.mxu0 0
  %87 = vmatpush1.bf16.msra.mxu0 %v68
  %88 = vmatprep.subr.bf16.mxu0 0
  %89 = vmatpush1.bf16.msra.mxu0 0
  %90 = vmatprep.subr.bf16.mxu0 0
  %91 = vmatpush1.bf16.msra.mxu0 0
  %92 = vmatprep.subr.bf16.mxu0 0
  %93 = vmatpush1.bf16.msra.mxu0 0
  %94 = vmatprep.subr.bf16.mxu0 0
  %95 = vmatpush1.bf16.msra.mxu0 0
  %96 = vmatprep.subr.bf16.mxu0 0
  %97 = vmatpush1.bf16.msra.mxu0 0
  %98 = vmatprep.subr.bf16.mxu0 0
  %99 = vmatpush1.bf16.msra.mxu0 0
  %100 = vmatprep.subr.bf16.mxu0 0
  %101 = vmatpush1.bf16.msra.mxu0 0
  %102 = vmatprep.subr.bf16.mxu0 0
  %103 = vmatpush1.bf16.msra.mxu0 0
  %104 = vmatprep.subr.bf16.mxu0 0
  %105 = vmatpush1.bf16.msra.mxu0 0
  %106 = vmatprep.subr.bf16.mxu0 0
  %107 = vmatpush1.bf16.msra.mxu0 0
  %108 = vmatprep.subr.bf16.mxu0 0
  %109 = vmatpush1.bf16.msra.mxu0 0
  %110 = vmatprep.subr.bf16.mxu0 0
  %111 = vmatpush1.bf16.msra.mxu0 0
  %112 = vmatprep.mubr.bf16.mxu0 0
  %113 = vmatmul.mubr.bf16.gmra.mrb[0].mxu0 %v75
  %v114 = vpop.f32.mrb[0].mxu0
  %v115 = vadd.f32 0.0, %v114
  %v116 = vpop.f32.mrb[0].mxu0
  %v117 = vpop.f32.mrb[0].mxu0
  %v118 = vadd.f32 0.0, %v117
  %v119 = vpop.f32.mrb[0].mxu0
  %120 = vmatprep.mubr.bf16.mxu0 0
  %121 = vmatmul.mubr.bf16.gmra.mrb[0].mxu0 %v78
  %v122 = vpop.f32.mrb[0].mxu0
  %v123 = vadd.f32 0.0, %v122
  %v124 = vpop.f32.mrb[0].mxu0
  %v125 = vpop.f32.mrb[0].mxu0
  %v126 = vpop.f32.mrb[0].mxu0
  %127 = vdwg.mxu0
  %v128 = vadd.f32 %v27, %v115
  %v129 = vadd.f32 %v28, %v118
  %v130 = vadd.f32 %v29, %v123
  %vm131 = vcmask 261120
  %132 = vst.msk [vmem:[#allocation2] sm:$0xff] %vm131, %v128
  %133 = vst.msk [vmem:[#allocation2 + $0x8] sm:$0xff] %vm131, %v129
  %vm134 = vcmask 254976
  %135 = vst.msk [vmem:[#allocation2 + $0x10] sm:$0x3] %vm134, %v130
  // Predicated region
  $region22: #{vivit_forward.21} parent=0 // pred_check
    %p136 = pneg %p18
  $region23: #{vivit_forward.21} parent=0 // pred_check_branch
    %138 = sbr.rel (%p136) target = $region25
  $region24: #{vivit_forward.21} parent=0 // pred_region
    %v139 = vld [vmem:[#allocation2] sm:$0xff]
    %v140 = vld [vmem:[#allocation2 + $0x8] sm:$0xff]
    %v141 = vld [vmem:[#allocation2 + $0x10] sm:$0x3]
    %v142 = vld [vmem:[%s2] sm:$0x1]
    %v144 = vlaneseq
    %v145 = vshrl.u32 %v144, 7
    %v146 = vsub.s32 0, %v145
    %v147 = vrot.slane %v142, %v146
    %v149 = vadd.f32 %v139, %v147
    %v150 = vadd.f32 %v140, %v147
    %v151 = vadd.f32 %v141, %v147
    %v152 = vld [vmem:[%s3] sm:$0xf]
    %v153 = vld [vmem:[%s3 + $0x4] sm:$0xf]
    %v154 = vld [vmem:[%s3 + $0x8] sm:$0x1]
    %v155 = vunpack.c.l.bf16 %v152
    %v156 = vunpack.c.l.bf16 %v153
    %v157 = vunpack.c.l.bf16 %v154
    %v158 = vadd.f32 %v149, %v155
    %v159 = vadd.f32 %v150, %v156
    %v160 = vadd.f32 %v151, %v157
    %v161 = vpack.c.bf16 %v159, %v158
    %v162 = vpack.c.bf16 %v160, %v160
    %v165 = vunpack.c.l.b16 %v161
    %v166 = vunpack.c.h.b16 %v161
    %v167 = vunpack.c.l.b16 %v162
    %v168 = vpack.c.b16 %v165, %v165
    %v169 = vpack.c.b16 %v166, %v166
    %v170 = vpack.c.b16 %v167, %v167
    %vm174 = vcmask 257024
    %175 = vst.msk [vmem:[%s4] sm:$0xf] %vm174, %v168
    %176 = vst.msk [vmem:[%s4 + $0x4] sm:$0xf] %vm174, %v169
    %vm177 = vcmask 253952
    %178 = vst.msk [vmem:[%s4 + $0x8] sm:$0x1] %vm177, %v170
  $region25: #{vivit_forward.21} parent=0 // pred_fallthru
    _
  // Predicated region
  $region26: #{vivit_forward.21} parent=0 // pred_check
    _
  $region27: #{vivit_forward.21} parent=0 // pred_check_branch
    %180 = sbr.rel (0) target = $region29
  $region28: #{vivit_forward.21} parent=0 // pred_region
    _
  $region29: #{vivit_forward.21} parent=0 // pred_fallthru
    _
  // Predicated region
  $region30: #{vivit_forward.21} parent=0 // pred_check
    _
  $region31: #{vivit_forward.21} parent=0 // pred_check_branch
    %182 = sbr.rel (0) target = $region33
  $region32: #{vivit_forward.21} parent=0 // pred_region
    _
  $region33: #{vivit_forward.21} parent=0 // pred_fallthru
    _

// kernel: vivit_forward.19
$region0: #{vivit_forward.19}
  #allocation0 [shape = 'u32[]', space=smem, size = 0x4, offset = 0x4, fixed_abs, tag = 'smem constant byte address 0x4 - core index']
  #allocation1 [shape = 'u32[144,128]{1,0:T(1,128)}', space=vmem, size = 0x12000, scoped, tag = 'internal scratch']
  #allocation2 [shape = 'f32[18,32]{1,0:T(8,128)}', space=vmem, size = 0x3000, scoped, tag = 'scratch operand']
  %s0 = inlined_call_operand.vmem [shape: bf16[18,32], index: 0, kind: input, shape index: {}]
  %s1 = inlined_call_operand.vmem [shape: bf16[32,32], index: 1, kind: input, shape index: {}]
  %s2 = inlined_call_operand.vmem [shape: f32[1,32], index: 2, kind: input, shape index: {}]
  %s3 = inlined_call_operand.vmem [shape: bf16[18,32], index: 3, kind: input, shape index: {}]
  %s4 = inlined_call_operand.vmem [shape: bf16[18,32], index: 4, kind: output, shape index: {}]
  %s5 = sld [smem:[#allocation0]]
  $region34: #{vivit_forward.19} parent=0
    _
  %s7 = ssub.s32 1, %s5
  %s8 = scalar_select 0, %s7, %s5
  // Predicated region
  $region2: #{vivit_forward.19} parent=0 // pred_check
    _
  $region3: #{vivit_forward.19} parent=0 // pred_check_branch
    %10 = sbr.rel (0) target = $region5
  $region4: #{vivit_forward.19} parent=0 // pred_region
    _
  $region5: #{vivit_forward.19} parent=0 // pred_fallthru
    _
  // Predicated region
  $region6: #{vivit_forward.19} parent=0 // pred_check
    _
  $region7: #{vivit_forward.19} parent=0 // pred_check_branch
    %12 = sbr.rel (0) target = $region9
  $region8: #{vivit_forward.19} parent=0 // pred_region
    _
  $region9: #{vivit_forward.19} parent=0 // pred_fallthru
    _
  // Predicated region
  $region10: #{vivit_forward.19} parent=0 // pred_check
    _
  $region11: #{vivit_forward.19} parent=0 // pred_check_branch
    %14 = sbr.rel (0) target = $region13
  $region12: #{vivit_forward.19} parent=0 // pred_region
    _
  $region13: #{vivit_forward.19} parent=0 // pred_fallthru
    _
  // Predicated region
  $region14: #{vivit_forward.19} parent=0 // pred_check
    _
  $region15: #{vivit_forward.19} parent=0 // pred_check_branch
    %16 = sbr.rel (0) target = $region17
  $region16: #{vivit_forward.19} parent=0 // pred_region
    _
  $region17: #{vivit_forward.19} parent=0 // pred_fallthru
    _
  %p18 = scmp.eq.s32.totalorder 0, 0
  // Predicated region
  $region18: #{vivit_forward.19} parent=0 // pred_check
    %p19 = pneg %p18
  $region19: #{vivit_forward.19} parent=0 // pred_check_branch
    %21 = sbr.rel (%p19) target = $region21
  $region20: #{vivit_forward.19} parent=0 // pred_region
    %vm22 = vcmask 261120
    %23 = vst.msk [vmem:[#allocation2] sm:$0xff] %vm22, 0.0
    %24 = vst.msk [vmem:[#allocation2 + $0x8] sm:$0xff] %vm22, 0.0
    %vm25 = vcmask 254976
    %26 = vst.msk [vmem:[#allocation2 + $0x10] sm:$0x3] %vm25, 0.0
  $region21: #{vivit_forward.19} parent=0 // pred_fallthru
    _
  %v27 = vld [vmem:[#allocation2] sm:$0xff]
  %v28 = vld [vmem:[#allocation2 + $0x8] sm:$0xff]
  %v29 = vld [vmem:[#allocation2 + $0x10] sm:$0x3]
  %v30 = vld [vmem:[%s0] sm:$0xf]
  %v31 = vld [vmem:[%s0 + $0x4] sm:$0xf]
  %v32 = vld [vmem:[%s0 + $0x8] sm:$0x1]
  %v33 = vld [vmem:[%s1] sm:$0xf]
  %v34 = vld [vmem:[%s1 + $0x4] sm:$0xf]
  %v35 = vld [vmem:[%s1 + $0x8] sm:$0xf]
  %v36 = vld [vmem:[%s1 + $0xc] sm:$0xf]
  %v40 = vunpack.c.l.b16 %v30
  %v41 = vunpack.c.l.b16 %v31
  %v42 = vunpack.c.l.b16 %v32
  %v43 = vpack.c.b16 %v41, %v40
  %v44 = vpack.c.b16 %v42, %v42
  %v49 = vunpack.c.l.b16 %v33
  %v50 = vunpack.c.l.b16 %v34
  %v51 = vunpack.c.l.b16 %v35
  %v52 = vunpack.c.l.b16 %v36
  %v53 = vpack.c.b16 %v50, %v49
  %v54 = vpack.c.b16 %v52, %v51
  %vm57 = vcmask 261120
  %v59 = vsel %vm57, %v43, 0
  %v62 = vsel %vm57, %v44, 0
  %64 = vmatprep.subr.bf16.mxu0 0
  %65 = vmatpush1.bf16.msra.mxu0 %v53
  %66 = vmatprep.subr.bf16.mxu0 0
  %67 = vmatpush1.bf16.msra.mxu0 %v54
  %68 = vmatprep.subr.bf16.mxu0 0
  %69 = vmatpush1.bf16.msra.mxu0 0
  %70 = vmatprep.subr.bf16.mxu0 0
  %71 = vmatpush1.bf16.msra.mxu0 0
  %72 = vmatprep.subr.bf16.mxu0 0
  %73 = vmatpush1.bf16.msra.mxu0 0
  %74 = vmatprep.subr.bf16.mxu0 0
  %75 = vmatpush1.bf16.msra.mxu0 0
  %76 = vmatprep.subr.bf16.mxu0 0
  %77 = vmatpush1.bf16.msra.mxu0 0
  %78 = vmatprep.subr.bf16.mxu0 0
  %79 = vmatpush1.bf16.msra.mxu0 0
  %80 = vmatprep.subr.bf16.mxu0 0
  %81 = vmatpush1.bf16.msra.mxu0 0
  %82 = vmatprep.subr.bf16.mxu0 0
  %83 = vmatpush1.bf16.msra.mxu0 0
  %84 = vmatprep.subr.bf16.mxu0 0
  %85 = vmatpush1.bf16.msra.mxu0 0
  %86 = vmatprep.subr.bf16.mxu0 0
  %87 = vmatpush1.bf16.msra.mxu0 0
  %88 = vmatprep.subr.bf16.mxu0 0
  %89 = vmatpush1.bf16.msra.mxu0 0
  %90 = vmatprep.subr.bf16.mxu0 0
  %91 = vmatpush1.bf16.msra.mxu0 0
  %92 = vmatprep.subr.bf16.mxu0 0
  %93 = vmatpush1.bf16.msra.mxu0 0
  %94 = vmatprep.subr.bf16.mxu0 0
  %95 = vmatpush1.bf16.msra.mxu0 0
  %96 = vmatprep.mubr.bf16.mxu0 0
  %97 = vmatmul.mubr.bf16.gmra.mrb[0].mxu0 %v59
  %v98 = vpop.f32.mrb[0].mxu0
  %v99 = vadd.f32 0.0, %v98
  %v100 = vpop.f32.mrb[0].mxu0
  %v101 = vpop.f32.mrb[0].mxu0
  %v102 = vadd.f32 0.0, %v101
  %v103 = vpop.f32.mrb[0].mxu0
  %104 = vmatprep.mubr.bf16.mxu0 0
  %105 = vmatmul.mubr.bf16.gmra.mrb[0].mxu0 %v62
  %v106 = vpop.f32.mrb[0].mxu0
  %v107 = vadd.f32 0.0, %v106
  %v108 = vpop.f32.mrb[0].mxu0
  %v109 = vpop.f32.mrb[0].mxu0
  %v110 = vpop.f32.mrb[0].mxu0
  %111 = vdwg.mxu0
  %v112 = vadd.f32 %v27, %v99
  %v113 = vadd.f32 %v28, %v102
  %v114 = vadd.f32 %v29, %v107
  %115 = vst.msk [vmem:[#allocation2] sm:$0xff] %vm57, %v112
  %116 = vst.msk [vmem:[#allocation2 + $0x8] sm:$0xff] %vm57, %v113
  %vm117 = vcmask 254976
  %118 = vst.msk [vmem:[#allocation2 + $0x10] sm:$0x3] %vm117, %v114
  // Predicated region
  $region22: #{vivit_forward.19} parent=0 // pred_check
    %p119 = pneg %p18
  $region23: #{vivit_forward.19} parent=0 // pred_check_branch
    %121 = sbr.rel (%p119) target = $region25
  $region24: #{vivit_forward.19} parent=0 // pred_region
    %v122 = vld [vmem:[#allocation2] sm:$0xff]
    %v123 = vld [vmem:[#allocation2 + $0x8] sm:$0xff]
    %v124 = vld [vmem:[#allocation2 + $0x10] sm:$0x3]
    %v125 = vld [vmem:[%s2] sm:$0x1]
    %v127 = vlaneseq
    %v128 = vshrl.u32 %v127, 7
    %v129 = vsub.s32 0, %v128
    %v130 = vrot.slane %v125, %v129
    %v132 = vadd.f32 %v122, %v130
    %v133 = vadd.f32 %v123, %v130
    %v134 = vadd.f32 %v124, %v130
    %v135 = vld [vmem:[%s3] sm:$0xf]
    %v136 = vld [vmem:[%s3 + $0x4] sm:$0xf]
    %v137 = vld [vmem:[%s3 + $0x8] sm:$0x1]
    %v138 = vunpack.c.l.bf16 %v135
    %v139 = vunpack.c.l.bf16 %v136
    %v140 = vunpack.c.l.bf16 %v137
    %v141 = vadd.f32 %v132, %v138
    %v142 = vadd.f32 %v133, %v139
    %v143 = vadd.f32 %v134, %v140
    %v144 = vpack.c.bf16 %v142, %v141
    %v145 = vpack.c.bf16 %v143, %v143
    %v148 = vunpack.c.l.b16 %v144
    %v149 = vunpack.c.h.b16 %v144
    %v150 = vunpack.c.l.b16 %v145
    %v151 = vpack.c.b16 %v148, %v148
    %v152 = vpack.c.b16 %v149, %v149
    %v153 = vpack.c.b16 %v150, %v150
    %vm157 = vcmask 257024
    %158 = vst.msk [vmem:[%s4] sm:$0xf] %vm157, %v151
    %159 = vst.msk [vmem:[%s4 + $0x4] sm:$0xf] %vm157, %v152
    %vm160 = vcmask 253952
    %161 = vst.msk [vmem:[%s4 + $0x8] sm:$0x1] %vm160, %v153
  $region25: #{vivit_forward.19} parent=0 // pred_fallthru
    _
  // Predicated region
  $region26: #{vivit_forward.19} parent=0 // pred_check
    _
  $region27: #{vivit_forward.19} parent=0 // pred_check_branch
    %163 = sbr.rel (0) target = $region29
  $region28: #{vivit_forward.19} parent=0 // pred_region
    _
  $region29: #{vivit_forward.19} parent=0 // pred_fallthru
    _
  // Predicated region
  $region30: #{vivit_forward.19} parent=0 // pred_check
    _
  $region31: #{vivit_forward.19} parent=0 // pred_check_branch
    %165 = sbr.rel (0) target = $region33
  $region32: #{vivit_forward.19} parent=0 // pred_region
    _
  $region33: #{vivit_forward.19} parent=0 // pred_fallthru
    _

// kernel: vivit_forward.28
$region0: #{vivit_forward.28}
  #allocation0 [shape = 'u32[]', space=smem, size = 0x4, offset = 0x4, fixed_abs, tag = 'smem constant byte address 0x4 - core index']
  #allocation1 [shape = 'u32[144,128]{1,0:T(1,128)}', space=vmem, size = 0x12000, scoped, tag = 'internal scratch']
  %s0 = inlined_call_operand.vmem [shape: bf16[18,32], index: 0, kind: input, shape index: {}]
  %s1 = inlined_call_operand.vmem [shape: f32[1,32], index: 1, kind: input, shape index: {}]
  %s2 = inlined_call_operand.vmem [shape: f32[1,32], index: 2, kind: input, shape index: {}]
  %s3 = inlined_call_operand.vmem [shape: bf16[18,32], index: 3, kind: output, shape index: {}]
  %s4 = sld [smem:[#allocation0]]
  $region22: #{vivit_forward.28} parent=0
    _
  %s6 = ssub.s32 1, %s4
  %s7 = scalar_select 0, %s6, %s4
  // Predicated region
  $region2: #{vivit_forward.28} parent=0 // pred_check
    _
  $region3: #{vivit_forward.28} parent=0 // pred_check_branch
    %9 = sbr.rel (0) target = $region5
  $region4: #{vivit_forward.28} parent=0 // pred_region
    _
  $region5: #{vivit_forward.28} parent=0 // pred_fallthru
    _
  // Predicated region
  $region6: #{vivit_forward.28} parent=0 // pred_check
    _
  $region7: #{vivit_forward.28} parent=0 // pred_check_branch
    %11 = sbr.rel (0) target = $region9
  $region8: #{vivit_forward.28} parent=0 // pred_region
    _
  $region9: #{vivit_forward.28} parent=0 // pred_fallthru
    _
  // Predicated region
  $region10: #{vivit_forward.28} parent=0 // pred_check
    _
  $region11: #{vivit_forward.28} parent=0 // pred_check_branch
    %13 = sbr.rel (0) target = $region13
  $region12: #{vivit_forward.28} parent=0 // pred_region
    _
  $region13: #{vivit_forward.28} parent=0 // pred_fallthru
    _
  %v14 = vld [vmem:[%s0] sm:$0xf]
  %v15 = vld [vmem:[%s0 + $0x4] sm:$0xf]
  %v16 = vld [vmem:[%s0 + $0x8] sm:$0x1]
  %v17 = vunpack.c.l.bf16 %v14
  %v18 = vunpack.c.l.bf16 %v15
  %v19 = vunpack.c.l.bf16 %v16
  %vm20 = vcmask 261120
  %v21 = vsel %vm20, %v17, 0.0
  %22 = vadd.xlane.f32.xlu0 %v21
  %v23 = vpop.xlane.xlu0 %22
  %v24 = vsel %vm20, %v18, 0.0
  %25 = vadd.xlane.f32.xlu0 %v24
  %v26 = vpop.xlane.xlu0 %25
  %vm27 = vcmask 254976
  %v28 = vsel %vm27, %v19, 0.0
  %29 = vadd.xlane.f32.xlu0 %v28
  %v30 = vpop.xlane.xlu0 %29
  %v31 = vrcp.pop 32.0
  %v32 = vmul.f32 %v23, %v31
  %v33 = vmul.f32 %v26, %v31
  %v34 = vmul.f32 %v30, %v31
  %v35 = vsub.f32 %v17, %v32
  %v36 = vsub.f32 %v18, %v33
  %v37 = vsub.f32 %v19, %v34
  %v38 = vmul.f32 %v35, %v35
  %v39 = vmul.f32 %v36, %v36
  %v40 = vmul.f32 %v37, %v37
  %v41 = vsel %vm20, %v38, 0.0
  %42 = vadd.xlane.f32.xlu0 %v41
  %v43 = vpop.xlane.xlu0 %42
  %v44 = vsel %vm20, %v39, 0.0
  %45 = vadd.xlane.f32.xlu0 %v44
  %v46 = vpop.xlane.xlu0 %45
  %v47 = vsel %vm27, %v40, 0.0
  %48 = vadd.xlane.f32.xlu0 %v47
  %v49 = vpop.xlane.xlu0 %48
  %v50 = vmul.f32 %v43, %v31
  %v51 = vmul.f32 %v46, %v31
  %v52 = vmul.f32 %v49, %v31
  %v53 = vadd.f32 %v50, 1e-05
  %v54 = vadd.f32 %v51, 1e-05
  %v55 = vadd.f32 %v52, 1e-05
  %v56 = vrsqrt.pop %v53
  %v57 = vrsqrt.pop %v54
  %v58 = vrsqrt.pop %v55
  %v59 = vmul.f32 %v35, %v56
  %v60 = vmul.f32 %v36, %v57
  %v61 = vmul.f32 %v37, %v58
  %v62 = vld [vmem:[%s1] sm:$0x1]
  %v64 = vlaneseq
  %v65 = vshrl.u32 %v64, 7
  %v66 = vsub.s32 0, %v65
  %v67 = vrot.slane %v62, %v66
  %v69 = vmul.f32 %v59, %v67
  %v70 = vmul.f32 %v60, %v67
  %v71 = vmul.f32 %v61, %v67
  %v72 = vld [vmem:[%s2] sm:$0x1]
  %v74 = vlaneseq
  %v75 = vshrl.u32 %v74, 7
  %v76 = vsub.s32 0, %v75
  %v77 = vrot.slane %v72, %v76
  %v79 = vadd.f32 %v69, %v77
  %v80 = vadd.f32 %v70, %v77
  %v81 = vadd.f32 %v71, %v77
  %v82 = vpack.c.bf16 %v80, %v79
  %v83 = vpack.c.bf16 %v81, %v81
  %v86 = vunpack.c.l.b16 %v82
  %v87 = vunpack.c.h.b16 %v82
  %v88 = vunpack.c.l.b16 %v83
  %v89 = vpack.c.b16 %v86, %v86
  %v90 = vpack.c.b16 %v87, %v87
  %v91 = vpack.c.b16 %v88, %v88
  %vm95 = vcmask 257024
  %96 = vst.msk [vmem:[%s3] sm:$0xf] %vm95, %v89
  %97 = vst.msk [vmem:[%s3 + $0x4] sm:$0xf] %vm95, %v90
  %vm98 = vcmask 253952
  %99 = vst.msk [vmem:[%s3 + $0x8] sm:$0x1] %vm98, %v91
  // Predicated region
  $region14: #{vivit_forward.28} parent=0 // pred_check
    _
  $region15: #{vivit_forward.28} parent=0 // pred_check_branch
    %101 = sbr.rel (0) target = $region17
  $region16: #{vivit_forward.28} parent=0 // pred_region
    _
  $region17: #{vivit_forward.28} parent=0 // pred_fallthru
    _
  // Predicated region
  $region18: #{vivit_forward.28} parent=0 // pred_check
    _
  $region19: #{vivit_forward.28} parent=0 // pred_check_branch
    %103 = sbr.rel (0) target = $region21
  $region20: #{vivit_forward.28} parent=0 // pred_region
    _
  $region21: #{vivit_forward.28} parent=0 // pred_fallthru
    _

// kernel: vivit_forward.29
$region0: #{vivit_forward.29}
  #allocation0 [shape = 'u32[]', space=smem, size = 0x4, offset = 0x4, fixed_abs, tag = 'smem constant byte address 0x4 - core index']
  #allocation1 [shape = 'u32[144,128]{1,0:T(1,128)}', space=vmem, size = 0x12000, scoped, tag = 'internal scratch']
  #allocation2 [shape = 'bf16[2,32]{1,0:T(2,128)(2,1)}', space=vmem, size = 0x200, scoped, tag = 'scratch operand']
  %s0 = inlined_call_operand.vmem [shape: bf16[2,32], index: 0, kind: input, shape index: {}]
  %s1 = inlined_call_operand.vmem [shape: f32[1,32], index: 1, kind: input, shape index: {}]
  %s2 = inlined_call_operand.vmem [shape: f32[1,32], index: 2, kind: input, shape index: {}]
  %s3 = inlined_call_operand.vmem [shape: bf16[32,128], index: 3, kind: input, shape index: {}]
  %s4 = inlined_call_operand.vmem [shape: f32[1,128], index: 4, kind: input, shape index: {}]
  %s5 = inlined_call_operand.hbm [shape: f32[2,128], index: 5, kind: output, shape index: {}]
  %s6 = sld [smem:[#allocation0]]
  $region34: #{vivit_forward.29} parent=0
    _
  %s8 = ssub.s32 1, %s6
  %s9 = scalar_select 0, %s8, %s6
  $region1: #{vivit_forward.29} parent=0
    #allocation3 [shape = 'u8[1024]{0}', space=vmem, size = 0x400, scoped, tag = 'output window, operand 0, single buffered']
    #allocation4 [shape = 's32[1]{0}', space=sflag, size = 0x4, scoped, tag = 'scoped memory for vivit_forward.29']
    %10 = vsyncpa [#allocation4], 0
    // Predicated region
    $region2: #{vivit_forward.29} parent=1 // pred_check
      _
    $region3: #{vivit_forward.29} parent=1 // pred_check_branch
      %12 = sbr.rel (0) target = $region5
    $region4: #{vivit_forward.29} parent=1 // pred_region
      _
    $region5: #{vivit_forward.29} parent=1 // pred_fallthru
      _
    // Predicated region
    $region6: #{vivit_forward.29} parent=1 // pred_check
      _
    $region7: #{vivit_forward.29} parent=1 // pred_check_branch
      %14 = sbr.rel (0) target = $region9
    $region8: #{vivit_forward.29} parent=1 // pred_region
      _
    $region9: #{vivit_forward.29} parent=1 // pred_fallthru
      _
    // Predicated region
    $region10: #{vivit_forward.29} parent=1 // pred_check
      _
    $region11: #{vivit_forward.29} parent=1 // pred_check_branch
      %16 = sbr.rel (0) target = $region13
    $region12: #{vivit_forward.29} parent=1 // pred_region
      _
    $region13: #{vivit_forward.29} parent=1 // pred_fallthru
      _
    // Predicated region
    $region14: #{vivit_forward.29} parent=1 // pred_check
      _
    $region15: #{vivit_forward.29} parent=1 // pred_check_branch
      %18 = sbr.rel (0) target = $region17
    $region16: #{vivit_forward.29} parent=1 // pred_region
      _
    $region17: #{vivit_forward.29} parent=1 // pred_fallthru
      _
    // Predicated region
    $region18: #{vivit_forward.29} parent=1 // pred_check
      _
    $region19: #{vivit_forward.29} parent=1 // pred_check_branch
      %20 = sbr.rel (0) target = $region21
    $region20: #{vivit_forward.29} parent=1 // pred_region
      _
    $region21: #{vivit_forward.29} parent=1 // pred_fallthru
      _
    %p22 = scmp.eq.s32.totalorder 0, 0
    // Predicated region
    $region22: #{vivit_forward.29} parent=1 // pred_check
      %p23 = pneg %p22
    $region23: #{vivit_forward.29} parent=1 // pred_check_branch
      %25 = sbr.rel (%p23) target = $region25
    $region24: #{vivit_forward.29} parent=1 // pred_region
      %v26 = vld [vmem:[%s0] sm:$0x1]
      %v27 = vunpack.c.l.bf16 %v26
      %vm28 = vcmask 254976
      %v29 = vsel %vm28, %v27, 0.0
      %30 = vadd.xlane.f32.xlu0 %v29
      %v31 = vpop.xlane.xlu0 %30
      %v32 = vrcp.pop 32.0
      %v33 = vmul.f32 %v31, %v32
      %v34 = vsub.f32 %v27, %v33
      %v35 = vmul.f32 %v34, %v34
      %v36 = vsel %vm28, %v35, 0.0
      %37 = vadd.xlane.f32.xlu0 %v36
      %v38 = vpop.xlane.xlu0 %37
      %v39 = vmul.f32 %v38, %v32
      %v40 = vadd.f32 %v39, 1e-05
      %v41 = vrsqrt.pop %v40
      %v42 = vmul.f32 %v34, %v41
      %v43 = vld [vmem:[%s1] sm:$0x1]
      %v45 = vlaneseq
      %v46 = vshrl.u32 %v45, 7
      %v47 = vsub.s32 0, %v46
      %v48 = vrot.slane %v43, %v47
      %v50 = vmul.f32 %v42, %v48
      %v51 = vld [vmem:[%s2] sm:$0x1]
      %v53 = vlaneseq
      %v54 = vshrl.u32 %v53, 7
      %v55 = vsub.s32 0, %v54
      %v56 = vrot.slane %v51, %v55
      %v58 = vadd.f32 %v50, %v56
      %v59 = vpack.c.bf16 %v58, %v58
      %vm60 = vcmask 253952
      %61 = vst.msk [vmem:[#allocation2] sm:$0x1] %vm60, %v59
    $region25: #{vivit_forward.29} parent=1 // pred_fallthru
      _
    %v62 = vld [vmem:[#allocation2] sm:$0x1]
    %v63 = vld [vmem:[%s3] sm:$0xf]
    %v64 = vld [vmem:[%s3 + $0x4] sm:$0xf]
    %v65 = vld [vmem:[%s3 + $0x8] sm:$0xf]
    %v66 = vld [vmem:[%s3 + $0xc] sm:$0xf]
    %v67 = vld [vmem:[%s4] sm:$0x1]
    %v69 = vlaneseq
    %v70 = vshrl.u32 %v69, 7
    %v71 = vsub.s32 0, %v70
    %v72 = vrot.slane %v67, %v71
    %v78 = vunpack.c.l.b16 %v63
    %v79 = vunpack.c.l.b16 %v64
    %v80 = vunpack.c.l.b16 %v65
    %v81 = vunpack.c.l.b16 %v66
    %v82 = vpack.c.b16 %v79, %v78
    %v83 = vpack.c.b16 %v81, %v80
    %vm86 = vcmask 261120
    %v88 = vsel %vm86, %v62, 0
    %90 = vmatprep.subr.bf16.mxu0 0
    %91 = vmatpush1.bf16.msra.mxu0 %v82
    %92 = vmatprep.subr.bf16.mxu0 0
    %93 = vmatpush1.bf16.msra.mxu0 %v83
    %94 = vmatprep.subr.bf16.mxu0 0
    %95 = vmatpush1.bf16.msra.mxu0 0
    %96 = vmatprep.subr.bf16.mxu0 0
    %97 = vmatpush1.bf16.msra.mxu0 0
    %98 = vmatprep.subr.bf16.mxu0 0
    %99 = vmatpush1.bf16.msra.mxu0 0
    %100 = vmatprep.subr.bf16.mxu0 0
    %101 = vmatpush1.bf16.msra.mxu0 0
    %102 = vmatprep.subr.bf16.mxu0 0
    %103 = vmatpush1.bf16.msra.mxu0 0
    %104 = vmatprep.subr.bf16.mxu0 0
    %105 = vmatpush1.bf16.msra.mxu0 0
    %106 = vmatprep.subr.bf16.mxu0 0
    %107 = vmatpush1.bf16.msra.mxu0 0
    %108 = vmatprep.subr.bf16.mxu0 0
    %109 = vmatpush1.bf16.msra.mxu0 0
    %110 = vmatprep.subr.bf16.mxu0 0
    %111 = vmatpush1.bf16.msra.mxu0 0
    %112 = vmatprep.subr.bf16.mxu0 0
    %113 = vmatpush1.bf16.msra.mxu0 0
    %114 = vmatprep.subr.bf16.mxu0 0
    %115 = vmatpush1.bf16.msra.mxu0 0
    %116 = vmatprep.subr.bf16.mxu0 0
    %117 = vmatpush1.bf16.msra.mxu0 0
    %118 = vmatprep.subr.bf16.mxu0 0
    %119 = vmatpush1.bf16.msra.mxu0 0
    %120 = vmatprep.subr.bf16.mxu0 0
    %121 = vmatpush1.bf16.msra.mxu0 0
    %122 = vmatprep.mubr.bf16.mxu0 0
    %123 = vmatmul.mubr.bf16.gmra.mrb[0].mxu0 %v88
    %v124 = vpop.f32.mrb[0].mxu0
    %v125 = vadd.f32 %v72, %v124
    %v126 = vpop.f32.mrb[0].mxu0
    %v127 = vpop.f32.mrb[0].mxu0
    %v128 = vpop.f32.mrb[0].mxu0
    %129 = vdwg.mxu0
    %130 = vst [vmem:[#allocation3] sm:$0x3] %v125
    // Predicated region
    $region26: #{vivit_forward.29} parent=1 // pred_check
      _
    $region27: #{vivit_forward.29} parent=1 // pred_check_branch
      %132 = sbr.rel (0) target = $region29
    $region28: #{vivit_forward.29} parent=1 // pred_region
      %s134 = ssub.s32 32, 32
      %135 = vsyncadd [#allocation4], %s134
      %s137 = sshll.u32 [#allocation3], 4
      %s138 = int_to_ptr.vmem [resolvable:$true] %s137
      %140 = dma.vmem_to_hbm [thread:$0]  %s138, 32, %s5, [#allocation4]
    $region29: #{vivit_forward.29} parent=1 // pred_fallthru
      _
    // Predicated region
    $region30: #{vivit_forward.29} parent=1 // pred_check
      _
    $region31: #{vivit_forward.29} parent=1 // pred_check_branch
      %142 = sbr.rel (0) target = $region33
    $region32: #{vivit_forward.29} parent=1 // pred_region
      %143 = dma.done [#allocation4], 32
    $region33: #{vivit_forward.29} parent=1 // pred_fallthru
      _
    %144 = vsyncpa [#allocation4], 1

</llo_original>
